<compile_context>
chip_gen: v6e
topology: v6e:2x2x1
jax: 0.10.0
libtpu: 0.0.40
codegen_flags: <defaults>
</compile_context>

<pallas_src>
from functools import partial

import jax
import jax.numpy as jnp
from jax.experimental import pallas as pl
from jax.experimental.pallas import tpu as pltpu


# ----------------------------------------------------------------------------
# Kernel 1: GRU cell + attention + context + concat-Linear (runs once, no grid)
# ----------------------------------------------------------------------------
def decoder_core_kernel(
    x_ref,         # (B, E)     f32   embedded token (dropout = identity)
    h_ref,         # (B, H)     f32   previous hidden state
    enc_ref,       # (B, L, H)  bf16  encoder outputs
    w_ih_ref,      # (E, 3H)    bf16  GRU input weights (gate order r, z, n)
    w_hh_ref,      # (H, 3H)    bf16  GRU hidden weights
    b_ih_ref,      # (1, 3H)    f32
    b_hh_ref,      # (1, 3H)    f32
    w_attn_q_ref,  # (H, H)     bf16  A^T so that q = h_new @ A^T
    w_cat_h_ref,   # (H, H)     bf16  concat-Linear weight, rnn_output half
    w_cat_c_ref,   # (H, H)     bf16  concat-Linear weight, context half
    b_cat_ref,     # (1, H)     f32
    hid_ref,       # (B, H)     f32   OUT: new hidden state
    attn_ref,      # (B, L)     f32   OUT: attention weights (softmax over L)
    cat_ref,       # (B, H)     bf16  OUT: tanh(concat Linear) -> feeds out-proj
):
    x_bf = x_ref[...].astype(jnp.bfloat16)
    h = h_ref[...]
    h_bf = h.astype(jnp.bfloat16)
    H = h.shape[-1]

    # ---------------- GRU cell (bf16 MXU matmuls, f32 gate math) --------------
    gi = jnp.dot(x_bf, w_ih_ref[...], preferred_element_type=jnp.float32) + b_ih_ref[...]
    gh = jnp.dot(h_bf, w_hh_ref[...], preferred_element_type=jnp.float32) + b_hh_ref[...]
    r = jax.nn.sigmoid(gi[:, :H] + gh[:, :H])
    z = jax.nn.sigmoid(gi[:, H:2 * H] + gh[:, H:2 * H])
    n = jnp.tanh(gi[:, 2 * H:] + r * gh[:, 2 * H:])
    h_new = (1.0 - z) * n + z * h                                     # (B, H) f32
    hid_ref[...] = h_new

    enc_f = enc_ref[...].astype(jnp.float32)                          # (B, L, H)

    # ---------------- Attention ('general'), re-associated --------------------
    # scores[b, l] = enc[b, l, :] . (h_new[b, :] @ A^T)
    # (the attention bias adds a per-row constant -> softmax-invariant, dropped)
    q = jnp.dot(h_new.astype(jnp.bfloat16), w_attn_q_ref[...],
                preferred_element_type=jnp.float32)                   # (B, H)
    # VPU multiply + XLU lane-reduce (no M=1 batched MXU dot / relayouts).
    scores = jnp.sum(q[:, None, :] * enc_f, axis=-1)                  # (B, L)
    scores = scores - jnp.max(scores, axis=-1, keepdims=True)
    e = jnp.exp(scores)
    attn = e / jnp.sum(e, axis=-1, keepdims=True)                     # exact softmax
    attn_ref[...] = attn

    # context[b, h] = sum_l attn[b, l] * enc[b, l, h]  (VPU mult + sublane reduce)
    context = jnp.sum(attn[:, :, None] * enc_f, axis=1)               # (B, H)

    # ---------------- concat Linear + tanh (plain 2-D MXU dots) ---------------
    # concat([h_new, context]) @ W_cat == h_new @ W_cat[:H] + context @ W_cat[H:]
    pre = (
        jnp.dot(h_new.astype(jnp.bfloat16), w_cat_h_ref[...],
                preferred_element_type=jnp.float32)
        + jnp.dot(context.astype(jnp.bfloat16), w_cat_c_ref[...],
                  preferred_element_type=jnp.float32)
        + b_cat_ref[...]
    )                                                                 # (B, H) f32
    cat_ref[...] = jnp.tanh(pre).astype(jnp.bfloat16)


# ----------------------------------------------------------------------------
# Kernel 2: output projection, tiled (pipelined / megacore-parallel) over V
# ----------------------------------------------------------------------------
def out_proj_kernel(cat_ref, w_out_ref, b_out_ref, out_ref):
    # cat: (B, H) bf16 ; w_out tile: (H, TV) bf16 ; b_out tile: (1, TV) f32 ; out tile: (B, TV) f32
    out_ref[...] = (
        jnp.dot(cat_ref[...], w_out_ref[...], preferred_element_type=jnp.float32)
        + b_out_ref[...]
    )


# ----------------------------------------------------------------------------
# One-time parameter preparation (hoisted out of the per-token step)
# ----------------------------------------------------------------------------
def _round_up(x, m):
    return (x + m - 1) // m * m


def _pick_tile_v(vocab_size):
    """Vocab-tile width: as large as practical (to hit the HBM roofline) but
    guaranteeing >= 2 tiles so the 'parallel' vocab axis can shard across both
    v7x TensorCores (no-op on single-TC v5e/v6e)."""
    v128 = _round_up(vocab_size, 128)
    if v128 <= 256:
        return 128
    half = (v128 // 2) // 128 * 128
    return max(128, min(4096, half))


def prepare_params(raw, hidden_size):
    """One-time (per checkpoint load) weight dtype/layout preprocessing.

    Everything here previously ran inside the jitted per-token step; hoisting it
    removes several full-HBM weight copies (notably an f32 read + bf16 write of
    w_out, ~3x the bytes of the projection itself) from every decode step.
    """
    H = hidden_size
    V = raw["w_out"].shape[1]
    tile_v = _pick_tile_v(V)
    V_pad = _round_up(V, tile_v)
    bf16 = jnp.bfloat16

    w_out = raw["w_out"].astype(bf16)
    b_out = raw["b_out"].astype(jnp.float32)
    if V_pad != V:
        w_out = jnp.pad(w_out, ((0, 0), (0, V_pad - V)))
        b_out = jnp.pad(b_out, ((0, 0), (0, V_pad - V)))

    prepped = {
        "embedding": raw["embedding"].astype(jnp.float32),
        "w_ih": raw["w_ih"].astype(bf16),
        "w_hh": raw["w_hh"].astype(bf16),
        "b_ih": raw["b_ih"].astype(jnp.float32),
        "b_hh": raw["b_hh"].astype(jnp.float32),
        "w_attn_q": raw["w_attn"].T.astype(bf16),    # q = h_new @ A^T
        "w_cat_h": raw["w_cat"][:H, :].astype(bf16),
        "w_cat_c": raw["w_cat"][H:, :].astype(bf16),
        "b_cat": raw["b_cat"].astype(jnp.float32),
        "w_out": w_out,                               # (H, V_pad) bf16, padded once
        "b_out": b_out,                               # (1, V_pad) f32,  padded once
    }
    prepped = jax.tree_util.tree_map(jnp.asarray, prepped)
    return prepped, tile_v, V


# ----------------------------------------------------------------------------
# Jitted per-token decoder step (two pallas_calls, no weight plumbing inside)
# ----------------------------------------------------------------------------
@partial(jax.jit, static_argnames=("tile_v", "vocab_size"))
def decoder_forward(prepped, token_ids, last_hidden, encoder_outputs_bf16,
                    *, tile_v, vocab_size):
    """token_ids: (1, B) int32; last_hidden: (1, B, H) f32;
    encoder_outputs_bf16: (B, L, H) bf16 (cast ONCE per encoder pass, not per token)."""
    emb = jnp.take(prepped["embedding"], token_ids, axis=0)          # (1, B, E)
    x = jnp.transpose(emb, (1, 0, 2))[:, 0, :]                       # (B, E)
    h0 = last_hidden[0]                                              # (B, H)

    B, L, H = encoder_outputs_bf16.shape
    V_pad = prepped["w_out"].shape[1]

    vmem = pl.BlockSpec(memory_space=pltpu.MemorySpace.VMEM)
    core_args = (
        x, h0, encoder_outputs_bf16,
        prepped["w_ih"], prepped["w_hh"], prepped["b_ih"], prepped["b_hh"],
        prepped["w_attn_q"], prepped["w_cat_h"], prepped["w_cat_c"], prepped["b_cat"],
    )
    h_new, attn2d, cat2d = pl.pallas_call(
        decoder_core_kernel,
        out_shape=(
            jax.ShapeDtypeStruct((B, H), jnp.float32),
            jax.ShapeDtypeStruct((B, L), jnp.float32),
            jax.ShapeDtypeStruct((B, H), jnp.bfloat16),
        ),
        in_specs=[vmem] * len(core_args),
        out_specs=(vmem, vmem, vmem),
        compiler_params=pltpu.CompilerParams(vmem_limit_bytes=32 * 1024 * 1024),
    )(*core_args)

    # ---- output projection, tiled & pipelined over the (padded) vocab axis ---
    out_pad = pl.pallas_call(
        out_proj_kernel,
        out_shape=jax.ShapeDtypeStruct((B, V_pad), jnp.float32),
        grid=(V_pad // tile_v,),
        in_specs=[
            pl.BlockSpec((B, H), lambda j: (0, 0)),        # resident across V tiles
            pl.BlockSpec((H, tile_v), lambda j: (0, j)),   # double-buffered weight tile
            pl.BlockSpec((1, tile_v), lambda j: (0, j)),
        ],
        out_specs=pl.BlockSpec((B, tile_v), lambda j: (0, j)),
        compiler_params=pltpu.CompilerParams(
            dimension_semantics=("parallel",)),            # megacore sharding on v7x
    )(cat2d, prepped["w_out"], prepped["b_out"])
    out = out_pad if V_pad == vocab_size else out_pad[:, :vocab_size]

    # PyTorch returns: output (B, V), hidden (1, B, H), attn_weights (B, 1, L)
    return out, h_new[None, :, :], attn2d[:, None, :]


# ----------------------------------------------------------------------------
# Pure-JAX f32 reference (faithful to the PyTorch module) for a sanity check
# ----------------------------------------------------------------------------
def decoder_reference(params, token_ids, last_hidden, encoder_outputs):
    emb = jnp.take(params["embedding"], token_ids, axis=0)
    x = jnp.transpose(emb, (1, 0, 2))[:, 0, :]
    h = last_hidden[0]
    H = h.shape[-1]
    gi = x @ params["w_ih"] + params["b_ih"]
    gh = h @ params["w_hh"] + params["b_hh"]
    r = jax.nn.sigmoid(gi[:, :H] + gh[:, :H])
    z = jax.nn.sigmoid(gi[:, H:2 * H] + gh[:, H:2 * H])
    n = jnp.tanh(gi[:, 2 * H:] + r * gh[:, 2 * H:])
    h_new = (1.0 - z) * n + z * h
    energy = jnp.einsum("blh,hk->blk", encoder_outputs, params["w_attn"]) + params["b_attn"]
    scores = jnp.sum(h_new[:, None, :] * energy, axis=-1)
    attn = jax.nn.softmax(scores, axis=1)
    context = jnp.einsum("bl,blh->bh", attn, encoder_outputs)
    concat_in = jnp.concatenate([h_new, context], axis=1)
    concat_out = jnp.tanh(concat_in @ params["w_cat"] + params["b_cat"])
    out = concat_out @ params["w_out"] + params["b_out"]
    return out, h_new[None], attn[:, None, :]


# ----------------------------------------------------------------------------
# Deterministic parameter construction + demo
# ----------------------------------------------------------------------------
def _bf16_quantize(a):
    # demo params/inputs are made bf16-representable so the f32 reference isolates
    # only accumulation-order / intermediate-rounding differences of the kernel.
    return a.astype(jnp.bfloat16).astype(jnp.float32)


def make_params(key, embedding_dim, hidden_size, output_size):
    ks = jax.random.split(key, 12)
    E, H, V = embedding_dim, hidden_size, output_size
    q = _bf16_quantize
    u = lambda k, shape, s: q(jax.random.uniform(k, shape, jnp.float32, -s, s))
    return {
        "embedding": q(jax.random.normal(ks[0], (V, E), jnp.float32)),
        # GRU (gate order r, z, n), stored transposed: (in, 3H)
        "w_ih": u(ks[1], (E, 3 * H), 1.0 / (H ** 0.5)),
        "w_hh": u(ks[2], (H, 3 * H), 1.0 / (H ** 0.5)),
        "b_ih": u(ks[3], (1, 3 * H), 1.0 / (H ** 0.5)),
        "b_hh": u(ks[4], (1, 3 * H), 1.0 / (H ** 0.5)),
        # Attention 'general' Linear(H, H), stored transposed (in, out)
        "w_attn": u(ks[5], (H, H), 1.0 / (H ** 0.5)),
        "b_attn": u(ks[6], (1, H), 1.0 / (H ** 0.5)),
        # concat Linear(2H, H), transposed
        "w_cat": u(ks[7], (2 * H, H), 1.0 / ((2 * H) ** 0.5)),
        "b_cat": u(ks[8], (1, H), 1.0 / ((2 * H) ** 0.5)),
        # out Linear(H, V), transposed
        "w_out": u(ks[9], (H, V), 1.0 / (H ** 0.5)),
        "b_out": u(ks[10], (1, V), 1.0 / (H ** 0.5)),
    }


if __name__ == "__main__":
    # Lane/sublane-aligned small shapes: B mult of 8, L/H mult of 128, V mult of 128.
    B, L = 8, 128               # batch, encoder sequence length
    E, H, V = 64, 128, 1024     # embedding_dim, hidden_size, output_size (vocab)

    key = jax.random.PRNGKey(0)
    kp, k1, k2, k3 = jax.random.split(key, 4)
    params = make_params(kp, E, H, V)

    token_ids = jax.random.randint(k1, (1, B), 0, V, dtype=jnp.int32)               # (1, B)
    last_hidden = _bf16_quantize(jax.random.normal(k2, (1, B, H), jnp.float32))      # (1, B, H)
    encoder_outputs = _bf16_quantize(jax.random.normal(k3, (B, L, H), jnp.float32))  # (B, L, H)

    # One-time preprocessing (per checkpoint / per encoder pass) — NOT per token.
    prepped, tile_v, vocab = prepare_params(params, H)
    enc_bf16 = encoder_outputs.astype(jnp.bfloat16)

    out, hidden, attn_w = decoder_forward(
        prepped, token_ids, last_hidden, enc_bf16, tile_v=tile_v, vocab_size=vocab)
    jax.block_until_ready((out, hidden, attn_w))

    ref_out, ref_hidden, ref_attn = decoder_reference(
        params, token_ids, last_hidden, encoder_outputs)

    assert out.shape == (B, V) and hidden.shape == (1, B, H) and attn_w.shape == (B, 1, L)
    assert jnp.allclose(out, ref_out, rtol=2e-2, atol=2e-2), \
        float(jnp.max(jnp.abs(out - ref_out)))
    assert jnp.allclose(hidden, ref_hidden, rtol=2e-2, atol=2e-2), \
        float(jnp.max(jnp.abs(hidden - ref_hidden)))
    assert jnp.allclose(attn_w, ref_attn, rtol=2e-2, atol=2e-2), \
        float(jnp.max(jnp.abs(attn_w - ref_attn)))

    print("KERNEL_OK")
</pallas_src>

<mosaic_0001>
module attributes {stable_mosaic.version = 11 : i64} {
  func.func @out_proj_kernel(%arg0: i32, %arg1: memref<8x128xbf16, #tpu.memory_space<vmem>>, %arg2: memref<128x512xbf16, #tpu.memory_space<vmem>>, %arg3: memref<1x512xf32, #tpu.memory_space<vmem>>, %arg4: memref<8x512xf32, #tpu.memory_space<vmem>>) attributes {dimension_semantics = [#tpu.dimension_semantics<parallel>], iteration_bounds = array<i64: 2>, scalar_prefetch = 0 : i64, scratch_operands = 0 : i64, tpu.core_type = #tpu.core_type<tc>, window_params = [{pipeline_mode = #tpu.pipeline_mode<synchronous>, transform_indices = @transform_0, window_bounds = array<i64: 8, 128>}, {transform_indices = @transform_1, window_bounds = array<i64: 128, 512>}, {transform_indices = @transform_2, window_bounds = array<i64: 1, 512>}, {transform_indices = @transform_3, window_bounds = array<i64: 8, 512>}]} {
    %c0 = arith.constant 0 : index
    %c0_0 = arith.constant 0 : index
    %0 = vector.load %arg1[%c0, %c0_0] : memref<8x128xbf16, #tpu.memory_space<vmem>>, vector<8x128xbf16>
    %c0_1 = arith.constant 0 : index
    %c0_2 = arith.constant 0 : index
    %1 = vector.load %arg2[%c0_1, %c0_2] : memref<128x512xbf16, #tpu.memory_space<vmem>>, vector<128x512xbf16>
    %cst = arith.constant dense<0.000000e+00> : vector<8x512xf32>
    %2 = tpu.matmul %0, %1, %cst {dimension_numbers = #tpu.dot_dimension_numbers<[1], [0], [0], [1], [0, 0, 1, 1], [], []>} : vector<8x128xbf16>, vector<128x512xbf16>, vector<8x512xf32> -> vector<8x512xf32>
    %c0_3 = arith.constant 0 : index
    %c0_4 = arith.constant 0 : index
    %3 = vector.load %arg3[%c0_3, %c0_4] : memref<1x512xf32, #tpu.memory_space<vmem>>, vector<1x512xf32>
    %4 = vector.broadcast %3 : vector<1x512xf32> to vector<8x512xf32>
    %5 = arith.addf %2, %4 : vector<8x512xf32>
    %c0_5 = arith.constant 0 : index
    %c0_6 = arith.constant 0 : index
    %6 = vector.load %arg4[%c0_5, %c0_6] : memref<8x512xf32, #tpu.memory_space<vmem>>, vector<8x512xf32>
    tpu.vector_store %arg4[%c0_5, %c0_6], %5 {strides = array<i32>} : memref<8x512xf32, #tpu.memory_space<vmem>>, vector<8x512xf32>,
    return
  }
  func.func @transform_0(%arg0: i32) -> (i32, i32) {
    %c0_i32 = arith.constant 0 : i32
    %c0_i32_0 = arith.constant 0 : i32
    %c0_i32_1 = arith.constant 0 : i32
    return %c0_i32, %c0_i32_0 : i32, i32
  }
  func.func @transform_1(%arg0: i32) -> (i32, i32) {
    %c0_i32 = arith.constant 0 : i32
    %c0_i32_0 = arith.constant 0 : i32
    return %c0_i32, %arg0 : i32, i32
  }
  func.func @transform_2(%arg0: i32) -> (i32, i32) {
    %c0_i32 = arith.constant 0 : i32
    %c0_i32_0 = arith.constant 0 : i32
    return %c0_i32, %arg0 : i32, i32
  }
  func.func @transform_3(%arg0: i32) -> (i32, i32) {
    %c0_i32 = arith.constant 0 : i32
    %c0_i32_0 = arith.constant 0 : i32
    return %c0_i32, %arg0 : i32, i32
  }
}

module attributes {stable_mosaic.version = 11 : i64} {
  func.func @decoder_core_kernel(%arg0: memref<8x64xf32, #tpu.memory_space<vmem>>, %arg1: memref<8x128xf32, #tpu.memory_space<vmem>>, %arg2: memref<8x128x128xbf16, #tpu.memory_space<vmem>>, %arg3: memref<64x384xbf16, #tpu.memory_space<vmem>>, %arg4: memref<128x384xbf16, #tpu.memory_space<vmem>>, %arg5: memref<1x384xf32, #tpu.memory_space<vmem>>, %arg6: memref<1x384xf32, #tpu.memory_space<vmem>>, %arg7: memref<128x128xbf16, #tpu.memory_space<vmem>>, %arg8: memref<128x128xbf16, #tpu.memory_space<vmem>>, %arg9: memref<128x128xbf16, #tpu.memory_space<vmem>>, %arg10: memref<1x128xf32, #tpu.memory_space<vmem>>, %arg11: memref<8x128xf32, #tpu.memory_space<vmem>>, %arg12: memref<8x128xf32, #tpu.memory_space<vmem>>, %arg13: memref<8x128xbf16, #tpu.memory_space<vmem>>) attributes {dimension_semantics = [], scalar_prefetch = 0 : i64, scratch_operands = 0 : i64, tpu.core_type = #tpu.core_type<tc>} {
    %c0 = arith.constant 0 : index
    %c0_0 = arith.constant 0 : index
    %0 = vector.load %arg0[%c0, %c0_0] : memref<8x64xf32, #tpu.memory_space<vmem>>, vector<8x64xf32>
    %1 = arith.truncf %0 : vector<8x64xf32> to vector<8x64xbf16>
    %c0_1 = arith.constant 0 : index
    %c0_2 = arith.constant 0 : index
    %2 = vector.load %arg1[%c0_1, %c0_2] : memref<8x128xf32, #tpu.memory_space<vmem>>, vector<8x128xf32>
    %3 = arith.truncf %2 : vector<8x128xf32> to vector<8x128xbf16>
    %c0_3 = arith.constant 0 : index
    %c0_4 = arith.constant 0 : index
    %4 = vector.load %arg3[%c0_3, %c0_4] : memref<64x384xbf16, #tpu.memory_space<vmem>>, vector<64x384xbf16>
    %cst = arith.constant dense<0.000000e+00> : vector<8x384xf32>
    %5 = tpu.matmul %1, %4, %cst {dimension_numbers = #tpu.dot_dimension_numbers<[1], [0], [0], [1], [0, 0, 1, 1], [], []>} : vector<8x64xbf16>, vector<64x384xbf16>, vector<8x384xf32> -> vector<8x384xf32>
    %c0_5 = arith.constant 0 : index
    %c0_6 = arith.constant 0 : index
    %6 = vector.load %arg5[%c0_5, %c0_6] : memref<1x384xf32, #tpu.memory_space<vmem>>, vector<1x384xf32>
    %7 = vector.broadcast %6 : vector<1x384xf32> to vector<8x384xf32>
    %8 = arith.addf %5, %7 : vector<8x384xf32>
    %c0_7 = arith.constant 0 : index
    %c0_8 = arith.constant 0 : index
    %9 = vector.load %arg4[%c0_7, %c0_8] : memref<128x384xbf16, #tpu.memory_space<vmem>>, vector<128x384xbf16>
    %cst_9 = arith.constant dense<0.000000e+00> : vector<8x384xf32>
    %10 = tpu.matmul %3, %9, %cst_9 {dimension_numbers = #tpu.dot_dimension_numbers<[1], [0], [0], [1], [0, 0, 1, 1], [], []>} : vector<8x128xbf16>, vector<128x384xbf16>, vector<8x384xf32> -> vector<8x384xf32>
    %c0_10 = arith.constant 0 : index
    %c0_11 = arith.constant 0 : index
    %11 = vector.load %arg6[%c0_10, %c0_11] : memref<1x384xf32, #tpu.memory_space<vmem>>, vector<1x384xf32>
    %12 = vector.broadcast %11 : vector<1x384xf32> to vector<8x384xf32>
    %13 = arith.addf %10, %12 : vector<8x384xf32>
    %14 = vector.extract_strided_slice %8 {offsets = [0, 0], sizes = [8, 128], strides = [1, 1]} : vector<8x384xf32> to vector<8x128xf32>
    %15 = vector.extract_strided_slice %13 {offsets = [0, 0], sizes = [8, 128], strides = [1, 1]} : vector<8x384xf32> to vector<8x128xf32>
    %16 = arith.addf %14, %15 : vector<8x128xf32>
    %17 = arith.negf %16 : vector<8x128xf32>
    %18 = math.exp %17 : vector<8x128xf32>
    %cst_12 = arith.constant 1.000000e+00 : f32
    %19 = vector.broadcast %cst_12 : f32 to vector<8x128xf32>
    %20 = arith.addf %19, %18 : vector<8x128xf32>
    %21 = arith.divf %19, %20 : vector<8x128xf32>
    %22 = vector.extract_strided_slice %8 {offsets = [0, 128], sizes = [8, 128], strides = [1, 1]} : vector<8x384xf32> to vector<8x128xf32>
    %23 = vector.extract_strided_slice %13 {offsets = [0, 128], sizes = [8, 128], strides = [1, 1]} : vector<8x384xf32> to vector<8x128xf32>
    %24 = arith.addf %22, %23 : vector<8x128xf32>
    %25 = arith.negf %24 : vector<8x128xf32>
    %26 = math.exp %25 : vector<8x128xf32>
    %cst_13 = arith.constant 1.000000e+00 : f32
    %27 = vector.broadcast %cst_13 : f32 to vector<8x128xf32>
    %28 = arith.addf %27, %26 : vector<8x128xf32>
    %29 = arith.divf %27, %28 : vector<8x128xf32>
    %30 = vector.extract_strided_slice %8 {offsets = [0, 256], sizes = [8, 128], strides = [1, 1]} : vector<8x384xf32> to vector<8x128xf32>
    %31 = vector.extract_strided_slice %13 {offsets = [0, 256], sizes = [8, 128], strides = [1, 1]} : vector<8x384xf32> to vector<8x128xf32>
    %32 = arith.mulf %21, %31 : vector<8x128xf32>
    %33 = arith.addf %30, %32 : vector<8x128xf32>
    %34 = math.tanh %33 : vector<8x128xf32>
    %cst_14 = arith.constant 1.000000e+00 : f32
    %35 = vector.broadcast %cst_14 : f32 to vector<8x128xf32>
    %36 = arith.subf %35, %29 : vector<8x128xf32>
    %37 = arith.mulf %36, %34 : vector<8x128xf32>
    %38 = arith.mulf %29, %2 : vector<8x128xf32>
    %39 = arith.addf %37, %38 : vector<8x128xf32>
    %c0_15 = arith.constant 0 : index
    %c0_16 = arith.constant 0 : index
    %40 = vector.load %arg11[%c0_15, %c0_16] : memref<8x128xf32, #tpu.memory_space<vmem>>, vector<8x128xf32>
    tpu.vector_store %arg11[%c0_15, %c0_16], %39 {strides = array<i32>} : memref<8x128xf32, #tpu.memory_space<vmem>>, vector<8x128xf32>,
    %c0_17 = arith.constant 0 : index
    %c0_18 = arith.constant 0 : index
    %c0_19 = arith.constant 0 : index
    %41 = vector.load %arg2[%c0_17, %c0_18, %c0_19] : memref<8x128x128xbf16, #tpu.memory_space<vmem>>, vector<8x128x128xbf16>
    %42 = arith.extf %41 : vector<8x128x128xbf16> to vector<8x128x128xf32>
    %43 = arith.truncf %39 : vector<8x128xf32> to vector<8x128xbf16>
    %c0_20 = arith.constant 0 : index
    %c0_21 = arith.constant 0 : index
    %44 = vector.load %arg7[%c0_20, %c0_21] : memref<128x128xbf16, #tpu.memory_space<vmem>>, vector<128x128xbf16>
    %cst_22 = arith.constant dense<0.000000e+00> : vector<8x128xf32>
    %45 = tpu.matmul %43, %44, %cst_22 {dimension_numbers = #tpu.dot_dimension_numbers<[1], [0], [0], [1], [0, 0, 1, 1], [], []>} : vector<8x128xbf16>, vector<128x128xbf16>, vector<8x128xf32> -> vector<8x128xf32>
    %46 = vector.shape_cast %45 : vector<8x128xf32> to vector<8x1x128xf32>
    %47 = vector.broadcast %46 : vector<8x1x128xf32> to vector<8x128x128xf32>
    %48 = arith.mulf %47, %42 : vector<8x128x128xf32>
    %cst_23 = arith.constant dense<0.000000e+00> : vector<8x128xf32>
    %49 = vector.multi_reduction <add>, %48, %cst_23 [2] : vector<8x128x128xf32> to vector<8x128xf32>
    %cst_24 = arith.constant dense<0xFF800000> : vector<8xf32>
    %50 = vector.multi_reduction <maximumf>, %49, %cst_24 [1] : vector<8x128xf32> to vector<8xf32>
    %51 = vector.shape_cast %50 : vector<8xf32> to vector<8x1xf32>
    %52 = vector.broadcast %51 : vector<8x1xf32> to vector<8x128xf32>
    %53 = arith.subf %49, %52 : vector<8x128xf32>
    %54 = math.exp %53 : vector<8x128xf32>
    %cst_25 = arith.constant dense<0.000000e+00> : vector<8xf32>
    %55 = vector.multi_reduction <add>, %54, %cst_25 [1] : vector<8x128xf32> to vector<8xf32>
    %56 = vector.shape_cast %55 : vector<8xf32> to vector<8x1xf32>
    %57 = vector.broadcast %56 : vector<8x1xf32> to vector<8x128xf32>
    %58 = arith.divf %54, %57 : vector<8x128xf32>
    %c0_26 = arith.constant 0 : index
    %c0_27 = arith.constant 0 : index
    %59 = vector.load %arg12[%c0_26, %c0_27] : memref<8x128xf32, #tpu.memory_space<vmem>>, vector<8x128xf32>
    tpu.vector_store %arg12[%c0_26, %c0_27], %58 {strides = array<i32>} : memref<8x128xf32, #tpu.memory_space<vmem>>, vector<8x128xf32>,
    %60 = vector.shape_cast %58 : vector<8x128xf32> to vector<8x128x1xf32>
    %61 = vector.broadcast %60 : vector<8x128x1xf32> to vector<8x128x128xf32>
    %62 = arith.mulf %61, %42 : vector<8x128x128xf32>
    %cst_28 = arith.constant dense<0.000000e+00> : vector<8x128xf32>
    %63 = vector.multi_reduction <add>, %62, %cst_28 [1] : vector<8x128x128xf32> to vector<8x128xf32>
    %64 = arith.truncf %39 : vector<8x128xf32> to vector<8x128xbf16>
    %c0_29 = arith.constant 0 : index
    %c0_30 = arith.constant 0 : index
    %65 = vector.load %arg8[%c0_29, %c0_30] : memref<128x128xbf16, #tpu.memory_space<vmem>>, vector<128x128xbf16>
    %cst_31 = arith.constant dense<0.000000e+00> : vector<8x128xf32>
    %66 = tpu.matmul %64, %65, %cst_31 {dimension_numbers = #tpu.dot_dimension_numbers<[1], [0], [0], [1], [0, 0, 1, 1], [], []>} : vector<8x128xbf16>, vector<128x128xbf16>, vector<8x128xf32> -> vector<8x128xf32>
    %67 = arith.truncf %63 : vector<8x128xf32> to vector<8x128xbf16>
    %c0_32 = arith.constant 0 : index
    %c0_33 = arith.constant 0 : index
    %68 = vector.load %arg9[%c0_32, %c0_33] : memref<128x128xbf16, #tpu.memory_space<vmem>>, vector<128x128xbf16>
    %cst_34 = arith.constant dense<0.000000e+00> : vector<8x128xf32>
    %69 = tpu.matmul %67, %68, %cst_34 {dimension_numbers = #tpu.dot_dimension_numbers<[1], [0], [0], [1], [0, 0, 1, 1], [], []>} : vector<8x128xbf16>, vector<128x128xbf16>, vector<8x128xf32> -> vector<8x128xf32>
    %70 = arith.addf %66, %69 : vector<8x128xf32>
    %c0_35 = arith.constant 0 : index
    %c0_36 = arith.constant 0 : index
    %71 = vector.load %arg10[%c0_35, %c0_36] : memref<1x128xf32, #tpu.memory_space<vmem>>, vector<1x128xf32>
    %72 = vector.broadcast %71 : vector<1x128xf32> to vector<8x128xf32>
    %73 = arith.addf %70, %72 : vector<8x128xf32>
    %74 = math.tanh %73 : vector<8x128xf32>
    %75 = arith.truncf %74 : vector<8x128xf32> to vector<8x128xbf16>
    %c0_37 = arith.constant 0 : index
    %c0_38 = arith.constant 0 : index
    %76 = vector.load %arg13[%c0_37, %c0_38] : memref<8x128xbf16, #tpu.memory_space<vmem>>, vector<8x128xbf16>
    tpu.vector_store %arg13[%c0_37, %c0_38], %75 {strides = array<i32>} : memref<8x128xbf16, #tpu.memory_space<vmem>>, vector<8x128xbf16>,
    return
  }
}

</mosaic_0001>

<llo_original>
// kernel: decoder_forward.3
$region0: #{decoder_forward.3}
  #allocation0 [shape = 'u32[]', space=smem, size = 0x4, offset = 0x4, fixed_abs, tag = 'smem constant byte address 0x4 - core index']
  #allocation1 [shape = 'u32[144,128]{1,0:T(1,128)}', space=vmem, size = 0x12000, scoped, tag = 'internal scratch']
  %s0 = inlined_call_operand.vmem [shape: bf16[8,128], index: 0, kind: input, shape index: {}]
  %s1 = inlined_call_operand.vmem [shape: bf16[128,1024], index: 1, kind: input, shape index: {}]
  %s2 = inlined_call_operand.vmem [shape: f32[1,1024], index: 2, kind: input, shape index: {}]
  %s3 = inlined_call_operand.hbm [shape: f32[8,1024], index: 3, kind: output, shape index: {}]
  %s4 = sld [smem:[#allocation0]]
  $region68: #{decoder_forward.3} parent=0
    _
  %s6 = ssub.s32 1, %s4
  %s7 = scalar_select 0, %s6, %s4
  $region1: #{decoder_forward.3} parent=0
    #allocation2 [shape = 'u8[262144]{0}', space=vmem, size = 0x40000, scoped, tag = 'input window, operand 1']
    #allocation3 [shape = 'u8[32768]{0}', space=vmem, size = 0x8000, scoped, tag = 'output window, operand 0']
    #allocation4 [shape = 's32[2]{0}', space=sflag, size = 0x8, scoped, tag = 'scoped memory for decoder_forward.3']
    %8 = vsyncpa [#allocation4], 0
    %s9 = scalar_lea.sflag [#allocation4], 1
    %10 = vsyncpa %s9, 0
    loop: start=0, step=1, limit=4
    $region2: #{decoder_forward.3} parent=1 // loop_pre_header
      _
    $region3: #{decoder_forward.3} parent=1 // loop_header
      %s12 = sphi 0, %s16
      %p13 = scmp.ge.s32.totalorder %s12, 4
      %s20 = sphi 0, %s20
      %s22 = sphi 0, %s20
      %s23 = sphi 0, %s22
      %s37 = sphi 0, %s23
      %s43 = sphi 0, %s45
      %s46 = sphi 0, %s43
      %s47 = sphi 0, %s46
      %s63 = sphi 0, %s47
      %s69 = sphi 0, %s71
      %s72 = sphi 0, %s69
      %s73 = sphi 0, %s72
      %s89 = sphi 0, %s73
      %s95 = sphi 0, %s97
      %s98 = sphi 0, %s95
      %s99 = sphi 0, %s98
      %s115 = sphi 0, %s99
    $region4: #{decoder_forward.3} parent=1 // loop_header_branch
      %15 = sbr.rel (%p13) target = $region8
    $region5: #{decoder_forward.3} parent=1 // loop_body
      %s17 = ssub.s32 %s12, 1
      %s18 = ssub.s32 %s12, 2
      %s19 = sadd.s32 %s12, 1
      %s21 = sadd.s32 %s20, 1
      %p24 = scmp.eq.s32.totalorder %s12, 1
      %p25 = scmp.ne.s32.totalorder %s20, %s22
      %p26 = scmp.eq.s32.totalorder %s12, 0
      %p27 = por %p25, %p26
      %p28 = scmp.ne.s32.totalorder %s20, %s22
      %p29 = scmp.eq.s32.totalorder %s17, 1
      %p30 = por %p28, %p29
      %p31 = scmp.ne.s32.totalorder %s22, %s23
      %p32 = scmp.eq.s32.totalorder %s17, 0
      %p33 = por %p31, %p32
      %p34 = scmp.ne.s32.totalorder %s22, %s23
      %p35 = scmp.eq.s32.totalorder %s18, 1
      %p36 = por %p34, %p35
      %p38 = scmp.ne.s32.totalorder %s23, %s37
      %p39 = scmp.eq.s32.totalorder %s18, 0
      %p40 = por %p38, %p39
      %s41 = ssub.s32 %s12, %s19
      %p42 = scmp.eq.s32.totalorder %s41, 0
      %s44 = sadd.s32 %s43, 1
      %s45 = scalar_select %p42, %s43, %s44
      %p48 = pneg %p42
      %p49 = scmp.eq.s32.totalorder %s12, 1
      %p50 = por %p48, %p49
      %p51 = scmp.ne.s32.totalorder %s43, %s46
      %p52 = scmp.eq.s32.totalorder %s12, 0
      %p53 = por %p51, %p52
      %p54 = scmp.ne.s32.totalorder %s43, %s46
      %p55 = scmp.eq.s32.totalorder %s17, 1
      %p56 = por %p54, %p55
      %p57 = scmp.ne.s32.totalorder %s46, %s47
      %p58 = scmp.eq.s32.totalorder %s17, 0
      %p59 = por %p57, %p58
      %p60 = scmp.ne.s32.totalorder %s46, %s47
      %p61 = scmp.eq.s32.totalorder %s18, 1
      %p62 = por %p60, %p61
      %p64 = scmp.ne.s32.totalorder %s47, %s63
      %p65 = scmp.eq.s32.totalorder %s18, 0
      %p66 = por %p64, %p65
      %s67 = ssub.s32 %s12, %s19
      %p68 = scmp.eq.s32.totalorder %s67, 0
      %s70 = sadd.s32 %s69, 1
      %s71 = scalar_select %p68, %s69, %s70
      %p74 = pneg %p68
      %p75 = scmp.eq.s32.totalorder %s12, 1
      %p76 = por %p74, %p75
      %p77 = scmp.ne.s32.totalorder %s69, %s72
      %p78 = scmp.eq.s32.totalorder %s12, 0
      %p79 = por %p77, %p78
      %p80 = scmp.ne.s32.totalorder %s69, %s72
      %p81 = scmp.eq.s32.totalorder %s17, 1
      %p82 = por %p80, %p81
      %p83 = scmp.ne.s32.totalorder %s72, %s73
      %p84 = scmp.eq.s32.totalorder %s17, 0
      %p85 = por %p83, %p84
      %p86 = scmp.ne.s32.totalorder %s72, %s73
      %p87 = scmp.eq.s32.totalorder %s18, 1
      %p88 = por %p86, %p87
      %p90 = scmp.ne.s32.totalorder %s73, %s89
      %p91 = scmp.eq.s32.totalorder %s18, 0
      %p92 = por %p90, %p91
      %s93 = ssub.s32 %s12, %s19
      %p94 = scmp.eq.s32.totalorder %s93, 0
      %s96 = sadd.s32 %s95, 1
      %s97 = scalar_select %p94, %s95, %s96
      %p100 = pneg %p94
      %p101 = scmp.eq.s32.totalorder %s12, 1
      %p102 = por %p100, %p101
      %p103 = scmp.ne.s32.totalorder %s95, %s98
      %p104 = scmp.eq.s32.totalorder %s12, 0
      %p105 = por %p103, %p104
      %p106 = scmp.ne.s32.totalorder %s95, %s98
      %p107 = scmp.eq.s32.totalorder %s17, 1
      %p108 = por %p106, %p107
      %p109 = scmp.ne.s32.totalorder %s98, %s99
      %p110 = scmp.eq.s32.totalorder %s17, 0
      %p111 = por %p109, %p110
      %p112 = scmp.ne.s32.totalorder %s98, %s99
      %p113 = scmp.eq.s32.totalorder %s18, 1
      %p114 = por %p112, %p113
      %p116 = scmp.ne.s32.totalorder %s99, %s115
      %p117 = scmp.eq.s32.totalorder %s18, 0
      %p118 = por %p116, %p117
      %p119 = scmp.le.s32.totalorder 1, %s12
      %p120 = scmp.lt.s32.totalorder %s12, 3
      %p121 = pnand %p119, %p120
      %p122 = pneg %p121
      // Predicated region
      $region9: #{decoder_forward.3} parent=5 // pred_check
        _
      $region10: #{decoder_forward.3} parent=5 // pred_check_branch
        %124 = sbr.rel (%p121) target = $region12
      $region11: #{decoder_forward.3} parent=5 // pred_region
        %s125 = ssub.s32 %s12, 1
        // Predicated region
        $region13: #{decoder_forward.3} parent=11 // pred_check
          %p126 = pneg %p33
        $region14: #{decoder_forward.3} parent=11 // pred_check_branch
          %128 = sbr.rel (%p126) target = $region16
        $region15: #{decoder_forward.3} parent=11 // pred_region
          _
        $region16: #{decoder_forward.3} parent=11 // pred_fallthru
          _
      $region12: #{decoder_forward.3} parent=5 // pred_fallthru
        _
      %p129 = scmp.lt.s32.totalorder %s12, 2
      // Predicated region
      $region17: #{decoder_forward.3} parent=5 // pred_check
        %p130 = pneg %p129
      $region18: #{decoder_forward.3} parent=5 // pred_check_branch
        %132 = sbr.rel (%p130) target = $region20
      $region19: #{decoder_forward.3} parent=5 // pred_region
        // Predicated region
        $region21: #{decoder_forward.3} parent=19 // pred_check
          %p133 = pneg %p53
        $region22: #{decoder_forward.3} parent=19 // pred_check_branch
          %135 = sbr.rel (%p133) target = $region24
        $region23: #{decoder_forward.3} parent=19 // pred_region
          %s136 = sand.u32 %s43, 1
          %s137 = sand.u32 %s43, 1
          %s138 = smul.addr %s137, 256
          %s139 = scalar_lea.vmem [#allocation2], %s138
          %s140 = smul.u32 4, %s12
          %s141 = smul.addr %s140, 4
          %s142 = scalar_lea.vmem %s1, %s141
          // Predicated region
          $region25: #{decoder_forward.3} parent=23 // pred_check
            _
          $region26: #{decoder_forward.3} parent=23 // pred_check_branch
            %144 = sbr.rel (0) target = $region28
          $region27: #{decoder_forward.3} parent=23 // pred_region
            // Predicated region
            $region29: #{decoder_forward.3} parent=27 // pred_check
              _
            $region30: #{decoder_forward.3} parent=27 // pred_check_branch
              %146 = sbr.rel (0) target = $region32
            $region31: #{decoder_forward.3} parent=27 // pred_region
              loop: start=0, step=1, limit=1
              $region33: #{decoder_forward.3} parent=31 // loop_pre_header
                _
              $region34: #{decoder_forward.3} parent=31 // loop_header
                %s148 = sphi 0, %s152
                %p149 = scmp.ge.s32.totalorder %s148, 1
                %s153 = sphi %s142, %s142
                %s154 = sphi %s139, %s139
              $region35: #{decoder_forward.3} parent=31 // loop_header_branch
                %151 = sbr.rel (%p149) target = $region39
              $region36: #{decoder_forward.3} parent=31 // loop_body
                %v155 = vld [vmem:[%s153] sm:$0xff]
                %156 = vst [vmem:[%s154] sm:$0xff] %v155
                %v157 = vld [vmem:[%s153 + $0x8] sm:$0xff]
                %158 = vst [vmem:[%s154 + $0x8] sm:$0xff] %v157
                %v159 = vld [vmem:[%s153 + $0x20] sm:$0xff]
                %160 = vst [vmem:[%s154 + $0x10] sm:$0xff] %v159
                %v161 = vld [vmem:[%s153 + $0x28] sm:$0xff]
                %162 = vst [vmem:[%s154 + $0x18] sm:$0xff] %v161
                %v163 = vld [vmem:[%s153 + $0x40] sm:$0xff]
                %164 = vst [vmem:[%s154 + $0x20] sm:$0xff] %v163
                %v165 = vld [vmem:[%s153 + $0x48] sm:$0xff]
                %166 = vst [vmem:[%s154 + $0x28] sm:$0xff] %v165
                %v167 = vld [vmem:[%s153 + $0x60] sm:$0xff]
                %168 = vst [vmem:[%s154 + $0x30] sm:$0xff] %v167
                %v169 = vld [vmem:[%s153 + $0x68] sm:$0xff]
                %170 = vst [vmem:[%s154 + $0x38] sm:$0xff] %v169
                %v171 = vld [vmem:[%s153 + $0x80] sm:$0xff]
                %172 = vst [vmem:[%s154 + $0x40] sm:$0xff] %v171
                %v173 = vld [vmem:[%s153 + $0x88] sm:$0xff]
                %174 = vst [vmem:[%s154 + $0x48] sm:$0xff] %v173
                %v175 = vld [vmem:[%s153 + $0xa0] sm:$0xff]
                %176 = vst [vmem:[%s154 + $0x50] sm:$0xff] %v175
                %v177 = vld [vmem:[%s153 + $0xa8] sm:$0xff]
                %178 = vst [vmem:[%s154 + $0x58] sm:$0xff] %v177
                %v179 = vld [vmem:[%s153 + $0xc0] sm:$0xff]
                %180 = vst [vmem:[%s154 + $0x60] sm:$0xff] %v179
                %v181 = vld [vmem:[%s153 + $0xc8] sm:$0xff]
                %182 = vst [vmem:[%s154 + $0x68] sm:$0xff] %v181
                %v183 = vld [vmem:[%s153 + $0xe0] sm:$0xff]
                %184 = vst [vmem:[%s154 + $0x70] sm:$0xff] %v183
                %v185 = vld [vmem:[%s153 + $0xe8] sm:$0xff]
                %186 = vst [vmem:[%s154 + $0x78] sm:$0xff] %v185
                %v187 = vld [vmem:[%s153 + $0x100] sm:$0xff]
                %188 = vst [vmem:[%s154 + $0x80] sm:$0xff] %v187
                %v189 = vld [vmem:[%s153 + $0x108] sm:$0xff]
                %190 = vst [vmem:[%s154 + $0x88] sm:$0xff] %v189
                %v191 = vld [vmem:[%s153 + $0x120] sm:$0xff]
                %192 = vst [vmem:[%s154 + $0x90] sm:$0xff] %v191
                %v193 = vld [vmem:[%s153 + $0x128] sm:$0xff]
                %194 = vst [vmem:[%s154 + $0x98] sm:$0xff] %v193
                %v195 = vld [vmem:[%s153 + $0x140] sm:$0xff]
                %196 = vst [vmem:[%s154 + $0xa0] sm:$0xff] %v195
                %v197 = vld [vmem:[%s153 + $0x148] sm:$0xff]
                %198 = vst [vmem:[%s154 + $0xa8] sm:$0xff] %v197
                %v199 = vld [vmem:[%s153 + $0x160] sm:$0xff]
                %200 = vst [vmem:[%s154 + $0xb0] sm:$0xff] %v199
                %v201 = vld [vmem:[%s153 + $0x168] sm:$0xff]
                %202 = vst [vmem:[%s154 + $0xb8] sm:$0xff] %v201
                %v203 = vld [vmem:[%s153 + $0x180] sm:$0xff]
                %204 = vst [vmem:[%s154 + $0xc0] sm:$0xff] %v203
                %v205 = vld [vmem:[%s153 + $0x188] sm:$0xff]
                %206 = vst [vmem:[%s154 + $0xc8] sm:$0xff] %v205
                %v207 = vld [vmem:[%s153 + $0x1a0] sm:$0xff]
                %208 = vst [vmem:[%s154 + $0xd0] sm:$0xff] %v207
                %v209 = vld [vmem:[%s153 + $0x1a8] sm:$0xff]
                %210 = vst [vmem:[%s154 + $0xd8] sm:$0xff] %v209
                %v211 = vld [vmem:[%s153 + $0x1c0] sm:$0xff]
                %212 = vst [vmem:[%s154 + $0xe0] sm:$0xff] %v211
                %v213 = vld [vmem:[%s153 + $0x1c8] sm:$0xff]
                %214 = vst [vmem:[%s154 + $0xe8] sm:$0xff] %v213
                %v215 = vld [vmem:[%s153 + $0x1e0] sm:$0xff]
                %216 = vst [vmem:[%s154 + $0xf0] sm:$0xff] %v215
                %v217 = vld [vmem:[%s153 + $0x1e8] sm:$0xff]
                %218 = vst [vmem:[%s154 + $0xf8] sm:$0xff] %v217
              $region37: #{decoder_forward.3} parent=31 // loop_footer
                %s152 = sadd.s32 1, %s148
              $region38: #{decoder_forward.3} parent=31 // loop_footer_branch
                %147 = sbr.rel target = $region34
              $region39: #{decoder_forward.3} parent=31 // loop_exit
                _
            $region32: #{decoder_forward.3} parent=27 // pred_fallthru
              _
            // Predicated region
            $region40: #{decoder_forward.3} parent=27 // pred_check
              _
            $region41: #{decoder_forward.3} parent=27 // pred_check_branch
              %220 = sbr.rel target = $region43
            $region42: #{decoder_forward.3} parent=27 // pred_region
              _
            $region43: #{decoder_forward.3} parent=27 // pred_fallthru
              _
          $region28: #{decoder_forward.3} parent=23 // pred_fallthru
            _
          %221 = vnop
        $region24: #{decoder_forward.3} parent=19 // pred_fallthru
          _
        // Predicated region
        $region44: #{decoder_forward.3} parent=19 // pred_check
          %p222 = pneg %p79
        $region45: #{decoder_forward.3} parent=19 // pred_check_branch
          %224 = sbr.rel (%p222) target = $region47
        $region46: #{decoder_forward.3} parent=19 // pred_region
          %s225 = smul.u32 4, %s12
          %p226 = scmp.lt.s32.totalorder %s225, 7
          %s227 = scalar_select %p226, %s225, 7
          %s228 = scalar_lea.vmem %s2, %s227
          %s229 = smul.u32 4, %s12
        $region47: #{decoder_forward.3} parent=19 // pred_fallthru
          _
      $region20: #{decoder_forward.3} parent=5 // pred_fallthru
        _
      %p230 = scmp.le.s32.totalorder 1, %s12
      %p231 = scmp.lt.s32.totalorder %s12, 3
      %p232 = pnand %p230, %p231
      %p233 = pneg %p232
      // Predicated region
      $region48: #{decoder_forward.3} parent=5 // pred_check
        _
      $region49: #{decoder_forward.3} parent=5 // pred_check_branch
        %235 = sbr.rel (%p232) target = $region51
      $region50: #{decoder_forward.3} parent=5 // pred_region
        %s236 = ssub.s32 %s12, 1
        %s237 = sand.u32 %s46, 1
        %s238 = sand.u32 %s46, 1
        %s239 = smul.addr %s238, 256
        %s240 = scalar_lea.vmem [#allocation2], %s239
        // Predicated region
        $region52: #{decoder_forward.3} parent=50 // pred_check
          %p241 = pneg %p59
        $region53: #{decoder_forward.3} parent=50 // pred_check_branch
          %243 = sbr.rel (%p241) target = $region55
        $region54: #{decoder_forward.3} parent=50 // pred_region
          _
        $region55: #{decoder_forward.3} parent=50 // pred_fallthru
          _
        %p244 = pneg %p33
        %p245 = pneg %p30
        %s246 = sand.u32 %s46, 1
        %s247 = sand.u32 %s46, 1
        %s248 = smul.addr %s247, 256
        %s249 = scalar_lea.vmem [#allocation2], %s248
        %p250 = pneg %p59
        %p251 = pneg %p56
        %s252 = smul.u32 4, %s17
        %p253 = scmp.lt.s32.totalorder %s252, 7
        %s254 = scalar_select %p253, %s252, 7
        %s255 = scalar_lea.vmem %s2, %s254
        %p256 = pneg %p85
        %p257 = pneg %p82
        %p258 = pneg %p111
        %p259 = pneg %p108
        %s260 = sand.u32 %s98, 1
        %s261 = scalar_lea.sflag [#allocation4], %s260
        %s262 = sand.u32 %s98, 1
        %s263 = smul.addr %s262, 32
        %s264 = scalar_lea.vmem [#allocation3], %s263
        %s265 = smul.u32 4, %s17
        %s266 = smul.u32 4, %s17
        %p267 = scmp.lt.s32.totalorder %s266, 7
        %s268 = scalar_select %p267, %s266, 7
        %s269 = scalar_lea.vmem %s2, %s268
        %s270 = smul.u32 4, %s17
        %s271 = smul.u32 4, %s17
        %v273 = vld [vmem:[%s0] sm:$0xf]
        %v274 = vld [vmem:[%s240] sm:$0xff]
        %v275 = vld [vmem:[%s240 + $0x8] sm:$0xff]
        %v276 = vld [vmem:[%s240 + $0x10] sm:$0xff]
        %v277 = vld [vmem:[%s240 + $0x18] sm:$0xff]
        %v278 = vld [vmem:[%s240 + $0x20] sm:$0xff]
        %v279 = vld [vmem:[%s240 + $0x28] sm:$0xff]
        %v280 = vld [vmem:[%s240 + $0x30] sm:$0xff]
        %v281 = vld [vmem:[%s240 + $0x38] sm:$0xff]
        %v282 = vld [vmem:[%s240 + $0x40] sm:$0xff]
        %v283 = vld [vmem:[%s240 + $0x48] sm:$0xff]
        %v284 = vld [vmem:[%s240 + $0x50] sm:$0xff]
        %v285 = vld [vmem:[%s240 + $0x58] sm:$0xff]
        %v286 = vld [vmem:[%s240 + $0x60] sm:$0xff]
        %v287 = vld [vmem:[%s240 + $0x68] sm:$0xff]
        %v288 = vld [vmem:[%s240 + $0x70] sm:$0xff]
        %v289 = vld [vmem:[%s240 + $0x78] sm:$0xff]
        %v290 = vld [vmem:[%s240 + $0x80] sm:$0xff]
        %v291 = vld [vmem:[%s240 + $0x88] sm:$0xff]
        %v292 = vld [vmem:[%s240 + $0x90] sm:$0xff]
        %v293 = vld [vmem:[%s240 + $0x98] sm:$0xff]
        %v294 = vld [vmem:[%s240 + $0xa0] sm:$0xff]
        %v295 = vld [vmem:[%s240 + $0xa8] sm:$0xff]
        %v296 = vld [vmem:[%s240 + $0xb0] sm:$0xff]
        %v297 = vld [vmem:[%s240 + $0xb8] sm:$0xff]
        %v298 = vld [vmem:[%s240 + $0xc0] sm:$0xff]
        %v299 = vld [vmem:[%s240 + $0xc8] sm:$0xff]
        %v300 = vld [vmem:[%s240 + $0xd0] sm:$0xff]
        %v301 = vld [vmem:[%s240 + $0xd8] sm:$0xff]
        %v302 = vld [vmem:[%s240 + $0xe0] sm:$0xff]
        %v303 = vld [vmem:[%s240 + $0xe8] sm:$0xff]
        %v304 = vld [vmem:[%s240 + $0xf0] sm:$0xff]
        %v305 = vld [vmem:[%s240 + $0xf8] sm:$0xff]
        %v306 = vld [vmem:[%s269] sm:$0xf]
        %v308 = vlaneseq
        %v309 = vshrl.u32 %v308, 7
        %v310 = vsub.s32 0, %v309
        %v311 = vrot.slane %v306, %v310
        %v312 = vlaneseq
        %v313 = vshrl.u32 %v312, 7
        %v314 = vsub.s32 1, %v313
        %v315 = vrot.slane %v306, %v314
        %v316 = vlaneseq
        %v317 = vshrl.u32 %v316, 7
        %v318 = vsub.s32 2, %v317
        %v319 = vrot.slane %v306, %v318
        %v320 = vlaneseq
        %v321 = vshrl.u32 %v320, 7
        %v322 = vsub.s32 3, %v321
        %v323 = vrot.slane %v306, %v322
        %v360 = vunpack.c.l.b16 %v274
        %v361 = vunpack.c.h.b16 %v274
        %v362 = vunpack.c.l.b16 %v275
        %v363 = vunpack.c.h.b16 %v275
        %v364 = vunpack.c.l.b16 %v276
        %v365 = vunpack.c.h.b16 %v276
        %v366 = vunpack.c.l.b16 %v277
        %v367 = vunpack.c.h.b16 %v277
        %v368 = vunpack.c.l.b16 %v278
        %v369 = vunpack.c.h.b16 %v278
        %v370 = vunpack.c.l.b16 %v279
        %v371 = vunpack.c.h.b16 %v279
        %v372 = vunpack.c.l.b16 %v280
        %v373 = vunpack.c.h.b16 %v280
        %v374 = vunpack.c.l.b16 %v281
        %v375 = vunpack.c.h.b16 %v281
        %v376 = vunpack.c.l.b16 %v282
        %v377 = vunpack.c.h.b16 %v282
        %v378 = vunpack.c.l.b16 %v283
        %v379 = vunpack.c.h.b16 %v283
        %v380 = vunpack.c.l.b16 %v284
        %v381 = vunpack.c.h.b16 %v284
        %v382 = vunpack.c.l.b16 %v285
        %v383 = vunpack.c.h.b16 %v285
        %v384 = vunpack.c.l.b16 %v286
        %v385 = vunpack.c.h.b16 %v286
        %v386 = vunpack.c.l.b16 %v287
        %v387 = vunpack.c.h.b16 %v287
        %v388 = vunpack.c.l.b16 %v288
        %v389 = vunpack.c.h.b16 %v288
        %v390 = vunpack.c.l.b16 %v289
        %v391 = vunpack.c.h.b16 %v289
        %v392 = vunpack.c.l.b16 %v290
        %v393 = vunpack.c.h.b16 %v290
        %v394 = vunpack.c.l.b16 %v291
        %v395 = vunpack.c.h.b16 %v291
        %v396 = vunpack.c.l.b16 %v292
        %v397 = vunpack.c.h.b16 %v292
        %v398 = vunpack.c.l.b16 %v293
        %v399 = vunpack.c.h.b16 %v293
        %v400 = vunpack.c.l.b16 %v294
        %v401 = vunpack.c.h.b16 %v294
        %v402 = vunpack.c.l.b16 %v295
        %v403 = vunpack.c.h.b16 %v295
        %v404 = vunpack.c.l.b16 %v296
        %v405 = vunpack.c.h.b16 %v296
        %v406 = vunpack.c.l.b16 %v297
        %v407 = vunpack.c.h.b16 %v297
        %v408 = vunpack.c.l.b16 %v298
        %v409 = vunpack.c.h.b16 %v298
        %v410 = vunpack.c.l.b16 %v299
        %v411 = vunpack.c.h.b16 %v299
        %v412 = vunpack.c.l.b16 %v300
        %v413 = vunpack.c.h.b16 %v300
        %v414 = vunpack.c.l.b16 %v301
        %v415 = vunpack.c.h.b16 %v301
        %v416 = vunpack.c.l.b16 %v302
        %v417 = vunpack.c.h.b16 %v302
        %v418 = vunpack.c.l.b16 %v303
        %v419 = vunpack.c.h.b16 %v303
        %v420 = vunpack.c.l.b16 %v304
        %v421 = vunpack.c.h.b16 %v304
        %v422 = vunpack.c.l.b16 %v305
        %v423 = vunpack.c.h.b16 %v305
        %v424 = vpack.c.b16 %v364, %v360
        %v425 = vpack.c.b16 %v365, %v361
        %v426 = vpack.c.b16 %v366, %v362
        %v427 = vpack.c.b16 %v367, %v363
        %v428 = vpack.c.b16 %v372, %v368
        %v429 = vpack.c.b16 %v373, %v369
        %v430 = vpack.c.b16 %v374, %v370
        %v431 = vpack.c.b16 %v375, %v371
        %v432 = vpack.c.b16 %v380, %v376
        %v433 = vpack.c.b16 %v381, %v377
        %v434 = vpack.c.b16 %v382, %v378
        %v435 = vpack.c.b16 %v383, %v379
        %v436 = vpack.c.b16 %v388, %v384
        %v437 = vpack.c.b16 %v389, %v385
        %v438 = vpack.c.b16 %v390, %v386
        %v439 = vpack.c.b16 %v391, %v387
        %v440 = vpack.c.b16 %v396, %v392
        %v441 = vpack.c.b16 %v397, %v393
        %v442 = vpack.c.b16 %v398, %v394
        %v443 = vpack.c.b16 %v399, %v395
        %v444 = vpack.c.b16 %v404, %v400
        %v445 = vpack.c.b16 %v405, %v401
        %v446 = vpack.c.b16 %v406, %v402
        %v447 = vpack.c.b16 %v407, %v403
        %v448 = vpack.c.b16 %v412, %v408
        %v449 = vpack.c.b16 %v413, %v409
        %v450 = vpack.c.b16 %v414, %v410
        %v451 = vpack.c.b16 %v415, %v411
        %v452 = vpack.c.b16 %v420, %v416
        %v453 = vpack.c.b16 %v421, %v417
        %v454 = vpack.c.b16 %v422, %v418
        %v455 = vpack.c.b16 %v423, %v419
        %488 = vmatprep.subr.bf16.mxu0 %v453
        %489 = vmatpush1.bf16.msra.mxu0 %v452
        %490 = vmatprep.subr.bf16.mxu0 %v449
        %491 = vmatpush1.bf16.msra.mxu0 %v448
        %492 = vmatprep.subr.bf16.mxu0 %v445
        %493 = vmatpush1.bf16.msra.mxu0 %v444
        %494 = vmatprep.subr.bf16.mxu0 %v441
        %495 = vmatpush1.bf16.msra.mxu0 %v440
        %496 = vmatprep.subr.bf16.mxu0 %v437
        %497 = vmatpush1.bf16.msra.mxu0 %v436
        %498 = vmatprep.subr.bf16.mxu0 %v433
        %499 = vmatpush1.bf16.msra.mxu0 %v432
        %500 = vmatprep.subr.bf16.mxu0 %v429
        %501 = vmatpush1.bf16.msra.mxu0 %v428
        %502 = vmatprep.subr.bf16.mxu0 %v425
        %503 = vmatpush1.bf16.msra.mxu0 %v424
        %504 = vmatprep.subr.bf16.mxu0 0
        %505 = vmatpush2.bf16.msra.mxu0 0
        %506 = vmatprep.subr.bf16.mxu0 0
        %507 = vmatpush2.bf16.msra.mxu0 0
        %508 = vmatprep.subr.bf16.mxu0 0
        %509 = vmatpush2.bf16.msra.mxu0 0
        %510 = vmatprep.subr.bf16.mxu0 0
        %511 = vmatpush2.bf16.msra.mxu0 0
        %512 = vmatprep.subr.bf16.mxu0 0
        %513 = vmatpush2.bf16.msra.mxu0 0
        %514 = vmatprep.subr.bf16.mxu0 0
        %515 = vmatpush2.bf16.msra.mxu0 0
        %516 = vmatprep.subr.bf16.mxu0 0
        %517 = vmatpush2.bf16.msra.mxu0 0
        %518 = vmatprep.subr.bf16.mxu0 0
        %519 = vmatpush2.bf16.msra.mxu0 0
        %520 = vmatprep.mubr.bf16.mxu0 0
        %521 = vmatmul.mubr.bf16.gmra.mxu0 %v273
        %v522 = vpop.f32.mrf.mxu0
        %v523 = vadd.f32 %v311, %v522
        %v524 = vpop.f32.mrf.mxu0
        %v525 = vadd.f32 %v315, %v524
        %v526 = vpop.f32.mrf.mxu0
        %v527 = vpop.f32.mrf.mxu0
        %528 = vdwg.mxu0
        %529 = vmatprep.subr.bf16.mxu0 %v455
        %530 = vmatpush1.bf16.msra.mxu0 %v454
        %531 = vmatprep.subr.bf16.mxu0 %v451
        %532 = vmatpush1.bf16.msra.mxu0 %v450
        %533 = vmatprep.subr.bf16.mxu0 %v447
        %534 = vmatpush1.bf16.msra.mxu0 %v446
        %535 = vmatprep.subr.bf16.mxu0 %v443
        %536 = vmatpush1.bf16.msra.mxu0 %v442
        %537 = vmatprep.subr.bf16.mxu0 %v439
        %538 = vmatpush1.bf16.msra.mxu0 %v438
        %539 = vmatprep.subr.bf16.mxu0 %v435
        %540 = vmatpush1.bf16.msra.mxu0 %v434
        %541 = vmatprep.subr.bf16.mxu0 %v431
        %542 = vmatpush1.bf16.msra.mxu0 %v430
        %543 = vmatprep.subr.bf16.mxu0 %v427
        %544 = vmatpush1.bf16.msra.mxu0 %v426
        %545 = vmatprep.subr.bf16.mxu0 0
        %546 = vmatpush2.bf16.msra.mxu0 0
        %547 = vmatprep.subr.bf16.mxu0 0
        %548 = vmatpush2.bf16.msra.mxu0 0
        %549 = vmatprep.subr.bf16.mxu0 0
        %550 = vmatpush2.bf16.msra.mxu0 0
        %551 = vmatprep.subr.bf16.mxu0 0
        %552 = vmatpush2.bf16.msra.mxu0 0
        %553 = vmatprep.subr.bf16.mxu0 0
        %554 = vmatpush2.bf16.msra.mxu0 0
        %555 = vmatprep.subr.bf16.mxu0 0
        %556 = vmatpush2.bf16.msra.mxu0 0
        %557 = vmatprep.subr.bf16.mxu0 0
        %558 = vmatpush2.bf16.msra.mxu0 0
        %559 = vmatprep.subr.bf16.mxu0 0
        %560 = vmatpush2.bf16.msra.mxu0 0
        %561 = vmatprep.mubr.bf16.mxu0 0
        %562 = vmatmul.mubr.bf16.gmra.mxu0 %v273
        %v563 = vpop.f32.mrf.mxu0
        %v564 = vadd.f32 %v319, %v563
        %v565 = vpop.f32.mrf.mxu0
        %v566 = vadd.f32 %v323, %v565
        %v567 = vpop.f32.mrf.mxu0
        %v568 = vpop.f32.mrf.mxu0
        %569 = vdwg.mxu0
        %570 = vst [vmem:[%s264] sm:$0xff] %v523
        %571 = vst [vmem:[%s264 + $0x8] sm:$0xff] %v525
        %572 = vst [vmem:[%s264 + $0x10] sm:$0xff] %v564
        %573 = vst [vmem:[%s264 + $0x18] sm:$0xff] %v566
        %s574 = sand.u32 %s98, 1
        %s575 = scalar_lea.sflag [#allocation4], %s574
        %s576 = sand.u32 %s98, 1
        %s577 = smul.addr %s576, 32
        %s578 = scalar_lea.vmem [#allocation3], %s577
        // Predicated region
        $region56: #{decoder_forward.3} parent=50 // pred_check
          %p579 = pneg %p108
        $region57: #{decoder_forward.3} parent=50 // pred_check_branch
          %581 = sbr.rel (%p579) target = $region59
        $region58: #{decoder_forward.3} parent=50 // pred_region
          %s582 = smul.u32 4, %s17
          %s584 = ssub.s32 512, 512
          %585 = vsyncadd %s575, %s584
          %s586 = smul.addr %s582, 128
          %s587 = scalar_lea.hbm %s3, %s586
          %s589 = sshll.u32 %s578, 4
          %s590 = int_to_ptr.vmem [resolvable:$true] %s589
          %592 = dma.vmem_to_hbm [thread:$0]  %s590, 512, %s587, %s575
        $region59: #{decoder_forward.3} parent=50 // pred_fallthru
          _
      $region51: #{decoder_forward.3} parent=5 // pred_fallthru
        _
      %p593 = scmp.le.s32.totalorder 2, %s12
      // Predicated region
      $region60: #{decoder_forward.3} parent=5 // pred_check
        %p594 = pneg %p593
      $region61: #{decoder_forward.3} parent=5 // pred_check_branch
        %596 = sbr.rel (%p594) target = $region63
      $region62: #{decoder_forward.3} parent=5 // pred_region
        %s597 = ssub.s32 %s12, 2
        // Predicated region
        $region64: #{decoder_forward.3} parent=62 // pred_check
          %p598 = pneg %p114
        $region65: #{decoder_forward.3} parent=62 // pred_check_branch
          %600 = sbr.rel (%p598) target = $region67
        $region66: #{decoder_forward.3} parent=62 // pred_region
          %s601 = sand.u32 %s99, 1
          %s602 = scalar_lea.sflag [#allocation4], %s601
          %s603 = sand.u32 %s99, 1
          %s604 = smul.addr %s603, 32
          %s605 = scalar_lea.vmem [#allocation3], %s604
          %606 = dma.done %s602, 512
        $region67: #{decoder_forward.3} parent=62 // pred_fallthru
          _
      $region63: #{decoder_forward.3} parent=5 // pred_fallthru
        _
    $region6: #{decoder_forward.3} parent=1 // loop_footer
      %s16 = sadd.s32 1, %s12
    $region7: #{decoder_forward.3} parent=1 // loop_footer_branch
      %11 = sbr.rel target = $region3
    $region8: #{decoder_forward.3} parent=1 // loop_exit
      _
    %607 = vsyncpa [#allocation4], 1
    %s608 = scalar_lea.sflag [#allocation4], 1
    %609 = vsyncpa %s608, 1

// kernel: decoder_forward.2
$region0: #{decoder_forward.2}
  #allocation0 [shape = 'u32[]', space=smem, size = 0x4, offset = 0x4, fixed_abs, tag = 'smem constant byte address 0x4 - core index']
  #allocation1 [shape = 'u32[144,128]{1,0:T(1,128)}', space=vmem, size = 0x12000, scoped, tag = 'internal scratch']
  %s0 = inlined_call_operand.vmem [shape: f32[8,64], index: 0, kind: input, shape index: {}]
  %s1 = inlined_call_operand.vmem [shape: f32[8,128], index: 1, kind: input, shape index: {}]
  %s2 = inlined_call_operand.vmem [shape: bf16[8,128,128], index: 2, kind: input, shape index: {}]
  %s3 = inlined_call_operand.vmem [shape: bf16[64,384], index: 3, kind: input, shape index: {}]
  %s4 = inlined_call_operand.vmem [shape: bf16[128,384], index: 4, kind: input, shape index: {}]
  %s5 = inlined_call_operand.vmem [shape: f32[1,384], index: 5, kind: input, shape index: {}]
  %s6 = inlined_call_operand.vmem [shape: f32[1,384], index: 6, kind: input, shape index: {}]
  %s7 = inlined_call_operand.vmem [shape: bf16[128,128], index: 7, kind: input, shape index: {}]
  %s8 = inlined_call_operand.vmem [shape: bf16[128,128], index: 8, kind: input, shape index: {}]
  %s9 = inlined_call_operand.vmem [shape: bf16[128,128], index: 9, kind: input, shape index: {}]
  %s10 = inlined_call_operand.vmem [shape: f32[1,128], index: 10, kind: input, shape index: {}]
  %s11 = inlined_call_operand.hbm [shape: f32[8,128], index: 11, kind: output, shape index: {0}]
  %s12 = inlined_call_operand.hbm [shape: f32[8,128], index: 12, kind: output, shape index: {1}]
  %s13 = inlined_call_operand.vmem [shape: bf16[8,128], index: 13, kind: output, shape index: {2}]
  %14 = xla_tuple %s11, %s12, %s13
  %s15 = sld [smem:[#allocation0]]
  $region70: #{decoder_forward.2} parent=0
    _
  %s17 = ssub.s32 1, %s15
  %s18 = scalar_select 0, %s17, %s15
  $region1: #{decoder_forward.2} parent=0
    #allocation2 [shape = 'u8[4096]{0}', space=vmem, size = 0x1000, scoped, tag = 'output window, operand 0, single buffered']
    #allocation3 [shape = 's32[1]{0}', space=sflag, size = 0x4, scoped, tag = 'scoped memory for decoder_forward.2']
    #allocation4 [shape = 'u8[4096]{0}', space=vmem, size = 0x1000, scoped, tag = 'output window, operand 1, single buffered']
    #allocation5 [shape = 's32[1]{0}', space=sflag, size = 0x4, scoped, tag = 'scoped memory for decoder_forward.2']
    %19 = vsyncpa [#allocation3], 0
    %20 = vsyncpa [#allocation5], 0
    // Predicated region
    $region2: #{decoder_forward.2} parent=1 // pred_check
      _
    $region3: #{decoder_forward.2} parent=1 // pred_check_branch
      %22 = sbr.rel (0) target = $region5
    $region4: #{decoder_forward.2} parent=1 // pred_region
      _
    $region5: #{decoder_forward.2} parent=1 // pred_fallthru
      _
    // Predicated region
    $region6: #{decoder_forward.2} parent=1 // pred_check
      _
    $region7: #{decoder_forward.2} parent=1 // pred_check_branch
      %24 = sbr.rel (0) target = $region9
    $region8: #{decoder_forward.2} parent=1 // pred_region
      _
    $region9: #{decoder_forward.2} parent=1 // pred_fallthru
      _
    // Predicated region
    $region10: #{decoder_forward.2} parent=1 // pred_check
      _
    $region11: #{decoder_forward.2} parent=1 // pred_check_branch
      %26 = sbr.rel (0) target = $region13
    $region12: #{decoder_forward.2} parent=1 // pred_region
      _
    $region13: #{decoder_forward.2} parent=1 // pred_fallthru
      _
    // Predicated region
    $region14: #{decoder_forward.2} parent=1 // pred_check
      _
    $region15: #{decoder_forward.2} parent=1 // pred_check_branch
      %28 = sbr.rel (0) target = $region17
    $region16: #{decoder_forward.2} parent=1 // pred_region
      _
    $region17: #{decoder_forward.2} parent=1 // pred_fallthru
      _
    // Predicated region
    $region18: #{decoder_forward.2} parent=1 // pred_check
      _
    $region19: #{decoder_forward.2} parent=1 // pred_check_branch
      %30 = sbr.rel (0) target = $region21
    $region20: #{decoder_forward.2} parent=1 // pred_region
      _
    $region21: #{decoder_forward.2} parent=1 // pred_fallthru
      _
    // Predicated region
    $region22: #{decoder_forward.2} parent=1 // pred_check
      _
    $region23: #{decoder_forward.2} parent=1 // pred_check_branch
      %32 = sbr.rel (0) target = $region25
    $region24: #{decoder_forward.2} parent=1 // pred_region
      _
    $region25: #{decoder_forward.2} parent=1 // pred_fallthru
      _
    // Predicated region
    $region26: #{decoder_forward.2} parent=1 // pred_check
      _
    $region27: #{decoder_forward.2} parent=1 // pred_check_branch
      %34 = sbr.rel (0) target = $region29
    $region28: #{decoder_forward.2} parent=1 // pred_region
      _
    $region29: #{decoder_forward.2} parent=1 // pred_fallthru
      _
    // Predicated region
    $region30: #{decoder_forward.2} parent=1 // pred_check
      _
    $region31: #{decoder_forward.2} parent=1 // pred_check_branch
      %36 = sbr.rel (0) target = $region33
    $region32: #{decoder_forward.2} parent=1 // pred_region
      _
    $region33: #{decoder_forward.2} parent=1 // pred_fallthru
      _
    // Predicated region
    $region34: #{decoder_forward.2} parent=1 // pred_check
      _
    $region35: #{decoder_forward.2} parent=1 // pred_check_branch
      %38 = sbr.rel (0) target = $region37
    $region36: #{decoder_forward.2} parent=1 // pred_region
      _
    $region37: #{decoder_forward.2} parent=1 // pred_fallthru
      _
    // Predicated region
    $region38: #{decoder_forward.2} parent=1 // pred_check
      _
    $region39: #{decoder_forward.2} parent=1 // pred_check_branch
      %40 = sbr.rel (0) target = $region41
    $region40: #{decoder_forward.2} parent=1 // pred_region
      _
    $region41: #{decoder_forward.2} parent=1 // pred_fallthru
      _
    // Predicated region
    $region42: #{decoder_forward.2} parent=1 // pred_check
      _
    $region43: #{decoder_forward.2} parent=1 // pred_check_branch
      %42 = sbr.rel (0) target = $region45
    $region44: #{decoder_forward.2} parent=1 // pred_region
      _
    $region45: #{decoder_forward.2} parent=1 // pred_fallthru
      _
    %v44 = vld [vmem:[%s0] sm:$0xff]
    %v45 = vpack.c.bf16 %v44, %v44
    %v46 = vld [vmem:[%s1] sm:$0xff]
    %v47 = vpack.c.bf16 %v46, %v46
    %v48 = vld [vmem:[%s3] sm:$0xff]
    %v49 = vld [vmem:[%s3 + $0x8] sm:$0xf]
    %v50 = vld [vmem:[%s3 + $0xc] sm:$0xff]
    %v51 = vld [vmem:[%s3 + $0x14] sm:$0xf]
    %v52 = vld [vmem:[%s3 + $0x18] sm:$0xff]
    %v53 = vld [vmem:[%s3 + $0x20] sm:$0xf]
    %v54 = vld [vmem:[%s3 + $0x24] sm:$0xff]
    %v55 = vld [vmem:[%s3 + $0x2c] sm:$0xf]
    %v56 = vld [vmem:[%s3 + $0x30] sm:$0xff]
    %v57 = vld [vmem:[%s3 + $0x38] sm:$0xf]
    %v58 = vld [vmem:[%s3 + $0x3c] sm:$0xff]
    %v59 = vld [vmem:[%s3 + $0x44] sm:$0xf]
    %v60 = vld [vmem:[%s3 + $0x48] sm:$0xff]
    %v61 = vld [vmem:[%s3 + $0x50] sm:$0xf]
    %v62 = vld [vmem:[%s3 + $0x54] sm:$0xff]
    %v63 = vld [vmem:[%s3 + $0x5c] sm:$0xf]
    %v64 = vld [vmem:[%s5] sm:$0x7]
    %v66 = vlaneseq
    %v67 = vshrl.u32 %v66, 7
    %v68 = vsub.s32 0, %v67
    %v69 = vrot.slane %v64, %v68
    %v70 = vlaneseq
    %v71 = vshrl.u32 %v70, 7
    %v72 = vsub.s32 1, %v71
    %v73 = vrot.slane %v64, %v72
    %v74 = vlaneseq
    %v75 = vshrl.u32 %v74, 7
    %v76 = vsub.s32 2, %v75
    %v77 = vrot.slane %v64, %v76
    %v97 = vunpack.c.l.b16 %v48
    %v98 = vunpack.c.h.b16 %v48
    %v99 = vunpack.c.l.b16 %v49
    %v100 = vunpack.c.l.b16 %v50
    %v101 = vunpack.c.h.b16 %v50
    %v102 = vunpack.c.l.b16 %v51
    %v103 = vunpack.c.l.b16 %v52
    %v104 = vunpack.c.h.b16 %v52
    %v105 = vunpack.c.l.b16 %v53
    %v106 = vunpack.c.l.b16 %v54
    %v107 = vunpack.c.h.b16 %v54
    %v108 = vunpack.c.l.b16 %v55
    %v109 = vunpack.c.l.b16 %v56
    %v110 = vunpack.c.h.b16 %v56
    %v111 = vunpack.c.l.b16 %v57
    %v112 = vunpack.c.l.b16 %v58
    %v113 = vunpack.c.h.b16 %v58
    %v114 = vunpack.c.l.b16 %v59
    %v115 = vunpack.c.l.b16 %v60
    %v116 = vunpack.c.h.b16 %v60
    %v117 = vunpack.c.l.b16 %v61
    %v118 = vunpack.c.l.b16 %v62
    %v119 = vunpack.c.h.b16 %v62
    %v120 = vunpack.c.l.b16 %v63
    %v121 = vpack.c.b16 %v100, %v97
    %v122 = vpack.c.b16 %v101, %v98
    %v123 = vpack.c.b16 %v102, %v99
    %v124 = vpack.c.b16 %v106, %v103
    %v125 = vpack.c.b16 %v107, %v104
    %v126 = vpack.c.b16 %v108, %v105
    %v127 = vpack.c.b16 %v112, %v109
    %v128 = vpack.c.b16 %v113, %v110
    %v129 = vpack.c.b16 %v114, %v111
    %v130 = vpack.c.b16 %v118, %v115
    %v131 = vpack.c.b16 %v119, %v116
    %v132 = vpack.c.b16 %v120, %v117
    %vm145 = vcmask 523264
    %v147 = vsel %vm145, %v45, 0
    %149 = vmatprep.subr.bf16.mxu0 0
    %150 = vmatpush1.bf16.msra.mxu0 0
    %151 = vmatprep.subr.bf16.mxu0 0
    %152 = vmatpush1.bf16.msra.mxu0 0
    %153 = vmatprep.subr.bf16.mxu0 0
    %154 = vmatpush1.bf16.msra.mxu0 0
    %155 = vmatprep.subr.bf16.mxu0 0
    %156 = vmatpush1.bf16.msra.mxu0 0
    %157 = vmatprep.subr.bf16.mxu0 %v131
    %158 = vmatpush1.bf16.msra.mxu0 %v130
    %159 = vmatprep.subr.bf16.mxu0 %v128
    %160 = vmatpush1.bf16.msra.mxu0 %v127
    %161 = vmatprep.subr.bf16.mxu0 %v125
    %162 = vmatpush1.bf16.msra.mxu0 %v124
    %163 = vmatprep.subr.bf16.mxu0 %v122
    %164 = vmatpush1.bf16.msra.mxu0 %v121
    %165 = vmatprep.subr.bf16.mxu0 0
    %166 = vmatpush2.bf16.msra.mxu0 0
    %167 = vmatprep.subr.bf16.mxu0 0
    %168 = vmatpush2.bf16.msra.mxu0 0
    %169 = vmatprep.subr.bf16.mxu0 0
    %170 = vmatpush2.bf16.msra.mxu0 0
    %171 = vmatprep.subr.bf16.mxu0 0
    %172 = vmatpush2.bf16.msra.mxu0 0
    %173 = vmatprep.subr.bf16.mxu0 0
    %174 = vmatpush2.bf16.msra.mxu0 0
    %175 = vmatprep.subr.bf16.mxu0 0
    %176 = vmatpush2.bf16.msra.mxu0 0
    %177 = vmatprep.subr.bf16.mxu0 0
    %178 = vmatpush2.bf16.msra.mxu0 0
    %179 = vmatprep.subr.bf16.mxu0 0
    %180 = vmatpush2.bf16.msra.mxu0 0
    %181 = vmatprep.mubr.bf16.mxu0 0
    %182 = vmatmul.mubr.bf16.gmra.mxu0 %v147
    %v183 = vpop.f32.mrf.mxu0
    %v184 = vadd.f32 %v69, %v183
    %v185 = vpop.f32.mrf.mxu0
    %v186 = vadd.f32 %v73, %v185
    %v187 = vpop.f32.mrf.mxu0
    %v188 = vpop.f32.mrf.mxu0
    %189 = vdwg.mxu0
    %190 = vmatprep.subr.bf16.mxu0 0
    %191 = vmatpush1.bf16.msra.mxu0 0
    %192 = vmatprep.subr.bf16.mxu0 0
    %193 = vmatpush1.bf16.msra.mxu0 0
    %194 = vmatprep.subr.bf16.mxu0 0
    %195 = vmatpush1.bf16.msra.mxu0 0
    %196 = vmatprep.subr.bf16.mxu0 0
    %197 = vmatpush1.bf16.msra.mxu0 0
    %198 = vmatprep.subr.bf16.mxu0 0
    %199 = vmatpush1.bf16.msra.mxu0 %v132
    %200 = vmatprep.subr.bf16.mxu0 0
    %201 = vmatpush1.bf16.msra.mxu0 %v129
    %202 = vmatprep.subr.bf16.mxu0 0
    %203 = vmatpush1.bf16.msra.mxu0 %v126
    %204 = vmatprep.subr.bf16.mxu0 0
    %205 = vmatpush1.bf16.msra.mxu0 %v123
    %206 = vmatprep.subr.bf16.mxu0 0
    %207 = vmatpush2.bf16.msra.mxu0 0
    %208 = vmatprep.subr.bf16.mxu0 0
    %209 = vmatpush2.bf16.msra.mxu0 0
    %210 = vmatprep.subr.bf16.mxu0 0
    %211 = vmatpush2.bf16.msra.mxu0 0
    %212 = vmatprep.subr.bf16.mxu0 0
    %213 = vmatpush2.bf16.msra.mxu0 0
    %214 = vmatprep.subr.bf16.mxu0 0
    %215 = vmatpush2.bf16.msra.mxu0 0
    %216 = vmatprep.subr.bf16.mxu0 0
    %217 = vmatpush2.bf16.msra.mxu0 0
    %218 = vmatprep.subr.bf16.mxu0 0
    %219 = vmatpush2.bf16.msra.mxu0 0
    %220 = vmatprep.subr.bf16.mxu0 0
    %221 = vmatpush2.bf16.msra.mxu0 0
    %222 = vmatprep.mubr.bf16.mxu0 0
    %223 = vmatmul.mubr.bf16.gmra.mxu0 %v147
    %v224 = vpop.f32.mrf.mxu0
    %v225 = vadd.f32 %v77, %v224
    %v226 = vpop.f32.mrf.mxu0
    %v227 = vpop.f32.mrf.mxu0
    %v228 = vpop.f32.mrf.mxu0
    %229 = vdwg.mxu0
    %v230 = vld [vmem:[%s4] sm:$0xff]
    %v231 = vld [vmem:[%s4 + $0x8] sm:$0xf]
    %v232 = vld [vmem:[%s4 + $0xc] sm:$0xff]
    %v233 = vld [vmem:[%s4 + $0x14] sm:$0xf]
    %v234 = vld [vmem:[%s4 + $0x18] sm:$0xff]
    %v235 = vld [vmem:[%s4 + $0x20] sm:$0xf]
    %v236 = vld [vmem:[%s4 + $0x24] sm:$0xff]
    %v237 = vld [vmem:[%s4 + $0x2c] sm:$0xf]
    %v238 = vld [vmem:[%s4 + $0x30] sm:$0xff]
    %v239 = vld [vmem:[%s4 + $0x38] sm:$0xf]
    %v240 = vld [vmem:[%s4 + $0x3c] sm:$0xff]
    %v241 = vld [vmem:[%s4 + $0x44] sm:$0xf]
    %v242 = vld [vmem:[%s4 + $0x48] sm:$0xff]
    %v243 = vld [vmem:[%s4 + $0x50] sm:$0xf]
    %v244 = vld [vmem:[%s4 + $0x54] sm:$0xff]
    %v245 = vld [vmem:[%s4 + $0x5c] sm:$0xf]
    %v246 = vld [vmem:[%s4 + $0x60] sm:$0xff]
    %v247 = vld [vmem:[%s4 + $0x68] sm:$0xf]
    %v248 = vld [vmem:[%s4 + $0x6c] sm:$0xff]
    %v249 = vld [vmem:[%s4 + $0x74] sm:$0xf]
    %v250 = vld [vmem:[%s4 + $0x78] sm:$0xff]
    %v251 = vld [vmem:[%s4 + $0x80] sm:$0xf]
    %v252 = vld [vmem:[%s4 + $0x84] sm:$0xff]
    %v253 = vld [vmem:[%s4 + $0x8c] sm:$0xf]
    %v254 = vld [vmem:[%s4 + $0x90] sm:$0xff]
    %v255 = vld [vmem:[%s4 + $0x98] sm:$0xf]
    %v256 = vld [vmem:[%s4 + $0x9c] sm:$0xff]
    %v257 = vld [vmem:[%s4 + $0xa4] sm:$0xf]
    %v258 = vld [vmem:[%s4 + $0xa8] sm:$0xff]
    %v259 = vld [vmem:[%s4 + $0xb0] sm:$0xf]
    %v260 = vld [vmem:[%s4 + $0xb4] sm:$0xff]
    %v261 = vld [vmem:[%s4 + $0xbc] sm:$0xf]
    %v262 = vld [vmem:[%s6] sm:$0x7]
    %v264 = vlaneseq
    %v265 = vshrl.u32 %v264, 7
    %v266 = vsub.s32 0, %v265
    %v267 = vrot.slane %v262, %v266
    %v268 = vlaneseq
    %v269 = vshrl.u32 %v268, 7
    %v270 = vsub.s32 1, %v269
    %v271 = vrot.slane %v262, %v270
    %v272 = vlaneseq
    %v273 = vshrl.u32 %v272, 7
    %v274 = vsub.s32 2, %v273
    %v275 = vrot.slane %v262, %v274
    %v311 = vunpack.c.l.b16 %v230
    %v312 = vunpack.c.h.b16 %v230
    %v313 = vunpack.c.l.b16 %v231
    %v314 = vunpack.c.l.b16 %v232
    %v315 = vunpack.c.h.b16 %v232
    %v316 = vunpack.c.l.b16 %v233
    %v317 = vunpack.c.l.b16 %v234
    %v318 = vunpack.c.h.b16 %v234
    %v319 = vunpack.c.l.b16 %v235
    %v320 = vunpack.c.l.b16 %v236
    %v321 = vunpack.c.h.b16 %v236
    %v322 = vunpack.c.l.b16 %v237
    %v323 = vunpack.c.l.b16 %v238
    %v324 = vunpack.c.h.b16 %v238
    %v325 = vunpack.c.l.b16 %v239
    %v326 = vunpack.c.l.b16 %v240
    %v327 = vunpack.c.h.b16 %v240
    %v328 = vunpack.c.l.b16 %v241
    %v329 = vunpack.c.l.b16 %v242
    %v330 = vunpack.c.h.b16 %v242
    %v331 = vunpack.c.l.b16 %v243
    %v332 = vunpack.c.l.b16 %v244
    %v333 = vunpack.c.h.b16 %v244
    %v334 = vunpack.c.l.b16 %v245
    %v335 = vunpack.c.l.b16 %v246
    %v336 = vunpack.c.h.b16 %v246
    %v337 = vunpack.c.l.b16 %v247
    %v338 = vunpack.c.l.b16 %v248
    %v339 = vunpack.c.h.b16 %v248
    %v340 = vunpack.c.l.b16 %v249
    %v341 = vunpack.c.l.b16 %v250
    %v342 = vunpack.c.h.b16 %v250
    %v343 = vunpack.c.l.b16 %v251
    %v344 = vunpack.c.l.b16 %v252
    %v345 = vunpack.c.h.b16 %v252
    %v346 = vunpack.c.l.b16 %v253
    %v347 = vunpack.c.l.b16 %v254
    %v348 = vunpack.c.h.b16 %v254
    %v349 = vunpack.c.l.b16 %v255
    %v350 = vunpack.c.l.b16 %v256
    %v351 = vunpack.c.h.b16 %v256
    %v352 = vunpack.c.l.b16 %v257
    %v353 = vunpack.c.l.b16 %v258
    %v354 = vunpack.c.h.b16 %v258
    %v355 = vunpack.c.l.b16 %v259
    %v356 = vunpack.c.l.b16 %v260
    %v357 = vunpack.c.h.b16 %v260
    %v358 = vunpack.c.l.b16 %v261
    %v359 = vpack.c.b16 %v314, %v311
    %v360 = vpack.c.b16 %v315, %v312
    %v361 = vpack.c.b16 %v316, %v313
    %v362 = vpack.c.b16 %v320, %v317
    %v363 = vpack.c.b16 %v321, %v318
    %v364 = vpack.c.b16 %v322, %v319
    %v365 = vpack.c.b16 %v326, %v323
    %v366 = vpack.c.b16 %v327, %v324
    %v367 = vpack.c.b16 %v328, %v325
    %v368 = vpack.c.b16 %v332, %v329
    %v369 = vpack.c.b16 %v333, %v330
    %v370 = vpack.c.b16 %v334, %v331
    %v371 = vpack.c.b16 %v338, %v335
    %v372 = vpack.c.b16 %v339, %v336
    %v373 = vpack.c.b16 %v340, %v337
    %v374 = vpack.c.b16 %v344, %v341
    %v375 = vpack.c.b16 %v345, %v342
    %v376 = vpack.c.b16 %v346, %v343
    %v377 = vpack.c.b16 %v350, %v347
    %v378 = vpack.c.b16 %v351, %v348
    %v379 = vpack.c.b16 %v352, %v349
    %v380 = vpack.c.b16 %v356, %v353
    %v381 = vpack.c.b16 %v357, %v354
    %v382 = vpack.c.b16 %v358, %v355
    %407 = vmatprep.subr.bf16.mxu0 %v381
    %408 = vmatpush1.bf16.msra.mxu0 %v380
    %409 = vmatprep.subr.bf16.mxu0 %v378
    %410 = vmatpush1.bf16.msra.mxu0 %v377
    %411 = vmatprep.subr.bf16.mxu0 %v375
    %412 = vmatpush1.bf16.msra.mxu0 %v374
    %413 = vmatprep.subr.bf16.mxu0 %v372
    %414 = vmatpush1.bf16.msra.mxu0 %v371
    %415 = vmatprep.subr.bf16.mxu0 %v369
    %416 = vmatpush1.bf16.msra.mxu0 %v368
    %417 = vmatprep.subr.bf16.mxu0 %v366
    %418 = vmatpush1.bf16.msra.mxu0 %v365
    %419 = vmatprep.subr.bf16.mxu0 %v363
    %420 = vmatpush1.bf16.msra.mxu0 %v362
    %421 = vmatprep.subr.bf16.mxu0 %v360
    %422 = vmatpush1.bf16.msra.mxu0 %v359
    %423 = vmatprep.subr.bf16.mxu0 0
    %424 = vmatpush2.bf16.msra.mxu0 0
    %425 = vmatprep.subr.bf16.mxu0 0
    %426 = vmatpush2.bf16.msra.mxu0 0
    %427 = vmatprep.subr.bf16.mxu0 0
    %428 = vmatpush2.bf16.msra.mxu0 0
    %429 = vmatprep.subr.bf16.mxu0 0
    %430 = vmatpush2.bf16.msra.mxu0 0
    %431 = vmatprep.subr.bf16.mxu0 0
    %432 = vmatpush2.bf16.msra.mxu0 0
    %433 = vmatprep.subr.bf16.mxu0 0
    %434 = vmatpush2.bf16.msra.mxu0 0
    %435 = vmatprep.subr.bf16.mxu0 0
    %436 = vmatpush2.bf16.msra.mxu0 0
    %437 = vmatprep.subr.bf16.mxu0 0
    %438 = vmatpush2.bf16.msra.mxu0 0
    %439 = vmatprep.mubr.bf16.mxu0 0
    %440 = vmatmul.mubr.bf16.gmra.mxu0 %v47
    %v441 = vpop.f32.mrf.mxu0
    %v442 = vadd.f32 %v267, %v441
    %v443 = vpop.f32.mrf.mxu0
    %v444 = vadd.f32 %v271, %v443
    %v445 = vpop.f32.mrf.mxu0
    %v446 = vpop.f32.mrf.mxu0
    %447 = vdwg.mxu0
    %448 = vmatprep.subr.bf16.mxu0 0
    %449 = vmatpush1.bf16.msra.mxu0 %v382
    %450 = vmatprep.subr.bf16.mxu0 0
    %451 = vmatpush1.bf16.msra.mxu0 %v379
    %452 = vmatprep.subr.bf16.mxu0 0
    %453 = vmatpush1.bf16.msra.mxu0 %v376
    %454 = vmatprep.subr.bf16.mxu0 0
    %455 = vmatpush1.bf16.msra.mxu0 %v373
    %456 = vmatprep.subr.bf16.mxu0 0
    %457 = vmatpush1.bf16.msra.mxu0 %v370
    %458 = vmatprep.subr.bf16.mxu0 0
    %459 = vmatpush1.bf16.msra.mxu0 %v367
    %460 = vmatprep.subr.bf16.mxu0 0
    %461 = vmatpush1.bf16.msra.mxu0 %v364
    %462 = vmatprep.subr.bf16.mxu0 0
    %463 = vmatpush1.bf16.msra.mxu0 %v361
    %464 = vmatprep.subr.bf16.mxu0 0
    %465 = vmatpush2.bf16.msra.mxu0 0
    %466 = vmatprep.subr.bf16.mxu0 0
    %467 = vmatpush2.bf16.msra.mxu0 0
    %468 = vmatprep.subr.bf16.mxu0 0
    %469 = vmatpush2.bf16.msra.mxu0 0
    %470 = vmatprep.subr.bf16.mxu0 0
    %471 = vmatpush2.bf16.msra.mxu0 0
    %472 = vmatprep.subr.bf16.mxu0 0
    %473 = vmatpush2.bf16.msra.mxu0 0
    %474 = vmatprep.subr.bf16.mxu0 0
    %475 = vmatpush2.bf16.msra.mxu0 0
    %476 = vmatprep.subr.bf16.mxu0 0
    %477 = vmatpush2.bf16.msra.mxu0 0
    %478 = vmatprep.subr.bf16.mxu0 0
    %479 = vmatpush2.bf16.msra.mxu0 0
    %480 = vmatprep.mubr.bf16.mxu0 0
    %481 = vmatmul.mubr.bf16.gmra.mxu0 %v47
    %v482 = vpop.f32.mrf.mxu0
    %v483 = vadd.f32 %v275, %v482
    %v484 = vpop.f32.mrf.mxu0
    %v485 = vpop.f32.mrf.mxu0
    %v486 = vpop.f32.mrf.mxu0
    %487 = vdwg.mxu0
    %v488 = vadd.f32 %v184, %v442
    %v489 = vxor.u32 %v488, 2147483648
    %v490 = vmul.f32 %v489, 1.442695
    %v491 = vpow.pop %v490
    %v492 = vadd.f32 %v491, 1.0
    %v493 = vrcp.pop %v492
    %v494 = vmul.f32 1.0, %v493
    %v495 = vadd.f32 %v186, %v444
    %v496 = vxor.u32 %v495, 2147483648
    %v497 = vmul.f32 %v496, 1.442695
    %v498 = vpow.pop %v497
    %v499 = vadd.f32 %v498, 1.0
    %v500 = vrcp.pop %v499
    %v501 = vmul.f32 1.0, %v500
    %v502 = vmul.f32 %v494, %v483
    %v503 = vadd.f32 %v225, %v502
    %v504 = vtanh.pop %v503
    %v505 = vsub.f32 1.0, %v501
    %v506 = vmul.f32 %v505, %v504
    %v507 = vmul.f32 %v501, %v46
    %v508 = vadd.f32 %v506, %v507
    %509 = vst [vmem:[#allocation2] sm:$0xff] %v508
    %v510 = vld [vmem:[%s2] sm:$0xf]
    %v511 = vld [vmem:[%s2 + $0x4] sm:$0xf]
    %v512 = vld [vmem:[%s2 + $0x8] sm:$0xf]
    %v513 = vld [vmem:[%s2 + $0xc] sm:$0xf]
    %v514 = vld [vmem:[%s2 + $0x10] sm:$0xf]
    %v515 = vld [vmem:[%s2 + $0x14] sm:$0xf]
    %v516 = vld [vmem:[%s2 + $0x18] sm:$0xf]
    %v517 = vld [vmem:[%s2 + $0x1c] sm:$0xf]
    %v518 = vld [vmem:[%s2 + $0x20] sm:$0xf]
    %v519 = vld [vmem:[%s2 + $0x24] sm:$0xf]
    %v520 = vld [vmem:[%s2 + $0x28] sm:$0xf]
    %v521 = vld [vmem:[%s2 + $0x2c] sm:$0xf]
    %v522 = vld [vmem:[%s2 + $0x30] sm:$0xf]
    %v523 = vld [vmem:[%s2 + $0x34] sm:$0xf]
    %v524 = vld [vmem:[%s2 + $0x38] sm:$0xf]
    %v525 = vld [vmem:[%s2 + $0x3c] sm:$0xf]
    %v526 = vld [vmem:[%s2 + $0x40] sm:$0xf]
    %v527 = vld [vmem:[%s2 + $0x44] sm:$0xf]
    %v528 = vld [vmem:[%s2 + $0x48] sm:$0xf]
    %v529 = vld [vmem:[%s2 + $0x4c] sm:$0xf]
    %v530 = vld [vmem:[%s2 + $0x50] sm:$0xf]
    %v531 = vld [vmem:[%s2 + $0x54] sm:$0xf]
    %v532 = vld [vmem:[%s2 + $0x58] sm:$0xf]
    %v533 = vld [vmem:[%s2 + $0x5c] sm:$0xf]
    %v534 = vld [vmem:[%s2 + $0x60] sm:$0xf]
    %v535 = vld [vmem:[%s2 + $0x64] sm:$0xf]
    %v536 = vld [vmem:[%s2 + $0x68] sm:$0xf]
    %v537 = vld [vmem:[%s2 + $0x6c] sm:$0xf]
    %v538 = vld [vmem:[%s2 + $0x70] sm:$0xf]
    %v539 = vld [vmem:[%s2 + $0x74] sm:$0xf]
    %v540 = vld [vmem:[%s2 + $0x78] sm:$0xf]
    %v541 = vld [vmem:[%s2 + $0x7c] sm:$0xf]
    %v542 = vld [vmem:[%s2 + $0x80] sm:$0xf]
    %v543 = vld [vmem:[%s2 + $0x84] sm:$0xf]
    %v544 = vld [vmem:[%s2 + $0x88] sm:$0xf]
    %v545 = vld [vmem:[%s2 + $0x8c] sm:$0xf]
    %v546 = vld [vmem:[%s2 + $0x90] sm:$0xf]
    %v547 = vld [vmem:[%s2 + $0x94] sm:$0xf]
    %v548 = vld [vmem:[%s2 + $0x98] sm:$0xf]
    %v549 = vld [vmem:[%s2 + $0x9c] sm:$0xf]
    %v550 = vld [vmem:[%s2 + $0xa0] sm:$0xf]
    %v551 = vld [vmem:[%s2 + $0xa4] sm:$0xf]
    %v552 = vld [vmem:[%s2 + $0xa8] sm:$0xf]
    %v553 = vld [vmem:[%s2 + $0xac] sm:$0xf]
    %v554 = vld [vmem:[%s2 + $0xb0] sm:$0xf]
    %v555 = vld [vmem:[%s2 + $0xb4] sm:$0xf]
    %v556 = vld [vmem:[%s2 + $0xb8] sm:$0xf]
    %v557 = vld [vmem:[%s2 + $0xbc] sm:$0xf]
    %v558 = vld [vmem:[%s2 + $0xc0] sm:$0xf]
    %v559 = vld [vmem:[%s2 + $0xc4] sm:$0xf]
    %v560 = vld [vmem:[%s2 + $0xc8] sm:$0xf]
    %v561 = vld [vmem:[%s2 + $0xcc] sm:$0xf]
    %v562 = vld [vmem:[%s2 + $0xd0] sm:$0xf]
    %v563 = vld [vmem:[%s2 + $0xd4] sm:$0xf]
    %v564 = vld [vmem:[%s2 + $0xd8] sm:$0xf]
    %v565 = vld [vmem:[%s2 + $0xdc] sm:$0xf]
    %v566 = vld [vmem:[%s2 + $0xe0] sm:$0xf]
    %v567 = vld [vmem:[%s2 + $0xe4] sm:$0xf]
    %v568 = vld [vmem:[%s2 + $0xe8] sm:$0xf]
    %v569 = vld [vmem:[%s2 + $0xec] sm:$0xf]
    %v570 = vld [vmem:[%s2 + $0xf0] sm:$0xf]
    %v571 = vld [vmem:[%s2 + $0xf4] sm:$0xf]
    %v572 = vld [vmem:[%s2 + $0xf8] sm:$0xf]
    %v573 = vld [vmem:[%s2 + $0xfc] sm:$0xf]
    %v574 = vld [vmem:[%s2 + $0x100] sm:$0xf]
    %v575 = vld [vmem:[%s2 + $0x104] sm:$0xf]
    %v576 = vld [vmem:[%s2 + $0x108] sm:$0xf]
    %v577 = vld [vmem:[%s2 + $0x10c] sm:$0xf]
    %v578 = vld [vmem:[%s2 + $0x110] sm:$0xf]
    %v579 = vld [vmem:[%s2 + $0x114] sm:$0xf]
    %v580 = vld [vmem:[%s2 + $0x118] sm:$0xf]
    %v581 = vld [vmem:[%s2 + $0x11c] sm:$0xf]
    %v582 = vld [vmem:[%s2 + $0x120] sm:$0xf]
    %v583 = vld [vmem:[%s2 + $0x124] sm:$0xf]
    %v584 = vld [vmem:[%s2 + $0x128] sm:$0xf]
    %v585 = vld [vmem:[%s2 + $0x12c] sm:$0xf]
    %v586 = vld [vmem:[%s2 + $0x130] sm:$0xf]
    %v587 = vld [vmem:[%s2 + $0x134] sm:$0xf]
    %v588 = vld [vmem:[%s2 + $0x138] sm:$0xf]
    %v589 = vld [vmem:[%s2 + $0x13c] sm:$0xf]
    %v590 = vld [vmem:[%s2 + $0x140] sm:$0xf]
    %v591 = vld [vmem:[%s2 + $0x144] sm:$0xf]
    %v592 = vld [vmem:[%s2 + $0x148] sm:$0xf]
    %v593 = vld [vmem:[%s2 + $0x14c] sm:$0xf]
    %v594 = vld [vmem:[%s2 + $0x150] sm:$0xf]
    %v595 = vld [vmem:[%s2 + $0x154] sm:$0xf]
    %v596 = vld [vmem:[%s2 + $0x158] sm:$0xf]
    %v597 = vld [vmem:[%s2 + $0x15c] sm:$0xf]
    %v598 = vld [vmem:[%s2 + $0x160] sm:$0xf]
    %v599 = vld [vmem:[%s2 + $0x164] sm:$0xf]
    %v600 = vld [vmem:[%s2 + $0x168] sm:$0xf]
    %v601 = vld [vmem:[%s2 + $0x16c] sm:$0xf]
    %v602 = vld [vmem:[%s2 + $0x170] sm:$0xf]
    %v603 = vld [vmem:[%s2 + $0x174] sm:$0xf]
    %v604 = vld [vmem:[%s2 + $0x178] sm:$0xf]
    %v605 = vld [vmem:[%s2 + $0x17c] sm:$0xf]
    %v606 = vld [vmem:[%s2 + $0x180] sm:$0xf]
    %v607 = vld [vmem:[%s2 + $0x184] sm:$0xf]
    %v608 = vld [vmem:[%s2 + $0x188] sm:$0xf]
    %v609 = vld [vmem:[%s2 + $0x18c] sm:$0xf]
    %v610 = vld [vmem:[%s2 + $0x190] sm:$0xf]
    %v611 = vld [vmem:[%s2 + $0x194] sm:$0xf]
    %v612 = vld [vmem:[%s2 + $0x198] sm:$0xf]
    %v613 = vld [vmem:[%s2 + $0x19c] sm:$0xf]
    %v614 = vld [vmem:[%s2 + $0x1a0] sm:$0xf]
    %v615 = vld [vmem:[%s2 + $0x1a4] sm:$0xf]
    %v616 = vld [vmem:[%s2 + $0x1a8] sm:$0xf]
    %v617 = vld [vmem:[%s2 + $0x1ac] sm:$0xf]
    %v618 = vld [vmem:[%s2 + $0x1b0] sm:$0xf]
    %v619 = vld [vmem:[%s2 + $0x1b4] sm:$0xf]
    %v620 = vld [vmem:[%s2 + $0x1b8] sm:$0xf]
    %v621 = vld [vmem:[%s2 + $0x1bc] sm:$0xf]
    %v622 = vld [vmem:[%s2 + $0x1c0] sm:$0xf]
    %v623 = vld [vmem:[%s2 + $0x1c4] sm:$0xf]
    %v624 = vld [vmem:[%s2 + $0x1c8] sm:$0xf]
    %v625 = vld [vmem:[%s2 + $0x1cc] sm:$0xf]
    %v626 = vld [vmem:[%s2 + $0x1d0] sm:$0xf]
    %v627 = vld [vmem:[%s2 + $0x1d4] sm:$0xf]
    %v628 = vld [vmem:[%s2 + $0x1d8] sm:$0xf]
    %v629 = vld [vmem:[%s2 + $0x1dc] sm:$0xf]
    %v630 = vld [vmem:[%s2 + $0x1e0] sm:$0xf]
    %v631 = vld [vmem:[%s2 + $0x1e4] sm:$0xf]
    %v632 = vld [vmem:[%s2 + $0x1e8] sm:$0xf]
    %v633 = vld [vmem:[%s2 + $0x1ec] sm:$0xf]
    %v634 = vld [vmem:[%s2 + $0x1f0] sm:$0xf]
    %v635 = vld [vmem:[%s2 + $0x1f4] sm:$0xf]
    %v636 = vld [vmem:[%s2 + $0x1f8] sm:$0xf]
    %v637 = vld [vmem:[%s2 + $0x1fc] sm:$0xf]
    %v638 = vunpack.c.l.bf16 %v510
    %v639 = vunpack.c.l.bf16 %v511
    %v640 = vunpack.c.l.bf16 %v512
    %v641 = vunpack.c.l.bf16 %v513
    %v642 = vunpack.c.l.bf16 %v514
    %v643 = vunpack.c.l.bf16 %v515
    %v644 = vunpack.c.l.bf16 %v516
    %v645 = vunpack.c.l.bf16 %v517
    %v646 = vunpack.c.l.bf16 %v518
    %v647 = vunpack.c.l.bf16 %v519
    %v648 = vunpack.c.l.bf16 %v520
    %v649 = vunpack.c.l.bf16 %v521
    %v650 = vunpack.c.l.bf16 %v522
    %v651 = vunpack.c.l.bf16 %v523
    %v652 = vunpack.c.l.bf16 %v524
    %v653 = vunpack.c.l.bf16 %v525
    %v654 = vunpack.c.l.bf16 %v526
    %v655 = vunpack.c.l.bf16 %v527
    %v656 = vunpack.c.l.bf16 %v528
    %v657 = vunpack.c.l.bf16 %v529
    %v658 = vunpack.c.l.bf16 %v530
    %v659 = vunpack.c.l.bf16 %v531
    %v660 = vunpack.c.l.bf16 %v532
    %v661 = vunpack.c.l.bf16 %v533
    %v662 = vunpack.c.l.bf16 %v534
    %v663 = vunpack.c.l.bf16 %v535
    %v664 = vunpack.c.l.bf16 %v536
    %v665 = vunpack.c.l.bf16 %v537
    %v666 = vunpack.c.l.bf16 %v538
    %v667 = vunpack.c.l.bf16 %v539
    %v668 = vunpack.c.l.bf16 %v540
    %v669 = vunpack.c.l.bf16 %v541
    %v670 = vunpack.c.l.bf16 %v542
    %v671 = vunpack.c.l.bf16 %v543
    %v672 = vunpack.c.l.bf16 %v544
    %v673 = vunpack.c.l.bf16 %v545
    %v674 = vunpack.c.l.bf16 %v546
    %v675 = vunpack.c.l.bf16 %v547
    %v676 = vunpack.c.l.bf16 %v548
    %v677 = vunpack.c.l.bf16 %v549
    %v678 = vunpack.c.l.bf16 %v550
    %v679 = vunpack.c.l.bf16 %v551
    %v680 = vunpack.c.l.bf16 %v552
    %v681 = vunpack.c.l.bf16 %v553
    %v682 = vunpack.c.l.bf16 %v554
    %v683 = vunpack.c.l.bf16 %v555
    %v684 = vunpack.c.l.bf16 %v556
    %v685 = vunpack.c.l.bf16 %v557
    %v686 = vunpack.c.l.bf16 %v558
    %v687 = vunpack.c.l.bf16 %v559
    %v688 = vunpack.c.l.bf16 %v560
    %v689 = vunpack.c.l.bf16 %v561
    %v690 = vunpack.c.l.bf16 %v562
    %v691 = vunpack.c.l.bf16 %v563
    %v692 = vunpack.c.l.bf16 %v564
    %v693 = vunpack.c.l.bf16 %v565
    %v694 = vunpack.c.l.bf16 %v566
    %v695 = vunpack.c.l.bf16 %v567
    %v696 = vunpack.c.l.bf16 %v568
    %v697 = vunpack.c.l.bf16 %v569
    %v698 = vunpack.c.l.bf16 %v570
    %v699 = vunpack.c.l.bf16 %v571
    %v700 = vunpack.c.l.bf16 %v572
    %v701 = vunpack.c.l.bf16 %v573
    %v702 = vunpack.c.l.bf16 %v574
    %v703 = vunpack.c.l.bf16 %v575
    %v704 = vunpack.c.l.bf16 %v576
    %v705 = vunpack.c.l.bf16 %v577
    %v706 = vunpack.c.l.bf16 %v578
    %v707 = vunpack.c.l.bf16 %v579
    %v708 = vunpack.c.l.bf16 %v580
    %v709 = vunpack.c.l.bf16 %v581
    %v710 = vunpack.c.l.bf16 %v582
    %v711 = vunpack.c.l.bf16 %v583
    %v712 = vunpack.c.l.bf16 %v584
    %v713 = vunpack.c.l.bf16 %v585
    %v714 = vunpack.c.l.bf16 %v586
    %v715 = vunpack.c.l.bf16 %v587
    %v716 = vunpack.c.l.bf16 %v588
    %v717 = vunpack.c.l.bf16 %v589
    %v718 = vunpack.c.l.bf16 %v590
    %v719 = vunpack.c.l.bf16 %v591
    %v720 = vunpack.c.l.bf16 %v592
    %v721 = vunpack.c.l.bf16 %v593
    %v722 = vunpack.c.l.bf16 %v594
    %v723 = vunpack.c.l.bf16 %v595
    %v724 = vunpack.c.l.bf16 %v596
    %v725 = vunpack.c.l.bf16 %v597
    %v726 = vunpack.c.l.bf16 %v598
    %v727 = vunpack.c.l.bf16 %v599
    %v728 = vunpack.c.l.bf16 %v600
    %v729 = vunpack.c.l.bf16 %v601
    %v730 = vunpack.c.l.bf16 %v602
    %v731 = vunpack.c.l.bf16 %v603
    %v732 = vunpack.c.l.bf16 %v604
    %v733 = vunpack.c.l.bf16 %v605
    %v734 = vunpack.c.l.bf16 %v606
    %v735 = vunpack.c.l.bf16 %v607
    %v736 = vunpack.c.l.bf16 %v608
    %v737 = vunpack.c.l.bf16 %v609
    %v738 = vunpack.c.l.bf16 %v610
    %v739 = vunpack.c.l.bf16 %v611
    %v740 = vunpack.c.l.bf16 %v612
    %v741 = vunpack.c.l.bf16 %v613
    %v742 = vunpack.c.l.bf16 %v614
    %v743 = vunpack.c.l.bf16 %v615
    %v744 = vunpack.c.l.bf16 %v616
    %v745 = vunpack.c.l.bf16 %v617
    %v746 = vunpack.c.l.bf16 %v618
    %v747 = vunpack.c.l.bf16 %v619
    %v748 = vunpack.c.l.bf16 %v620
    %v749 = vunpack.c.l.bf16 %v621
    %v750 = vunpack.c.l.bf16 %v622
    %v751 = vunpack.c.l.bf16 %v623
    %v752 = vunpack.c.l.bf16 %v624
    %v753 = vunpack.c.l.bf16 %v625
    %v754 = vunpack.c.l.bf16 %v626
    %v755 = vunpack.c.l.bf16 %v627
    %v756 = vunpack.c.l.bf16 %v628
    %v757 = vunpack.c.l.bf16 %v629
    %v758 = vunpack.c.l.bf16 %v630
    %v759 = vunpack.c.l.bf16 %v631
    %v760 = vunpack.c.l.bf16 %v632
    %v761 = vunpack.c.l.bf16 %v633
    %v762 = vunpack.c.l.bf16 %v634
    %v763 = vunpack.c.l.bf16 %v635
    %v764 = vunpack.c.l.bf16 %v636
    %v765 = vunpack.c.l.bf16 %v637
    %v766 = vpack.c.bf16 %v508, %v508
    %v767 = vld [vmem:[%s7] sm:$0xf]
    %v768 = vld [vmem:[%s7 + $0x4] sm:$0xf]
    %v769 = vld [vmem:[%s7 + $0x8] sm:$0xf]
    %v770 = vld [vmem:[%s7 + $0xc] sm:$0xf]
    %v771 = vld [vmem:[%s7 + $0x10] sm:$0xf]
    %v772 = vld [vmem:[%s7 + $0x14] sm:$0xf]
    %v773 = vld [vmem:[%s7 + $0x18] sm:$0xf]
    %v774 = vld [vmem:[%s7 + $0x1c] sm:$0xf]
    %v775 = vld [vmem:[%s7 + $0x20] sm:$0xf]
    %v776 = vld [vmem:[%s7 + $0x24] sm:$0xf]
    %v777 = vld [vmem:[%s7 + $0x28] sm:$0xf]
    %v778 = vld [vmem:[%s7 + $0x2c] sm:$0xf]
    %v779 = vld [vmem:[%s7 + $0x30] sm:$0xf]
    %v780 = vld [vmem:[%s7 + $0x34] sm:$0xf]
    %v781 = vld [vmem:[%s7 + $0x38] sm:$0xf]
    %v782 = vld [vmem:[%s7 + $0x3c] sm:$0xf]
    %v799 = vunpack.c.l.b16 %v767
    %v800 = vunpack.c.l.b16 %v768
    %v801 = vunpack.c.l.b16 %v769
    %v802 = vunpack.c.l.b16 %v770
    %v803 = vunpack.c.l.b16 %v771
    %v804 = vunpack.c.l.b16 %v772
    %v805 = vunpack.c.l.b16 %v773
    %v806 = vunpack.c.l.b16 %v774
    %v807 = vunpack.c.l.b16 %v775
    %v808 = vunpack.c.l.b16 %v776
    %v809 = vunpack.c.l.b16 %v777
    %v810 = vunpack.c.l.b16 %v778
    %v811 = vunpack.c.l.b16 %v779
    %v812 = vunpack.c.l.b16 %v780
    %v813 = vunpack.c.l.b16 %v781
    %v814 = vunpack.c.l.b16 %v782
    %v815 = vpack.c.b16 %v800, %v799
    %v816 = vpack.c.b16 %v802, %v801
    %v817 = vpack.c.b16 %v804, %v803
    %v818 = vpack.c.b16 %v806, %v805
    %v819 = vpack.c.b16 %v808, %v807
    %v820 = vpack.c.b16 %v810, %v809
    %v821 = vpack.c.b16 %v812, %v811
    %v822 = vpack.c.b16 %v814, %v813
    %831 = vmatprep.subr.bf16.mxu0 0
    %832 = vmatpush1.bf16.msra.mxu0 %v822
    %833 = vmatprep.subr.bf16.mxu0 0
    %834 = vmatpush1.bf16.msra.mxu0 %v821
    %835 = vmatprep.subr.bf16.mxu0 0
    %836 = vmatpush1.bf16.msra.mxu0 %v820
    %837 = vmatprep.subr.bf16.mxu0 0
    %838 = vmatpush1.bf16.msra.mxu0 %v819
    %839 = vmatprep.subr.bf16.mxu0 0
    %840 = vmatpush1.bf16.msra.mxu0 %v818
    %841 = vmatprep.subr.bf16.mxu0 0
    %842 = vmatpush1.bf16.msra.mxu0 %v817
    %843 = vmatprep.subr.bf16.mxu0 0
    %844 = vmatpush1.bf16.msra.mxu0 %v816
    %845 = vmatprep.subr.bf16.mxu0 0
    %846 = vmatpush1.bf16.msra.mxu0 %v815
    %847 = vmatprep.subr.bf16.mxu0 0
    %848 = vmatpush2.bf16.msra.mxu0 0
    %849 = vmatprep.subr.bf16.mxu0 0
    %850 = vmatpush2.bf16.msra.mxu0 0
    %851 = vmatprep.subr.bf16.mxu0 0
    %852 = vmatpush2.bf16.msra.mxu0 0
    %853 = vmatprep.subr.bf16.mxu0 0
    %854 = vmatpush2.bf16.msra.mxu0 0
    %855 = vmatprep.subr.bf16.mxu0 0
    %856 = vmatpush2.bf16.msra.mxu0 0
    %857 = vmatprep.subr.bf16.mxu0 0
    %858 = vmatpush2.bf16.msra.mxu0 0
    %859 = vmatprep.subr.bf16.mxu0 0
    %860 = vmatpush2.bf16.msra.mxu0 0
    %861 = vmatprep.subr.bf16.mxu0 0
    %862 = vmatpush2.bf16.msra.mxu0 0
    %863 = vmatprep.mubr.bf16.mxu0 0
    %864 = vmatmul.mubr.bf16.gmra.mxu0 %v766
    %v865 = vpop.f32.mrf.mxu0
    %v866 = vadd.f32 0.0, %v865
    %v867 = vpop.f32.mrf.mxu0
    %v868 = vpop.f32.mrf.mxu0
    %v869 = vpop.f32.mrf.mxu0
    %870 = vdwg.mxu0
    %v872 = vcombine.high %v866, %v866
    %v874 = vunpack.c.l.s4 1966171168
    %v875 = vunpack.c.0.s8 %v874
    %v876 = vlaneseq
    %v877 = vshrl.u32 %v876, 7
    %v878 = vsub.s32 %v875, %v877
    %v879 = vrot.slane %v866, %v878
    %v881 = vunpack.c.l.s4 1966171168
    %v882 = vunpack.c.0.s8 %v881
    %v883 = vlaneseq
    %v884 = vshrl.u32 %v883, 7
    %v885 = vsub.s32 %v882, %v884
    %v886 = vrot.slane %v872, %v885
    %v887 = vcombine.high %v879, %v879
    %v888 = vcombine.high %v886, %v886
    %v890 = vunpack.c.l.s4 1966171168
    %v891 = vunpack.c.0.s8 %v890
    %v892 = vlaneseq
    %v893 = vshrl.u32 %v892, 7
    %v894 = vsub.s32 %v891, %v893
    %v895 = vrot.slane %v879, %v894
    %v897 = vunpack.c.l.s4 1966171168
    %v898 = vunpack.c.0.s8 %v897
    %v899 = vlaneseq
    %v900 = vshrl.u32 %v899, 7
    %v901 = vsub.s32 %v898, %v900
    %v902 = vrot.slane %v886, %v901
    %v904 = vunpack.c.l.s4 1966171168
    %v905 = vunpack.c.0.s8 %v904
    %v906 = vlaneseq
    %v907 = vshrl.u32 %v906, 7
    %v908 = vsub.s32 %v905, %v907
    %v909 = vrot.slane %v887, %v908
    %v911 = vunpack.c.l.s4 1966171168
    %v912 = vunpack.c.0.s8 %v911
    %v913 = vlaneseq
    %v914 = vshrl.u32 %v913, 7
    %v915 = vsub.s32 %v912, %v914
    %v916 = vrot.slane %v888, %v915
    %v917 = vcombine.high %v895, %v895
    %v918 = vcombine.high %v902, %v902
    %v919 = vcombine.high %v909, %v909
    %v920 = vcombine.high %v916, %v916
    %v921 = vlaneseq
    %v922 = vshrl.u32 %v921, 7
    %v923 = vsub.s32 0, %v922
    %v924 = vrot.slane %v895, %v923
    %v925 = vlaneseq
    %v926 = vshrl.u32 %v925, 7
    %v927 = vsub.s32 0, %v926
    %v928 = vrot.slane %v909, %v927
    %v929 = vlaneseq
    %v930 = vshrl.u32 %v929, 7
    %v931 = vsub.s32 0, %v930
    %v932 = vrot.slane %v917, %v931
    %v933 = vlaneseq
    %v934 = vshrl.u32 %v933, 7
    %v935 = vsub.s32 0, %v934
    %v936 = vrot.slane %v919, %v935
    %v937 = vlaneseq
    %v938 = vshrl.u32 %v937, 7
    %v939 = vsub.s32 0, %v938
    %v940 = vrot.slane %v902, %v939
    %v941 = vlaneseq
    %v942 = vshrl.u32 %v941, 7
    %v943 = vsub.s32 0, %v942
    %v944 = vrot.slane %v916, %v943
    %v945 = vlaneseq
    %v946 = vshrl.u32 %v945, 7
    %v947 = vsub.s32 0, %v946
    %v948 = vrot.slane %v918, %v947
    %v949 = vlaneseq
    %v950 = vshrl.u32 %v949, 7
    %v951 = vsub.s32 0, %v950
    %v952 = vrot.slane %v920, %v951
    %v961 = vmul.f32 %v924, %v638
    %v962 = vmul.f32 %v924, %v639
    %v963 = vmul.f32 %v924, %v640
    %v964 = vmul.f32 %v924, %v641
    %v965 = vmul.f32 %v924, %v642
    %v966 = vmul.f32 %v924, %v643
    %v967 = vmul.f32 %v924, %v644
    %v968 = vmul.f32 %v924, %v645
    %v969 = vmul.f32 %v924, %v646
    %v970 = vmul.f32 %v924, %v647
    %v971 = vmul.f32 %v924, %v648
    %v972 = vmul.f32 %v924, %v649
    %v973 = vmul.f32 %v924, %v650
    %v974 = vmul.f32 %v924, %v651
    %v975 = vmul.f32 %v924, %v652
    %v976 = vmul.f32 %v924, %v653
    %v977 = vmul.f32 %v928, %v654
    %v978 = vmul.f32 %v928, %v655
    %v979 = vmul.f32 %v928, %v656
    %v980 = vmul.f32 %v928, %v657
    %v981 = vmul.f32 %v928, %v658
    %v982 = vmul.f32 %v928, %v659
    %v983 = vmul.f32 %v928, %v660
    %v984 = vmul.f32 %v928, %v661
    %v985 = vmul.f32 %v928, %v662
    %v986 = vmul.f32 %v928, %v663
    %v987 = vmul.f32 %v928, %v664
    %v988 = vmul.f32 %v928, %v665
    %v989 = vmul.f32 %v928, %v666
    %v990 = vmul.f32 %v928, %v667
    %v991 = vmul.f32 %v928, %v668
    %v992 = vmul.f32 %v928, %v669
    %v993 = vmul.f32 %v932, %v670
    %v994 = vmul.f32 %v932, %v671
    %v995 = vmul.f32 %v932, %v672
    %v996 = vmul.f32 %v932, %v673
    %v997 = vmul.f32 %v932, %v674
    %v998 = vmul.f32 %v932, %v675
    %v999 = vmul.f32 %v932, %v676
    %v1000 = vmul.f32 %v932, %v677
    %v1001 = vmul.f32 %v932, %v678
    %v1002 = vmul.f32 %v932, %v679
    %v1003 = vmul.f32 %v932, %v680
    %v1004 = vmul.f32 %v932, %v681
    %v1005 = vmul.f32 %v932, %v682
    %v1006 = vmul.f32 %v932, %v683
    %v1007 = vmul.f32 %v932, %v684
    %v1008 = vmul.f32 %v932, %v685
    %v1009 = vmul.f32 %v936, %v686
    %v1010 = vmul.f32 %v936, %v687
    %v1011 = vmul.f32 %v936, %v688
    %v1012 = vmul.f32 %v936, %v689
    %v1013 = vmul.f32 %v936, %v690
    %v1014 = vmul.f32 %v936, %v691
    %v1015 = vmul.f32 %v936, %v692
    %v1016 = vmul.f32 %v936, %v693
    %v1017 = vmul.f32 %v936, %v694
    %v1018 = vmul.f32 %v936, %v695
    %v1019 = vmul.f32 %v936, %v696
    %v1020 = vmul.f32 %v936, %v697
    %v1021 = vmul.f32 %v936, %v698
    %v1022 = vmul.f32 %v936, %v699
    %v1023 = vmul.f32 %v936, %v700
    %v1024 = vmul.f32 %v936, %v701
    %v1025 = vmul.f32 %v940, %v702
    %v1026 = vmul.f32 %v940, %v703
    %v1027 = vmul.f32 %v940, %v704
    %v1028 = vmul.f32 %v940, %v705
    %v1029 = vmul.f32 %v940, %v706
    %v1030 = vmul.f32 %v940, %v707
    %v1031 = vmul.f32 %v940, %v708
    %v1032 = vmul.f32 %v940, %v709
    %v1033 = vmul.f32 %v940, %v710
    %v1034 = vmul.f32 %v940, %v711
    %v1035 = vmul.f32 %v940, %v712
    %v1036 = vmul.f32 %v940, %v713
    %v1037 = vmul.f32 %v940, %v714
    %v1038 = vmul.f32 %v940, %v715
    %v1039 = vmul.f32 %v940, %v716
    %v1040 = vmul.f32 %v940, %v717
    %v1041 = vmul.f32 %v944, %v718
    %v1042 = vmul.f32 %v944, %v719
    %v1043 = vmul.f32 %v944, %v720
    %v1044 = vmul.f32 %v944, %v721
    %v1045 = vmul.f32 %v944, %v722
    %v1046 = vmul.f32 %v944, %v723
    %v1047 = vmul.f32 %v944, %v724
    %v1048 = vmul.f32 %v944, %v725
    %v1049 = vmul.f32 %v944, %v726
    %v1050 = vmul.f32 %v944, %v727
    %v1051 = vmul.f32 %v944, %v728
    %v1052 = vmul.f32 %v944, %v729
    %v1053 = vmul.f32 %v944, %v730
    %v1054 = vmul.f32 %v944, %v731
    %v1055 = vmul.f32 %v944, %v732
    %v1056 = vmul.f32 %v944, %v733
    %v1057 = vmul.f32 %v948, %v734
    %v1058 = vmul.f32 %v948, %v735
    %v1059 = vmul.f32 %v948, %v736
    %v1060 = vmul.f32 %v948, %v737
    %v1061 = vmul.f32 %v948, %v738
    %v1062 = vmul.f32 %v948, %v739
    %v1063 = vmul.f32 %v948, %v740
    %v1064 = vmul.f32 %v948, %v741
    %v1065 = vmul.f32 %v948, %v742
    %v1066 = vmul.f32 %v948, %v743
    %v1067 = vmul.f32 %v948, %v744
    %v1068 = vmul.f32 %v948, %v745
    %v1069 = vmul.f32 %v948, %v746
    %v1070 = vmul.f32 %v948, %v747
    %v1071 = vmul.f32 %v948, %v748
    %v1072 = vmul.f32 %v948, %v749
    %v1073 = vmul.f32 %v952, %v750
    %v1074 = vmul.f32 %v952, %v751
    %v1075 = vmul.f32 %v952, %v752
    %v1076 = vmul.f32 %v952, %v753
    %v1077 = vmul.f32 %v952, %v754
    %v1078 = vmul.f32 %v952, %v755
    %v1079 = vmul.f32 %v952, %v756
    %v1080 = vmul.f32 %v952, %v757
    %v1081 = vmul.f32 %v952, %v758
    %v1082 = vmul.f32 %v952, %v759
    %v1083 = vmul.f32 %v952, %v760
    %v1084 = vmul.f32 %v952, %v761
    %v1085 = vmul.f32 %v952, %v762
    %v1086 = vmul.f32 %v952, %v763
    %v1087 = vmul.f32 %v952, %v764
    %v1088 = vmul.f32 %v952, %v765
    %1089 = vadd.xlane.f32.xlu0 %v961
    %v1090 = vpop.xlane.xlu0 %1089
    %1091 = vadd.xlane.f32.xlu0 %v962
    %v1092 = vpop.xlane.xlu0 %1091
    %1093 = vadd.xlane.f32.xlu0 %v963
    %v1094 = vpop.xlane.xlu0 %1093
    %1095 = vadd.xlane.f32.xlu0 %v964
    %v1096 = vpop.xlane.xlu0 %1095
    %1097 = vadd.xlane.f32.xlu0 %v965
    %v1098 = vpop.xlane.xlu0 %1097
    %1099 = vadd.xlane.f32.xlu0 %v966
    %v1100 = vpop.xlane.xlu0 %1099
    %1101 = vadd.xlane.f32.xlu0 %v967
    %v1102 = vpop.xlane.xlu0 %1101
    %1103 = vadd.xlane.f32.xlu0 %v968
    %v1104 = vpop.xlane.xlu0 %1103
    %1105 = vadd.xlane.f32.xlu0 %v969
    %v1106 = vpop.xlane.xlu0 %1105
    %1107 = vadd.xlane.f32.xlu0 %v970
    %v1108 = vpop.xlane.xlu0 %1107
    %1109 = vadd.xlane.f32.xlu0 %v971
    %v1110 = vpop.xlane.xlu0 %1109
    %1111 = vadd.xlane.f32.xlu0 %v972
    %v1112 = vpop.xlane.xlu0 %1111
    %1113 = vadd.xlane.f32.xlu0 %v973
    %v1114 = vpop.xlane.xlu0 %1113
    %1115 = vadd.xlane.f32.xlu0 %v974
    %v1116 = vpop.xlane.xlu0 %1115
    %1117 = vadd.xlane.f32.xlu0 %v975
    %v1118 = vpop.xlane.xlu0 %1117
    %1119 = vadd.xlane.f32.xlu0 %v976
    %v1120 = vpop.xlane.xlu0 %1119
    %1121 = vadd.xlane.f32.xlu0 %v977
    %v1122 = vpop.xlane.xlu0 %1121
    %1123 = vadd.xlane.f32.xlu0 %v978
    %v1124 = vpop.xlane.xlu0 %1123
    %1125 = vadd.xlane.f32.xlu0 %v979
    %v1126 = vpop.xlane.xlu0 %1125
    %1127 = vadd.xlane.f32.xlu0 %v980
    %v1128 = vpop.xlane.xlu0 %1127
    %1129 = vadd.xlane.f32.xlu0 %v981
    %v1130 = vpop.xlane.xlu0 %1129
    %1131 = vadd.xlane.f32.xlu0 %v982
    %v1132 = vpop.xlane.xlu0 %1131
    %1133 = vadd.xlane.f32.xlu0 %v983
    %v1134 = vpop.xlane.xlu0 %1133
    %1135 = vadd.xlane.f32.xlu0 %v984
    %v1136 = vpop.xlane.xlu0 %1135
    %1137 = vadd.xlane.f32.xlu0 %v985
    %v1138 = vpop.xlane.xlu0 %1137
    %1139 = vadd.xlane.f32.xlu0 %v986
    %v1140 = vpop.xlane.xlu0 %1139
    %1141 = vadd.xlane.f32.xlu0 %v987
    %v1142 = vpop.xlane.xlu0 %1141
    %1143 = vadd.xlane.f32.xlu0 %v988
    %v1144 = vpop.xlane.xlu0 %1143
    %1145 = vadd.xlane.f32.xlu0 %v989
    %v1146 = vpop.xlane.xlu0 %1145
    %1147 = vadd.xlane.f32.xlu0 %v990
    %v1148 = vpop.xlane.xlu0 %1147
    %1149 = vadd.xlane.f32.xlu0 %v991
    %v1150 = vpop.xlane.xlu0 %1149
    %1151 = vadd.xlane.f32.xlu0 %v992
    %v1152 = vpop.xlane.xlu0 %1151
    %1153 = vadd.xlane.f32.xlu0 %v993
    %v1154 = vpop.xlane.xlu0 %1153
    %1155 = vadd.xlane.f32.xlu0 %v994
    %v1156 = vpop.xlane.xlu0 %1155
    %1157 = vadd.xlane.f32.xlu0 %v995
    %v1158 = vpop.xlane.xlu0 %1157
    %1159 = vadd.xlane.f32.xlu0 %v996
    %v1160 = vpop.xlane.xlu0 %1159
    %1161 = vadd.xlane.f32.xlu0 %v997
    %v1162 = vpop.xlane.xlu0 %1161
    %1163 = vadd.xlane.f32.xlu0 %v998
    %v1164 = vpop.xlane.xlu0 %1163
    %1165 = vadd.xlane.f32.xlu0 %v999
    %v1166 = vpop.xlane.xlu0 %1165
    %1167 = vadd.xlane.f32.xlu0 %v1000
    %v1168 = vpop.xlane.xlu0 %1167
    %1169 = vadd.xlane.f32.xlu0 %v1001
    %v1170 = vpop.xlane.xlu0 %1169
    %1171 = vadd.xlane.f32.xlu0 %v1002
    %v1172 = vpop.xlane.xlu0 %1171
    %1173 = vadd.xlane.f32.xlu0 %v1003
    %v1174 = vpop.xlane.xlu0 %1173
    %1175 = vadd.xlane.f32.xlu0 %v1004
    %v1176 = vpop.xlane.xlu0 %1175
    %1177 = vadd.xlane.f32.xlu0 %v1005
    %v1178 = vpop.xlane.xlu0 %1177
    %1179 = vadd.xlane.f32.xlu0 %v1006
    %v1180 = vpop.xlane.xlu0 %1179
    %1181 = vadd.xlane.f32.xlu0 %v1007
    %v1182 = vpop.xlane.xlu0 %1181
    %1183 = vadd.xlane.f32.xlu0 %v1008
    %v1184 = vpop.xlane.xlu0 %1183
    %1185 = vadd.xlane.f32.xlu0 %v1009
    %v1186 = vpop.xlane.xlu0 %1185
    %1187 = vadd.xlane.f32.xlu0 %v1010
    %v1188 = vpop.xlane.xlu0 %1187
    %1189 = vadd.xlane.f32.xlu0 %v1011
    %v1190 = vpop.xlane.xlu0 %1189
    %1191 = vadd.xlane.f32.xlu0 %v1012
    %v1192 = vpop.xlane.xlu0 %1191
    %1193 = vadd.xlane.f32.xlu0 %v1013
    %v1194 = vpop.xlane.xlu0 %1193
    %1195 = vadd.xlane.f32.xlu0 %v1014
    %v1196 = vpop.xlane.xlu0 %1195
    %1197 = vadd.xlane.f32.xlu0 %v1015
    %v1198 = vpop.xlane.xlu0 %1197
    %1199 = vadd.xlane.f32.xlu0 %v1016
    %v1200 = vpop.xlane.xlu0 %1199
    %1201 = vadd.xlane.f32.xlu0 %v1017
    %v1202 = vpop.xlane.xlu0 %1201
    %1203 = vadd.xlane.f32.xlu0 %v1018
    %v1204 = vpop.xlane.xlu0 %1203
    %1205 = vadd.xlane.f32.xlu0 %v1019
    %v1206 = vpop.xlane.xlu0 %1205
    %1207 = vadd.xlane.f32.xlu0 %v1020
    %v1208 = vpop.xlane.xlu0 %1207
    %1209 = vadd.xlane.f32.xlu0 %v1021
    %v1210 = vpop.xlane.xlu0 %1209
    %1211 = vadd.xlane.f32.xlu0 %v1022
    %v1212 = vpop.xlane.xlu0 %1211
    %1213 = vadd.xlane.f32.xlu0 %v1023
    %v1214 = vpop.xlane.xlu0 %1213
    %1215 = vadd.xlane.f32.xlu0 %v1024
    %v1216 = vpop.xlane.xlu0 %1215
    %1217 = vadd.xlane.f32.xlu0 %v1025
    %v1218 = vpop.xlane.xlu0 %1217
    %1219 = vadd.xlane.f32.xlu0 %v1026
    %v1220 = vpop.xlane.xlu0 %1219
    %1221 = vadd.xlane.f32.xlu0 %v1027
    %v1222 = vpop.xlane.xlu0 %1221
    %1223 = vadd.xlane.f32.xlu0 %v1028
    %v1224 = vpop.xlane.xlu0 %1223
    %1225 = vadd.xlane.f32.xlu0 %v1029
    %v1226 = vpop.xlane.xlu0 %1225
    %1227 = vadd.xlane.f32.xlu0 %v1030
    %v1228 = vpop.xlane.xlu0 %1227
    %1229 = vadd.xlane.f32.xlu0 %v1031
    %v1230 = vpop.xlane.xlu0 %1229
    %1231 = vadd.xlane.f32.xlu0 %v1032
    %v1232 = vpop.xlane.xlu0 %1231
    %1233 = vadd.xlane.f32.xlu0 %v1033
    %v1234 = vpop.xlane.xlu0 %1233
    %1235 = vadd.xlane.f32.xlu0 %v1034
    %v1236 = vpop.xlane.xlu0 %1235
    %1237 = vadd.xlane.f32.xlu0 %v1035
    %v1238 = vpop.xlane.xlu0 %1237
    %1239 = vadd.xlane.f32.xlu0 %v1036
    %v1240 = vpop.xlane.xlu0 %1239
    %1241 = vadd.xlane.f32.xlu0 %v1037
    %v1242 = vpop.xlane.xlu0 %1241
    %1243 = vadd.xlane.f32.xlu0 %v1038
    %v1244 = vpop.xlane.xlu0 %1243
    %1245 = vadd.xlane.f32.xlu0 %v1039
    %v1246 = vpop.xlane.xlu0 %1245
    %1247 = vadd.xlane.f32.xlu0 %v1040
    %v1248 = vpop.xlane.xlu0 %1247
    %1249 = vadd.xlane.f32.xlu0 %v1041
    %v1250 = vpop.xlane.xlu0 %1249
    %1251 = vadd.xlane.f32.xlu0 %v1042
    %v1252 = vpop.xlane.xlu0 %1251
    %1253 = vadd.xlane.f32.xlu0 %v1043
    %v1254 = vpop.xlane.xlu0 %1253
    %1255 = vadd.xlane.f32.xlu0 %v1044
    %v1256 = vpop.xlane.xlu0 %1255
    %1257 = vadd.xlane.f32.xlu0 %v1045
    %v1258 = vpop.xlane.xlu0 %1257
    %1259 = vadd.xlane.f32.xlu0 %v1046
    %v1260 = vpop.xlane.xlu0 %1259
    %1261 = vadd.xlane.f32.xlu0 %v1047
    %v1262 = vpop.xlane.xlu0 %1261
    %1263 = vadd.xlane.f32.xlu0 %v1048
    %v1264 = vpop.xlane.xlu0 %1263
    %1265 = vadd.xlane.f32.xlu0 %v1049
    %v1266 = vpop.xlane.xlu0 %1265
    %1267 = vadd.xlane.f32.xlu0 %v1050
    %v1268 = vpop.xlane.xlu0 %1267
    %1269 = vadd.xlane.f32.xlu0 %v1051
    %v1270 = vpop.xlane.xlu0 %1269
    %1271 = vadd.xlane.f32.xlu0 %v1052
    %v1272 = vpop.xlane.xlu0 %1271
    %1273 = vadd.xlane.f32.xlu0 %v1053
    %v1274 = vpop.xlane.xlu0 %1273
    %1275 = vadd.xlane.f32.xlu0 %v1054
    %v1276 = vpop.xlane.xlu0 %1275
    %1277 = vadd.xlane.f32.xlu0 %v1055
    %v1278 = vpop.xlane.xlu0 %1277
    %1279 = vadd.xlane.f32.xlu0 %v1056
    %v1280 = vpop.xlane.xlu0 %1279
    %1281 = vadd.xlane.f32.xlu0 %v1057
    %v1282 = vpop.xlane.xlu0 %1281
    %1283 = vadd.xlane.f32.xlu0 %v1058
    %v1284 = vpop.xlane.xlu0 %1283
    %1285 = vadd.xlane.f32.xlu0 %v1059
    %v1286 = vpop.xlane.xlu0 %1285
    %1287 = vadd.xlane.f32.xlu0 %v1060
    %v1288 = vpop.xlane.xlu0 %1287
    %1289 = vadd.xlane.f32.xlu0 %v1061
    %v1290 = vpop.xlane.xlu0 %1289
    %1291 = vadd.xlane.f32.xlu0 %v1062
    %v1292 = vpop.xlane.xlu0 %1291
    %1293 = vadd.xlane.f32.xlu0 %v1063
    %v1294 = vpop.xlane.xlu0 %1293
    %1295 = vadd.xlane.f32.xlu0 %v1064
    %v1296 = vpop.xlane.xlu0 %1295
    %1297 = vadd.xlane.f32.xlu0 %v1065
    %v1298 = vpop.xlane.xlu0 %1297
    %1299 = vadd.xlane.f32.xlu0 %v1066
    %v1300 = vpop.xlane.xlu0 %1299
    %1301 = vadd.xlane.f32.xlu0 %v1067
    %v1302 = vpop.xlane.xlu0 %1301
    %1303 = vadd.xlane.f32.xlu0 %v1068
    %v1304 = vpop.xlane.xlu0 %1303
    %1305 = vadd.xlane.f32.xlu0 %v1069
    %v1306 = vpop.xlane.xlu0 %1305
    %1307 = vadd.xlane.f32.xlu0 %v1070
    %v1308 = vpop.xlane.xlu0 %1307
    %1309 = vadd.xlane.f32.xlu0 %v1071
    %v1310 = vpop.xlane.xlu0 %1309
    %1311 = vadd.xlane.f32.xlu0 %v1072
    %v1312 = vpop.xlane.xlu0 %1311
    %1313 = vadd.xlane.f32.xlu0 %v1073
    %v1314 = vpop.xlane.xlu0 %1313
    %1315 = vadd.xlane.f32.xlu0 %v1074
    %v1316 = vpop.xlane.xlu0 %1315
    %1317 = vadd.xlane.f32.xlu0 %v1075
    %v1318 = vpop.xlane.xlu0 %1317
    %1319 = vadd.xlane.f32.xlu0 %v1076
    %v1320 = vpop.xlane.xlu0 %1319
    %1321 = vadd.xlane.f32.xlu0 %v1077
    %v1322 = vpop.xlane.xlu0 %1321
    %1323 = vadd.xlane.f32.xlu0 %v1078
    %v1324 = vpop.xlane.xlu0 %1323
    %1325 = vadd.xlane.f32.xlu0 %v1079
    %v1326 = vpop.xlane.xlu0 %1325
    %1327 = vadd.xlane.f32.xlu0 %v1080
    %v1328 = vpop.xlane.xlu0 %1327
    %1329 = vadd.xlane.f32.xlu0 %v1081
    %v1330 = vpop.xlane.xlu0 %1329
    %1331 = vadd.xlane.f32.xlu0 %v1082
    %v1332 = vpop.xlane.xlu0 %1331
    %1333 = vadd.xlane.f32.xlu0 %v1083
    %v1334 = vpop.xlane.xlu0 %1333
    %1335 = vadd.xlane.f32.xlu0 %v1084
    %v1336 = vpop.xlane.xlu0 %1335
    %1337 = vadd.xlane.f32.xlu0 %v1085
    %v1338 = vpop.xlane.xlu0 %1337
    %1339 = vadd.xlane.f32.xlu0 %v1086
    %v1340 = vpop.xlane.xlu0 %1339
    %1341 = vadd.xlane.f32.xlu0 %v1087
    %v1342 = vpop.xlane.xlu0 %1341
    %1343 = vadd.xlane.f32.xlu0 %v1088
    %v1344 = vpop.xlane.xlu0 %1343
    %v1473 = vlaneseq
    %v1474 = vand.u32 %v1473, 127
    %v1475 = vlaneseq
    %v1476 = vshrl.u32 %v1475, 7
    %v1477 = vsub.s32 %v1474, %v1476
    %v1478 = vrot.slane %v1090, %v1477
    %v1479 = vadd.s32 %v1474, 4294967288
    %v1480 = vlaneseq
    %v1481 = vshrl.u32 %v1480, 7
    %v1482 = vsub.s32 %v1479, %v1481
    %v1483 = vrot.slane %v1092, %v1482
    %vm1484 = vcmask 130112
    %v1485 = vsel %vm1484, %v1483, %v1478
    %v1486 = vadd.s32 %v1474, 4294967280
    %v1487 = vlaneseq
    %v1488 = vshrl.u32 %v1487, 7
    %v1489 = vsub.s32 %v1486, %v1488
    %v1490 = vrot.slane %v1094, %v1489
    %vm1491 = vcmask 195712
    %v1492 = vsel %vm1491, %v1490, %v1485
    %v1493 = vadd.s32 %v1474, 4294967272
    %v1494 = vlaneseq
    %v1495 = vshrl.u32 %v1494, 7
    %v1496 = vsub.s32 %v1493, %v1495
    %v1497 = vrot.slane %v1096, %v1496
    %vm1498 = vcmask 261312
    %v1499 = vsel %vm1498, %v1497, %v1492
    %v1500 = vadd.s32 %v1474, 4294967264
    %v1501 = vlaneseq
    %v1502 = vshrl.u32 %v1501, 7
    %v1503 = vsub.s32 %v1500, %v1502
    %v1504 = vrot.slane %v1098, %v1503
    %vm1505 = vcmask 326912
    %v1506 = vsel %vm1505, %v1504, %v1499
    %v1507 = vadd.s32 %v1474, 4294967256
    %v1508 = vlaneseq
    %v1509 = vshrl.u32 %v1508, 7
    %v1510 = vsub.s32 %v1507, %v1509
    %v1511 = vrot.slane %v1100, %v1510
    %vm1512 = vcmask 392512
    %v1513 = vsel %vm1512, %v1511, %v1506
    %v1514 = vadd.s32 %v1474, 4294967248
    %v1515 = vlaneseq
    %v1516 = vshrl.u32 %v1515, 7
    %v1517 = vsub.s32 %v1514, %v1516
    %v1518 = vrot.slane %v1102, %v1517
    %vm1519 = vcmask 458112
    %v1520 = vsel %vm1519, %v1518, %v1513
    %v1521 = vadd.s32 %v1474, 4294967240
    %v1522 = vlaneseq
    %v1523 = vshrl.u32 %v1522, 7
    %v1524 = vsub.s32 %v1521, %v1523
    %v1525 = vrot.slane %v1104, %v1524
    %vm1526 = vcmask 523712
    %v1527 = vsel %vm1526, %v1525, %v1520
    %v1528 = vadd.s32 %v1474, 4294967232
    %v1529 = vlaneseq
    %v1530 = vshrl.u32 %v1529, 7
    %v1531 = vsub.s32 %v1528, %v1530
    %v1532 = vrot.slane %v1106, %v1531
    %vm1533 = vcmask 589312
    %v1534 = vsel %vm1533, %v1532, %v1527
    %v1535 = vadd.s32 %v1474, 4294967224
    %v1536 = vlaneseq
    %v1537 = vshrl.u32 %v1536, 7
    %v1538 = vsub.s32 %v1535, %v1537
    %v1539 = vrot.slane %v1108, %v1538
    %vm1540 = vcmask 654912
    %v1541 = vsel %vm1540, %v1539, %v1534
    %v1542 = vadd.s32 %v1474, 4294967216
    %v1543 = vlaneseq
    %v1544 = vshrl.u32 %v1543, 7
    %v1545 = vsub.s32 %v1542, %v1544
    %v1546 = vrot.slane %v1110, %v1545
    %vm1547 = vcmask 720512
    %v1548 = vsel %vm1547, %v1546, %v1541
    %v1549 = vadd.s32 %v1474, 4294967208
    %v1550 = vlaneseq
    %v1551 = vshrl.u32 %v1550, 7
    %v1552 = vsub.s32 %v1549, %v1551
    %v1553 = vrot.slane %v1112, %v1552
    %vm1554 = vcmask 786112
    %v1555 = vsel %vm1554, %v1553, %v1548
    %v1556 = vadd.s32 %v1474, 4294967200
    %v1557 = vlaneseq
    %v1558 = vshrl.u32 %v1557, 7
    %v1559 = vsub.s32 %v1556, %v1558
    %v1560 = vrot.slane %v1114, %v1559
    %vm1561 = vcmask 851712
    %v1562 = vsel %vm1561, %v1560, %v1555
    %v1563 = vadd.s32 %v1474, 4294967192
    %v1564 = vlaneseq
    %v1565 = vshrl.u32 %v1564, 7
    %v1566 = vsub.s32 %v1563, %v1565
    %v1567 = vrot.slane %v1116, %v1566
    %vm1568 = vcmask 917312
    %v1569 = vsel %vm1568, %v1567, %v1562
    %v1570 = vadd.s32 %v1474, 4294967184
    %v1571 = vlaneseq
    %v1572 = vshrl.u32 %v1571, 7
    %v1573 = vsub.s32 %v1570, %v1572
    %v1574 = vrot.slane %v1118, %v1573
    %vm1575 = vcmask 982912
    %v1576 = vsel %vm1575, %v1574, %v1569
    %v1577 = vadd.s32 %v1474, 4294967176
    %v1578 = vlaneseq
    %v1579 = vshrl.u32 %v1578, 7
    %v1580 = vsub.s32 %v1577, %v1579
    %v1581 = vrot.slane %v1120, %v1580
    %vm1582 = vcmask 1048512
    %v1583 = vsel %vm1582, %v1581, %v1576
    %v1584 = vlaneseq
    %v1585 = vshrl.u32 %v1584, 7
    %v1586 = vsub.s32 %v1474, %v1585
    %v1587 = vrot.slane %v1122, %v1586
    %v1588 = vlaneseq
    %v1589 = vshrl.u32 %v1588, 7
    %v1590 = vsub.s32 %v1479, %v1589
    %v1591 = vrot.slane %v1124, %v1590
    %v1592 = vsel %vm1484, %v1591, %v1587
    %v1593 = vlaneseq
    %v1594 = vshrl.u32 %v1593, 7
    %v1595 = vsub.s32 %v1486, %v1594
    %v1596 = vrot.slane %v1126, %v1595
    %v1597 = vsel %vm1491, %v1596, %v1592
    %v1598 = vlaneseq
    %v1599 = vshrl.u32 %v1598, 7
    %v1600 = vsub.s32 %v1493, %v1599
    %v1601 = vrot.slane %v1128, %v1600
    %v1602 = vsel %vm1498, %v1601, %v1597
    %v1603 = vlaneseq
    %v1604 = vshrl.u32 %v1603, 7
    %v1605 = vsub.s32 %v1500, %v1604
    %v1606 = vrot.slane %v1130, %v1605
    %v1607 = vsel %vm1505, %v1606, %v1602
    %v1608 = vlaneseq
    %v1609 = vshrl.u32 %v1608, 7
    %v1610 = vsub.s32 %v1507, %v1609
    %v1611 = vrot.slane %v1132, %v1610
    %v1612 = vsel %vm1512, %v1611, %v1607
    %v1613 = vlaneseq
    %v1614 = vshrl.u32 %v1613, 7
    %v1615 = vsub.s32 %v1514, %v1614
    %v1616 = vrot.slane %v1134, %v1615
    %v1617 = vsel %vm1519, %v1616, %v1612
    %v1618 = vlaneseq
    %v1619 = vshrl.u32 %v1618, 7
    %v1620 = vsub.s32 %v1521, %v1619
    %v1621 = vrot.slane %v1136, %v1620
    %v1622 = vsel %vm1526, %v1621, %v1617
    %v1623 = vlaneseq
    %v1624 = vshrl.u32 %v1623, 7
    %v1625 = vsub.s32 %v1528, %v1624
    %v1626 = vrot.slane %v1138, %v1625
    %v1627 = vsel %vm1533, %v1626, %v1622
    %v1628 = vlaneseq
    %v1629 = vshrl.u32 %v1628, 7
    %v1630 = vsub.s32 %v1535, %v1629
    %v1631 = vrot.slane %v1140, %v1630
    %v1632 = vsel %vm1540, %v1631, %v1627
    %v1633 = vlaneseq
    %v1634 = vshrl.u32 %v1633, 7
    %v1635 = vsub.s32 %v1542, %v1634
    %v1636 = vrot.slane %v1142, %v1635
    %v1637 = vsel %vm1547, %v1636, %v1632
    %v1638 = vlaneseq
    %v1639 = vshrl.u32 %v1638, 7
    %v1640 = vsub.s32 %v1549, %v1639
    %v1641 = vrot.slane %v1144, %v1640
    %v1642 = vsel %vm1554, %v1641, %v1637
    %v1643 = vlaneseq
    %v1644 = vshrl.u32 %v1643, 7
    %v1645 = vsub.s32 %v1556, %v1644
    %v1646 = vrot.slane %v1146, %v1645
    %v1647 = vsel %vm1561, %v1646, %v1642
    %v1648 = vlaneseq
    %v1649 = vshrl.u32 %v1648, 7
    %v1650 = vsub.s32 %v1563, %v1649
    %v1651 = vrot.slane %v1148, %v1650
    %v1652 = vsel %vm1568, %v1651, %v1647
    %v1653 = vlaneseq
    %v1654 = vshrl.u32 %v1653, 7
    %v1655 = vsub.s32 %v1570, %v1654
    %v1656 = vrot.slane %v1150, %v1655
    %v1657 = vsel %vm1575, %v1656, %v1652
    %v1658 = vlaneseq
    %v1659 = vshrl.u32 %v1658, 7
    %v1660 = vsub.s32 %v1577, %v1659
    %v1661 = vrot.slane %v1152, %v1660
    %v1662 = vsel %vm1582, %v1661, %v1657
    %v1663 = vlaneseq
    %v1664 = vshrl.u32 %v1663, 7
    %v1665 = vsub.s32 %v1474, %v1664
    %v1666 = vrot.slane %v1154, %v1665
    %v1667 = vlaneseq
    %v1668 = vshrl.u32 %v1667, 7
    %v1669 = vsub.s32 %v1479, %v1668
    %v1670 = vrot.slane %v1156, %v1669
    %v1671 = vsel %vm1484, %v1670, %v1666
    %v1672 = vlaneseq
    %v1673 = vshrl.u32 %v1672, 7
    %v1674 = vsub.s32 %v1486, %v1673
    %v1675 = vrot.slane %v1158, %v1674
    %v1676 = vsel %vm1491, %v1675, %v1671
    %v1677 = vlaneseq
    %v1678 = vshrl.u32 %v1677, 7
    %v1679 = vsub.s32 %v1493, %v1678
    %v1680 = vrot.slane %v1160, %v1679
    %v1681 = vsel %vm1498, %v1680, %v1676
    %v1682 = vlaneseq
    %v1683 = vshrl.u32 %v1682, 7
    %v1684 = vsub.s32 %v1500, %v1683
    %v1685 = vrot.slane %v1162, %v1684
    %v1686 = vsel %vm1505, %v1685, %v1681
    %v1687 = vlaneseq
    %v1688 = vshrl.u32 %v1687, 7
    %v1689 = vsub.s32 %v1507, %v1688
    %v1690 = vrot.slane %v1164, %v1689
    %v1691 = vsel %vm1512, %v1690, %v1686
    %v1692 = vlaneseq
    %v1693 = vshrl.u32 %v1692, 7
    %v1694 = vsub.s32 %v1514, %v1693
    %v1695 = vrot.slane %v1166, %v1694
    %v1696 = vsel %vm1519, %v1695, %v1691
    %v1697 = vlaneseq
    %v1698 = vshrl.u32 %v1697, 7
    %v1699 = vsub.s32 %v1521, %v1698
    %v1700 = vrot.slane %v1168, %v1699
    %v1701 = vsel %vm1526, %v1700, %v1696
    %v1702 = vlaneseq
    %v1703 = vshrl.u32 %v1702, 7
    %v1704 = vsub.s32 %v1528, %v1703
    %v1705 = vrot.slane %v1170, %v1704
    %v1706 = vsel %vm1533, %v1705, %v1701
    %v1707 = vlaneseq
    %v1708 = vshrl.u32 %v1707, 7
    %v1709 = vsub.s32 %v1535, %v1708
    %v1710 = vrot.slane %v1172, %v1709
    %v1711 = vsel %vm1540, %v1710, %v1706
    %v1712 = vlaneseq
    %v1713 = vshrl.u32 %v1712, 7
    %v1714 = vsub.s32 %v1542, %v1713
    %v1715 = vrot.slane %v1174, %v1714
    %v1716 = vsel %vm1547, %v1715, %v1711
    %v1717 = vlaneseq
    %v1718 = vshrl.u32 %v1717, 7
    %v1719 = vsub.s32 %v1549, %v1718
    %v1720 = vrot.slane %v1176, %v1719
    %v1721 = vsel %vm1554, %v1720, %v1716
    %v1722 = vlaneseq
    %v1723 = vshrl.u32 %v1722, 7
    %v1724 = vsub.s32 %v1556, %v1723
    %v1725 = vrot.slane %v1178, %v1724
    %v1726 = vsel %vm1561, %v1725, %v1721
    %v1727 = vlaneseq
    %v1728 = vshrl.u32 %v1727, 7
    %v1729 = vsub.s32 %v1563, %v1728
    %v1730 = vrot.slane %v1180, %v1729
    %v1731 = vsel %vm1568, %v1730, %v1726
    %v1732 = vlaneseq
    %v1733 = vshrl.u32 %v1732, 7
    %v1734 = vsub.s32 %v1570, %v1733
    %v1735 = vrot.slane %v1182, %v1734
    %v1736 = vsel %vm1575, %v1735, %v1731
    %v1737 = vlaneseq
    %v1738 = vshrl.u32 %v1737, 7
    %v1739 = vsub.s32 %v1577, %v1738
    %v1740 = vrot.slane %v1184, %v1739
    %v1741 = vsel %vm1582, %v1740, %v1736
    %v1742 = vlaneseq
    %v1743 = vshrl.u32 %v1742, 7
    %v1744 = vsub.s32 %v1474, %v1743
    %v1745 = vrot.slane %v1186, %v1744
    %v1746 = vlaneseq
    %v1747 = vshrl.u32 %v1746, 7
    %v1748 = vsub.s32 %v1479, %v1747
    %v1749 = vrot.slane %v1188, %v1748
    %v1750 = vsel %vm1484, %v1749, %v1745
    %v1751 = vlaneseq
    %v1752 = vshrl.u32 %v1751, 7
    %v1753 = vsub.s32 %v1486, %v1752
    %v1754 = vrot.slane %v1190, %v1753
    %v1755 = vsel %vm1491, %v1754, %v1750
    %v1756 = vlaneseq
    %v1757 = vshrl.u32 %v1756, 7
    %v1758 = vsub.s32 %v1493, %v1757
    %v1759 = vrot.slane %v1192, %v1758
    %v1760 = vsel %vm1498, %v1759, %v1755
    %v1761 = vlaneseq
    %v1762 = vshrl.u32 %v1761, 7
    %v1763 = vsub.s32 %v1500, %v1762
    %v1764 = vrot.slane %v1194, %v1763
    %v1765 = vsel %vm1505, %v1764, %v1760
    %v1766 = vlaneseq
    %v1767 = vshrl.u32 %v1766, 7
    %v1768 = vsub.s32 %v1507, %v1767
    %v1769 = vrot.slane %v1196, %v1768
    %v1770 = vsel %vm1512, %v1769, %v1765
    %v1771 = vlaneseq
    %v1772 = vshrl.u32 %v1771, 7
    %v1773 = vsub.s32 %v1514, %v1772
    %v1774 = vrot.slane %v1198, %v1773
    %v1775 = vsel %vm1519, %v1774, %v1770
    %v1776 = vlaneseq
    %v1777 = vshrl.u32 %v1776, 7
    %v1778 = vsub.s32 %v1521, %v1777
    %v1779 = vrot.slane %v1200, %v1778
    %v1780 = vsel %vm1526, %v1779, %v1775
    %v1781 = vlaneseq
    %v1782 = vshrl.u32 %v1781, 7
    %v1783 = vsub.s32 %v1528, %v1782
    %v1784 = vrot.slane %v1202, %v1783
    %v1785 = vsel %vm1533, %v1784, %v1780
    %v1786 = vlaneseq
    %v1787 = vshrl.u32 %v1786, 7
    %v1788 = vsub.s32 %v1535, %v1787
    %v1789 = vrot.slane %v1204, %v1788
    %v1790 = vsel %vm1540, %v1789, %v1785
    %v1791 = vlaneseq
    %v1792 = vshrl.u32 %v1791, 7
    %v1793 = vsub.s32 %v1542, %v1792
    %v1794 = vrot.slane %v1206, %v1793
    %v1795 = vsel %vm1547, %v1794, %v1790
    %v1796 = vlaneseq
    %v1797 = vshrl.u32 %v1796, 7
    %v1798 = vsub.s32 %v1549, %v1797
    %v1799 = vrot.slane %v1208, %v1798
    %v1800 = vsel %vm1554, %v1799, %v1795
    %v1801 = vlaneseq
    %v1802 = vshrl.u32 %v1801, 7
    %v1803 = vsub.s32 %v1556, %v1802
    %v1804 = vrot.slane %v1210, %v1803
    %v1805 = vsel %vm1561, %v1804, %v1800
    %v1806 = vlaneseq
    %v1807 = vshrl.u32 %v1806, 7
    %v1808 = vsub.s32 %v1563, %v1807
    %v1809 = vrot.slane %v1212, %v1808
    %v1810 = vsel %vm1568, %v1809, %v1805
    %v1811 = vlaneseq
    %v1812 = vshrl.u32 %v1811, 7
    %v1813 = vsub.s32 %v1570, %v1812
    %v1814 = vrot.slane %v1214, %v1813
    %v1815 = vsel %vm1575, %v1814, %v1810
    %v1816 = vlaneseq
    %v1817 = vshrl.u32 %v1816, 7
    %v1818 = vsub.s32 %v1577, %v1817
    %v1819 = vrot.slane %v1216, %v1818
    %v1820 = vsel %vm1582, %v1819, %v1815
    %v1821 = vlaneseq
    %v1822 = vshrl.u32 %v1821, 7
    %v1823 = vsub.s32 %v1474, %v1822
    %v1824 = vrot.slane %v1218, %v1823
    %v1825 = vlaneseq
    %v1826 = vshrl.u32 %v1825, 7
    %v1827 = vsub.s32 %v1479, %v1826
    %v1828 = vrot.slane %v1220, %v1827
    %v1829 = vsel %vm1484, %v1828, %v1824
    %v1830 = vlaneseq
    %v1831 = vshrl.u32 %v1830, 7
    %v1832 = vsub.s32 %v1486, %v1831
    %v1833 = vrot.slane %v1222, %v1832
    %v1834 = vsel %vm1491, %v1833, %v1829
    %v1835 = vlaneseq
    %v1836 = vshrl.u32 %v1835, 7
    %v1837 = vsub.s32 %v1493, %v1836
    %v1838 = vrot.slane %v1224, %v1837
    %v1839 = vsel %vm1498, %v1838, %v1834
    %v1840 = vlaneseq
    %v1841 = vshrl.u32 %v1840, 7
    %v1842 = vsub.s32 %v1500, %v1841
    %v1843 = vrot.slane %v1226, %v1842
    %v1844 = vsel %vm1505, %v1843, %v1839
    %v1845 = vlaneseq
    %v1846 = vshrl.u32 %v1845, 7
    %v1847 = vsub.s32 %v1507, %v1846
    %v1848 = vrot.slane %v1228, %v1847
    %v1849 = vsel %vm1512, %v1848, %v1844
    %v1850 = vlaneseq
    %v1851 = vshrl.u32 %v1850, 7
    %v1852 = vsub.s32 %v1514, %v1851
    %v1853 = vrot.slane %v1230, %v1852
    %v1854 = vsel %vm1519, %v1853, %v1849
    %v1855 = vlaneseq
    %v1856 = vshrl.u32 %v1855, 7
    %v1857 = vsub.s32 %v1521, %v1856
    %v1858 = vrot.slane %v1232, %v1857
    %v1859 = vsel %vm1526, %v1858, %v1854
    %v1860 = vlaneseq
    %v1861 = vshrl.u32 %v1860, 7
    %v1862 = vsub.s32 %v1528, %v1861
    %v1863 = vrot.slane %v1234, %v1862
    %v1864 = vsel %vm1533, %v1863, %v1859
    %v1865 = vlaneseq
    %v1866 = vshrl.u32 %v1865, 7
    %v1867 = vsub.s32 %v1535, %v1866
    %v1868 = vrot.slane %v1236, %v1867
    %v1869 = vsel %vm1540, %v1868, %v1864
    %v1870 = vlaneseq
    %v1871 = vshrl.u32 %v1870, 7
    %v1872 = vsub.s32 %v1542, %v1871
    %v1873 = vrot.slane %v1238, %v1872
    %v1874 = vsel %vm1547, %v1873, %v1869
    %v1875 = vlaneseq
    %v1876 = vshrl.u32 %v1875, 7
    %v1877 = vsub.s32 %v1549, %v1876
    %v1878 = vrot.slane %v1240, %v1877
    %v1879 = vsel %vm1554, %v1878, %v1874
    %v1880 = vlaneseq
    %v1881 = vshrl.u32 %v1880, 7
    %v1882 = vsub.s32 %v1556, %v1881
    %v1883 = vrot.slane %v1242, %v1882
    %v1884 = vsel %vm1561, %v1883, %v1879
    %v1885 = vlaneseq
    %v1886 = vshrl.u32 %v1885, 7
    %v1887 = vsub.s32 %v1563, %v1886
    %v1888 = vrot.slane %v1244, %v1887
    %v1889 = vsel %vm1568, %v1888, %v1884
    %v1890 = vlaneseq
    %v1891 = vshrl.u32 %v1890, 7
    %v1892 = vsub.s32 %v1570, %v1891
    %v1893 = vrot.slane %v1246, %v1892
    %v1894 = vsel %vm1575, %v1893, %v1889
    %v1895 = vlaneseq
    %v1896 = vshrl.u32 %v1895, 7
    %v1897 = vsub.s32 %v1577, %v1896
    %v1898 = vrot.slane %v1248, %v1897
    %v1899 = vsel %vm1582, %v1898, %v1894
    %v1900 = vlaneseq
    %v1901 = vshrl.u32 %v1900, 7
    %v1902 = vsub.s32 %v1474, %v1901
    %v1903 = vrot.slane %v1250, %v1902
    %v1904 = vlaneseq
    %v1905 = vshrl.u32 %v1904, 7
    %v1906 = vsub.s32 %v1479, %v1905
    %v1907 = vrot.slane %v1252, %v1906
    %v1908 = vsel %vm1484, %v1907, %v1903
    %v1909 = vlaneseq
    %v1910 = vshrl.u32 %v1909, 7
    %v1911 = vsub.s32 %v1486, %v1910
    %v1912 = vrot.slane %v1254, %v1911
    %v1913 = vsel %vm1491, %v1912, %v1908
    %v1914 = vlaneseq
    %v1915 = vshrl.u32 %v1914, 7
    %v1916 = vsub.s32 %v1493, %v1915
    %v1917 = vrot.slane %v1256, %v1916
    %v1918 = vsel %vm1498, %v1917, %v1913
    %v1919 = vlaneseq
    %v1920 = vshrl.u32 %v1919, 7
    %v1921 = vsub.s32 %v1500, %v1920
    %v1922 = vrot.slane %v1258, %v1921
    %v1923 = vsel %vm1505, %v1922, %v1918
    %v1924 = vlaneseq
    %v1925 = vshrl.u32 %v1924, 7
    %v1926 = vsub.s32 %v1507, %v1925
    %v1927 = vrot.slane %v1260, %v1926
    %v1928 = vsel %vm1512, %v1927, %v1923
    %v1929 = vlaneseq
    %v1930 = vshrl.u32 %v1929, 7
    %v1931 = vsub.s32 %v1514, %v1930
    %v1932 = vrot.slane %v1262, %v1931
    %v1933 = vsel %vm1519, %v1932, %v1928
    %v1934 = vlaneseq
    %v1935 = vshrl.u32 %v1934, 7
    %v1936 = vsub.s32 %v1521, %v1935
    %v1937 = vrot.slane %v1264, %v1936
    %v1938 = vsel %vm1526, %v1937, %v1933
    %v1939 = vlaneseq
    %v1940 = vshrl.u32 %v1939, 7
    %v1941 = vsub.s32 %v1528, %v1940
    %v1942 = vrot.slane %v1266, %v1941
    %v1943 = vsel %vm1533, %v1942, %v1938
    %v1944 = vlaneseq
    %v1945 = vshrl.u32 %v1944, 7
    %v1946 = vsub.s32 %v1535, %v1945
    %v1947 = vrot.slane %v1268, %v1946
    %v1948 = vsel %vm1540, %v1947, %v1943
    %v1949 = vlaneseq
    %v1950 = vshrl.u32 %v1949, 7
    %v1951 = vsub.s32 %v1542, %v1950
    %v1952 = vrot.slane %v1270, %v1951
    %v1953 = vsel %vm1547, %v1952, %v1948
    %v1954 = vlaneseq
    %v1955 = vshrl.u32 %v1954, 7
    %v1956 = vsub.s32 %v1549, %v1955
    %v1957 = vrot.slane %v1272, %v1956
    %v1958 = vsel %vm1554, %v1957, %v1953
    %v1959 = vlaneseq
    %v1960 = vshrl.u32 %v1959, 7
    %v1961 = vsub.s32 %v1556, %v1960
    %v1962 = vrot.slane %v1274, %v1961
    %v1963 = vsel %vm1561, %v1962, %v1958
    %v1964 = vlaneseq
    %v1965 = vshrl.u32 %v1964, 7
    %v1966 = vsub.s32 %v1563, %v1965
    %v1967 = vrot.slane %v1276, %v1966
    %v1968 = vsel %vm1568, %v1967, %v1963
    %v1969 = vlaneseq
    %v1970 = vshrl.u32 %v1969, 7
    %v1971 = vsub.s32 %v1570, %v1970
    %v1972 = vrot.slane %v1278, %v1971
    %v1973 = vsel %vm1575, %v1972, %v1968
    %v1974 = vlaneseq
    %v1975 = vshrl.u32 %v1974, 7
    %v1976 = vsub.s32 %v1577, %v1975
    %v1977 = vrot.slane %v1280, %v1976
    %v1978 = vsel %vm1582, %v1977, %v1973
    %v1979 = vlaneseq
    %v1980 = vshrl.u32 %v1979, 7
    %v1981 = vsub.s32 %v1474, %v1980
    %v1982 = vrot.slane %v1282, %v1981
    %v1983 = vlaneseq
    %v1984 = vshrl.u32 %v1983, 7
    %v1985 = vsub.s32 %v1479, %v1984
    %v1986 = vrot.slane %v1284, %v1985
    %v1987 = vsel %vm1484, %v1986, %v1982
    %v1988 = vlaneseq
    %v1989 = vshrl.u32 %v1988, 7
    %v1990 = vsub.s32 %v1486, %v1989
    %v1991 = vrot.slane %v1286, %v1990
    %v1992 = vsel %vm1491, %v1991, %v1987
    %v1993 = vlaneseq
    %v1994 = vshrl.u32 %v1993, 7
    %v1995 = vsub.s32 %v1493, %v1994
    %v1996 = vrot.slane %v1288, %v1995
    %v1997 = vsel %vm1498, %v1996, %v1992
    %v1998 = vlaneseq
    %v1999 = vshrl.u32 %v1998, 7
    %v2000 = vsub.s32 %v1500, %v1999
    %v2001 = vrot.slane %v1290, %v2000
    %v2002 = vsel %vm1505, %v2001, %v1997
    %v2003 = vlaneseq
    %v2004 = vshrl.u32 %v2003, 7
    %v2005 = vsub.s32 %v1507, %v2004
    %v2006 = vrot.slane %v1292, %v2005
    %v2007 = vsel %vm1512, %v2006, %v2002
    %v2008 = vlaneseq
    %v2009 = vshrl.u32 %v2008, 7
    %v2010 = vsub.s32 %v1514, %v2009
    %v2011 = vrot.slane %v1294, %v2010
    %v2012 = vsel %vm1519, %v2011, %v2007
    %v2013 = vlaneseq
    %v2014 = vshrl.u32 %v2013, 7
    %v2015 = vsub.s32 %v1521, %v2014
    %v2016 = vrot.slane %v1296, %v2015
    %v2017 = vsel %vm1526, %v2016, %v2012
    %v2018 = vlaneseq
    %v2019 = vshrl.u32 %v2018, 7
    %v2020 = vsub.s32 %v1528, %v2019
    %v2021 = vrot.slane %v1298, %v2020
    %v2022 = vsel %vm1533, %v2021, %v2017
    %v2023 = vlaneseq
    %v2024 = vshrl.u32 %v2023, 7
    %v2025 = vsub.s32 %v1535, %v2024
    %v2026 = vrot.slane %v1300, %v2025
    %v2027 = vsel %vm1540, %v2026, %v2022
    %v2028 = vlaneseq
    %v2029 = vshrl.u32 %v2028, 7
    %v2030 = vsub.s32 %v1542, %v2029
    %v2031 = vrot.slane %v1302, %v2030
    %v2032 = vsel %vm1547, %v2031, %v2027
    %v2033 = vlaneseq
    %v2034 = vshrl.u32 %v2033, 7
    %v2035 = vsub.s32 %v1549, %v2034
    %v2036 = vrot.slane %v1304, %v2035
    %v2037 = vsel %vm1554, %v2036, %v2032
    %v2038 = vlaneseq
    %v2039 = vshrl.u32 %v2038, 7
    %v2040 = vsub.s32 %v1556, %v2039
    %v2041 = vrot.slane %v1306, %v2040
    %v2042 = vsel %vm1561, %v2041, %v2037
    %v2043 = vlaneseq
    %v2044 = vshrl.u32 %v2043, 7
    %v2045 = vsub.s32 %v1563, %v2044
    %v2046 = vrot.slane %v1308, %v2045
    %v2047 = vsel %vm1568, %v2046, %v2042
    %v2048 = vlaneseq
    %v2049 = vshrl.u32 %v2048, 7
    %v2050 = vsub.s32 %v1570, %v2049
    %v2051 = vrot.slane %v1310, %v2050
    %v2052 = vsel %vm1575, %v2051, %v2047
    %v2053 = vlaneseq
    %v2054 = vshrl.u32 %v2053, 7
    %v2055 = vsub.s32 %v1577, %v2054
    %v2056 = vrot.slane %v1312, %v2055
    %v2057 = vsel %vm1582, %v2056, %v2052
    %v2058 = vlaneseq
    %v2059 = vshrl.u32 %v2058, 7
    %v2060 = vsub.s32 %v1474, %v2059
    %v2061 = vrot.slane %v1314, %v2060
    %v2062 = vlaneseq
    %v2063 = vshrl.u32 %v2062, 7
    %v2064 = vsub.s32 %v1479, %v2063
    %v2065 = vrot.slane %v1316, %v2064
    %v2066 = vsel %vm1484, %v2065, %v2061
    %v2067 = vlaneseq
    %v2068 = vshrl.u32 %v2067, 7
    %v2069 = vsub.s32 %v1486, %v2068
    %v2070 = vrot.slane %v1318, %v2069
    %v2071 = vsel %vm1491, %v2070, %v2066
    %v2072 = vlaneseq
    %v2073 = vshrl.u32 %v2072, 7
    %v2074 = vsub.s32 %v1493, %v2073
    %v2075 = vrot.slane %v1320, %v2074
    %v2076 = vsel %vm1498, %v2075, %v2071
    %v2077 = vlaneseq
    %v2078 = vshrl.u32 %v2077, 7
    %v2079 = vsub.s32 %v1500, %v2078
    %v2080 = vrot.slane %v1322, %v2079
    %v2081 = vsel %vm1505, %v2080, %v2076
    %v2082 = vlaneseq
    %v2083 = vshrl.u32 %v2082, 7
    %v2084 = vsub.s32 %v1507, %v2083
    %v2085 = vrot.slane %v1324, %v2084
    %v2086 = vsel %vm1512, %v2085, %v2081
    %v2087 = vlaneseq
    %v2088 = vshrl.u32 %v2087, 7
    %v2089 = vsub.s32 %v1514, %v2088
    %v2090 = vrot.slane %v1326, %v2089
    %v2091 = vsel %vm1519, %v2090, %v2086
    %v2092 = vlaneseq
    %v2093 = vshrl.u32 %v2092, 7
    %v2094 = vsub.s32 %v1521, %v2093
    %v2095 = vrot.slane %v1328, %v2094
    %v2096 = vsel %vm1526, %v2095, %v2091
    %v2097 = vlaneseq
    %v2098 = vshrl.u32 %v2097, 7
    %v2099 = vsub.s32 %v1528, %v2098
    %v2100 = vrot.slane %v1330, %v2099
    %v2101 = vsel %vm1533, %v2100, %v2096
    %v2102 = vlaneseq
    %v2103 = vshrl.u32 %v2102, 7
    %v2104 = vsub.s32 %v1535, %v2103
    %v2105 = vrot.slane %v1332, %v2104
    %v2106 = vsel %vm1540, %v2105, %v2101
    %v2107 = vlaneseq
    %v2108 = vshrl.u32 %v2107, 7
    %v2109 = vsub.s32 %v1542, %v2108
    %v2110 = vrot.slane %v1334, %v2109
    %v2111 = vsel %vm1547, %v2110, %v2106
    %v2112 = vlaneseq
    %v2113 = vshrl.u32 %v2112, 7
    %v2114 = vsub.s32 %v1549, %v2113
    %v2115 = vrot.slane %v1336, %v2114
    %v2116 = vsel %vm1554, %v2115, %v2111
    %v2117 = vlaneseq
    %v2118 = vshrl.u32 %v2117, 7
    %v2119 = vsub.s32 %v1556, %v2118
    %v2120 = vrot.slane %v1338, %v2119
    %v2121 = vsel %vm1561, %v2120, %v2116
    %v2122 = vlaneseq
    %v2123 = vshrl.u32 %v2122, 7
    %v2124 = vsub.s32 %v1563, %v2123
    %v2125 = vrot.slane %v1340, %v2124
    %v2126 = vsel %vm1568, %v2125, %v2121
    %v2127 = vlaneseq
    %v2128 = vshrl.u32 %v2127, 7
    %v2129 = vsub.s32 %v1570, %v2128
    %v2130 = vrot.slane %v1342, %v2129
    %v2131 = vsel %vm1575, %v2130, %v2126
    %v2132 = vlaneseq
    %v2133 = vshrl.u32 %v2132, 7
    %v2134 = vsub.s32 %v1577, %v2133
    %v2135 = vrot.slane %v1344, %v2134
    %v2136 = vsel %vm1582, %v2135, %v2131
    %vm2137 = vcmask 1041409
    %v2138 = vsel %vm2137, %v1662, %v1583
    %vm2139 = vcmask 1042434
    %v2140 = vsel %vm2139, %v1741, %v2138
    %vm2141 = vcmask 1043459
    %v2142 = vsel %vm2141, %v1820, %v2140
    %vm2143 = vcmask 1044484
    %v2144 = vsel %vm2143, %v1899, %v2142
    %vm2145 = vcmask 1045509
    %v2146 = vsel %vm2145, %v1978, %v2144
    %vm2147 = vcmask 1046534
    %v2148 = vsel %vm2147, %v2057, %v2146
    %vm2149 = vcmask 1047559
    %v2150 = vsel %vm2149, %v2136, %v2148
    %2152 = vmax.xlane.f32.xlu0 %v2150
    %v2153 = vpop.xlane.xlu0 %2152
    %v2155 = vlaneseq
    %v2156 = vshrl.u32 %v2155, 7
    %v2157 = vsub.s32 0, %v2156
    %v2158 = vrot.slane %v2153, %v2157
    %v2159 = vlaneseq
    %v2160 = vshrl.u32 %v2159, 7
    %v2161 = vsub.s32 1, %v2160
    %v2162 = vrot.slane %v2153, %v2161
    %v2163 = vlaneseq
    %v2164 = vshrl.u32 %v2163, 7
    %v2165 = vsub.s32 2, %v2164
    %v2166 = vrot.slane %v2153, %v2165
    %v2167 = vlaneseq
    %v2168 = vshrl.u32 %v2167, 7
    %v2169 = vsub.s32 3, %v2168
    %v2170 = vrot.slane %v2153, %v2169
    %v2171 = vlaneseq
    %v2172 = vshrl.u32 %v2171, 7
    %v2173 = vsub.s32 4, %v2172
    %v2174 = vrot.slane %v2153, %v2173
    %v2175 = vlaneseq
    %v2176 = vshrl.u32 %v2175, 7
    %v2177 = vsub.s32 5, %v2176
    %v2178 = vrot.slane %v2153, %v2177
    %v2179 = vlaneseq
    %v2180 = vshrl.u32 %v2179, 7
    %v2181 = vsub.s32 6, %v2180
    %v2182 = vrot.slane %v2153, %v2181
    %v2183 = vlaneseq
    %v2184 = vshrl.u32 %v2183, 7
    %v2185 = vsub.s32 7, %v2184
    %v2186 = vrot.slane %v2153, %v2185
    %v2195 = vsub.f32 %v1090, %v2158
    %v2196 = vsub.f32 %v1092, %v2158
    %v2197 = vsub.f32 %v1094, %v2158
    %v2198 = vsub.f32 %v1096, %v2158
    %v2199 = vsub.f32 %v1098, %v2158
    %v2200 = vsub.f32 %v1100, %v2158
    %v2201 = vsub.f32 %v1102, %v2158
    %v2202 = vsub.f32 %v1104, %v2158
    %v2203 = vsub.f32 %v1106, %v2158
    %v2204 = vsub.f32 %v1108, %v2158
    %v2205 = vsub.f32 %v1110, %v2158
    %v2206 = vsub.f32 %v1112, %v2158
    %v2207 = vsub.f32 %v1114, %v2158
    %v2208 = vsub.f32 %v1116, %v2158
    %v2209 = vsub.f32 %v1118, %v2158
    %v2210 = vsub.f32 %v1120, %v2158
    %v2211 = vsub.f32 %v1122, %v2162
    %v2212 = vsub.f32 %v1124, %v2162
    %v2213 = vsub.f32 %v1126, %v2162
    %v2214 = vsub.f32 %v1128, %v2162
    %v2215 = vsub.f32 %v1130, %v2162
    %v2216 = vsub.f32 %v1132, %v2162
    %v2217 = vsub.f32 %v1134, %v2162
    %v2218 = vsub.f32 %v1136, %v2162
    %v2219 = vsub.f32 %v1138, %v2162
    %v2220 = vsub.f32 %v1140, %v2162
    %v2221 = vsub.f32 %v1142, %v2162
    %v2222 = vsub.f32 %v1144, %v2162
    %v2223 = vsub.f32 %v1146, %v2162
    %v2224 = vsub.f32 %v1148, %v2162
    %v2225 = vsub.f32 %v1150, %v2162
    %v2226 = vsub.f32 %v1152, %v2162
    %v2227 = vsub.f32 %v1154, %v2166
    %v2228 = vsub.f32 %v1156, %v2166
    %v2229 = vsub.f32 %v1158, %v2166
    %v2230 = vsub.f32 %v1160, %v2166
    %v2231 = vsub.f32 %v1162, %v2166
    %v2232 = vsub.f32 %v1164, %v2166
    %v2233 = vsub.f32 %v1166, %v2166
    %v2234 = vsub.f32 %v1168, %v2166
    %v2235 = vsub.f32 %v1170, %v2166
    %v2236 = vsub.f32 %v1172, %v2166
    %v2237 = vsub.f32 %v1174, %v2166
    %v2238 = vsub.f32 %v1176, %v2166
    %v2239 = vsub.f32 %v1178, %v2166
    %v2240 = vsub.f32 %v1180, %v2166
    %v2241 = vsub.f32 %v1182, %v2166
    %v2242 = vsub.f32 %v1184, %v2166
    %v2243 = vsub.f32 %v1186, %v2170
    %v2244 = vsub.f32 %v1188, %v2170
    %v2245 = vsub.f32 %v1190, %v2170
    %v2246 = vsub.f32 %v1192, %v2170
    %v2247 = vsub.f32 %v1194, %v2170
    %v2248 = vsub.f32 %v1196, %v2170
    %v2249 = vsub.f32 %v1198, %v2170
    %v2250 = vsub.f32 %v1200, %v2170
    %v2251 = vsub.f32 %v1202, %v2170
    %v2252 = vsub.f32 %v1204, %v2170
    %v2253 = vsub.f32 %v1206, %v2170
    %v2254 = vsub.f32 %v1208, %v2170
    %v2255 = vsub.f32 %v1210, %v2170
    %v2256 = vsub.f32 %v1212, %v2170
    %v2257 = vsub.f32 %v1214, %v2170
    %v2258 = vsub.f32 %v1216, %v2170
    %v2259 = vsub.f32 %v1218, %v2174
    %v2260 = vsub.f32 %v1220, %v2174
    %v2261 = vsub.f32 %v1222, %v2174
    %v2262 = vsub.f32 %v1224, %v2174
    %v2263 = vsub.f32 %v1226, %v2174
    %v2264 = vsub.f32 %v1228, %v2174
    %v2265 = vsub.f32 %v1230, %v2174
    %v2266 = vsub.f32 %v1232, %v2174
    %v2267 = vsub.f32 %v1234, %v2174
    %v2268 = vsub.f32 %v1236, %v2174
    %v2269 = vsub.f32 %v1238, %v2174
    %v2270 = vsub.f32 %v1240, %v2174
    %v2271 = vsub.f32 %v1242, %v2174
    %v2272 = vsub.f32 %v1244, %v2174
    %v2273 = vsub.f32 %v1246, %v2174
    %v2274 = vsub.f32 %v1248, %v2174
    %v2275 = vsub.f32 %v1250, %v2178
    %v2276 = vsub.f32 %v1252, %v2178
    %v2277 = vsub.f32 %v1254, %v2178
    %v2278 = vsub.f32 %v1256, %v2178
    %v2279 = vsub.f32 %v1258, %v2178
    %v2280 = vsub.f32 %v1260, %v2178
    %v2281 = vsub.f32 %v1262, %v2178
    %v2282 = vsub.f32 %v1264, %v2178
    %v2283 = vsub.f32 %v1266, %v2178
    %v2284 = vsub.f32 %v1268, %v2178
    %v2285 = vsub.f32 %v1270, %v2178
    %v2286 = vsub.f32 %v1272, %v2178
    %v2287 = vsub.f32 %v1274, %v2178
    %v2288 = vsub.f32 %v1276, %v2178
    %v2289 = vsub.f32 %v1278, %v2178
    %v2290 = vsub.f32 %v1280, %v2178
    %v2291 = vsub.f32 %v1282, %v2182
    %v2292 = vsub.f32 %v1284, %v2182
    %v2293 = vsub.f32 %v1286, %v2182
    %v2294 = vsub.f32 %v1288, %v2182
    %v2295 = vsub.f32 %v1290, %v2182
    %v2296 = vsub.f32 %v1292, %v2182
    %v2297 = vsub.f32 %v1294, %v2182
    %v2298 = vsub.f32 %v1296, %v2182
    %v2299 = vsub.f32 %v1298, %v2182
    %v2300 = vsub.f32 %v1300, %v2182
    %v2301 = vsub.f32 %v1302, %v2182
    %v2302 = vsub.f32 %v1304, %v2182
    %v2303 = vsub.f32 %v1306, %v2182
    %v2304 = vsub.f32 %v1308, %v2182
    %v2305 = vsub.f32 %v1310, %v2182
    %v2306 = vsub.f32 %v1312, %v2182
    %v2307 = vsub.f32 %v1314, %v2186
    %v2308 = vsub.f32 %v1316, %v2186
    %v2309 = vsub.f32 %v1318, %v2186
    %v2310 = vsub.f32 %v1320, %v2186
    %v2311 = vsub.f32 %v1322, %v2186
    %v2312 = vsub.f32 %v1324, %v2186
    %v2313 = vsub.f32 %v1326, %v2186
    %v2314 = vsub.f32 %v1328, %v2186
    %v2315 = vsub.f32 %v1330, %v2186
    %v2316 = vsub.f32 %v1332, %v2186
    %v2317 = vsub.f32 %v1334, %v2186
    %v2318 = vsub.f32 %v1336, %v2186
    %v2319 = vsub.f32 %v1338, %v2186
    %v2320 = vsub.f32 %v1340, %v2186
    %v2321 = vsub.f32 %v1342, %v2186
    %v2322 = vsub.f32 %v1344, %v2186
    %v2323 = vmul.f32 %v2195, 1.442695
    %v2324 = vpow.pop %v2323
    %v2325 = vmul.f32 %v2196, 1.442695
    %v2326 = vpow.pop %v2325
    %v2327 = vmul.f32 %v2197, 1.442695
    %v2328 = vpow.pop %v2327
    %v2329 = vmul.f32 %v2198, 1.442695
    %v2330 = vpow.pop %v2329
    %v2331 = vmul.f32 %v2199, 1.442695
    %v2332 = vpow.pop %v2331
    %v2333 = vmul.f32 %v2200, 1.442695
    %v2334 = vpow.pop %v2333
    %v2335 = vmul.f32 %v2201, 1.442695
    %v2336 = vpow.pop %v2335
    %v2337 = vmul.f32 %v2202, 1.442695
    %v2338 = vpow.pop %v2337
    %v2339 = vmul.f32 %v2203, 1.442695
    %v2340 = vpow.pop %v2339
    %v2341 = vmul.f32 %v2204, 1.442695
    %v2342 = vpow.pop %v2341
    %v2343 = vmul.f32 %v2205, 1.442695
    %v2344 = vpow.pop %v2343
    %v2345 = vmul.f32 %v2206, 1.442695
    %v2346 = vpow.pop %v2345
    %v2347 = vmul.f32 %v2207, 1.442695
    %v2348 = vpow.pop %v2347
    %v2349 = vmul.f32 %v2208, 1.442695
    %v2350 = vpow.pop %v2349
    %v2351 = vmul.f32 %v2209, 1.442695
    %v2352 = vpow.pop %v2351
    %v2353 = vmul.f32 %v2210, 1.442695
    %v2354 = vpow.pop %v2353
    %v2355 = vmul.f32 %v2211, 1.442695
    %v2356 = vpow.pop %v2355
    %v2357 = vmul.f32 %v2212, 1.442695
    %v2358 = vpow.pop %v2357
    %v2359 = vmul.f32 %v2213, 1.442695
    %v2360 = vpow.pop %v2359
    %v2361 = vmul.f32 %v2214, 1.442695
    %v2362 = vpow.pop %v2361
    %v2363 = vmul.f32 %v2215, 1.442695
    %v2364 = vpow.pop %v2363
    %v2365 = vmul.f32 %v2216, 1.442695
    %v2366 = vpow.pop %v2365
    %v2367 = vmul.f32 %v2217, 1.442695
    %v2368 = vpow.pop %v2367
    %v2369 = vmul.f32 %v2218, 1.442695
    %v2370 = vpow.pop %v2369
    %v2371 = vmul.f32 %v2219, 1.442695
    %v2372 = vpow.pop %v2371
    %v2373 = vmul.f32 %v2220, 1.442695
    %v2374 = vpow.pop %v2373
    %v2375 = vmul.f32 %v2221, 1.442695
    %v2376 = vpow.pop %v2375
    %v2377 = vmul.f32 %v2222, 1.442695
    %v2378 = vpow.pop %v2377
    %v2379 = vmul.f32 %v2223, 1.442695
    %v2380 = vpow.pop %v2379
    %v2381 = vmul.f32 %v2224, 1.442695
    %v2382 = vpow.pop %v2381
    %v2383 = vmul.f32 %v2225, 1.442695
    %v2384 = vpow.pop %v2383
    %v2385 = vmul.f32 %v2226, 1.442695
    %v2386 = vpow.pop %v2385
    %v2387 = vmul.f32 %v2227, 1.442695
    %v2388 = vpow.pop %v2387
    %v2389 = vmul.f32 %v2228, 1.442695
    %v2390 = vpow.pop %v2389
    %v2391 = vmul.f32 %v2229, 1.442695
    %v2392 = vpow.pop %v2391
    %v2393 = vmul.f32 %v2230, 1.442695
    %v2394 = vpow.pop %v2393
    %v2395 = vmul.f32 %v2231, 1.442695
    %v2396 = vpow.pop %v2395
    %v2397 = vmul.f32 %v2232, 1.442695
    %v2398 = vpow.pop %v2397
    %v2399 = vmul.f32 %v2233, 1.442695
    %v2400 = vpow.pop %v2399
    %v2401 = vmul.f32 %v2234, 1.442695
    %v2402 = vpow.pop %v2401
    %v2403 = vmul.f32 %v2235, 1.442695
    %v2404 = vpow.pop %v2403
    %v2405 = vmul.f32 %v2236, 1.442695
    %v2406 = vpow.pop %v2405
    %v2407 = vmul.f32 %v2237, 1.442695
    %v2408 = vpow.pop %v2407
    %v2409 = vmul.f32 %v2238, 1.442695
    %v2410 = vpow.pop %v2409
    %v2411 = vmul.f32 %v2239, 1.442695
    %v2412 = vpow.pop %v2411
    %v2413 = vmul.f32 %v2240, 1.442695
    %v2414 = vpow.pop %v2413
    %v2415 = vmul.f32 %v2241, 1.442695
    %v2416 = vpow.pop %v2415
    %v2417 = vmul.f32 %v2242, 1.442695
    %v2418 = vpow.pop %v2417
    %v2419 = vmul.f32 %v2243, 1.442695
    %v2420 = vpow.pop %v2419
    %v2421 = vmul.f32 %v2244, 1.442695
    %v2422 = vpow.pop %v2421
    %v2423 = vmul.f32 %v2245, 1.442695
    %v2424 = vpow.pop %v2423
    %v2425 = vmul.f32 %v2246, 1.442695
    %v2426 = vpow.pop %v2425
    %v2427 = vmul.f32 %v2247, 1.442695
    %v2428 = vpow.pop %v2427
    %v2429 = vmul.f32 %v2248, 1.442695
    %v2430 = vpow.pop %v2429
    %v2431 = vmul.f32 %v2249, 1.442695
    %v2432 = vpow.pop %v2431
    %v2433 = vmul.f32 %v2250, 1.442695
    %v2434 = vpow.pop %v2433
    %v2435 = vmul.f32 %v2251, 1.442695
    %v2436 = vpow.pop %v2435
    %v2437 = vmul.f32 %v2252, 1.442695
    %v2438 = vpow.pop %v2437
    %v2439 = vmul.f32 %v2253, 1.442695
    %v2440 = vpow.pop %v2439
    %v2441 = vmul.f32 %v2254, 1.442695
    %v2442 = vpow.pop %v2441
    %v2443 = vmul.f32 %v2255, 1.442695
    %v2444 = vpow.pop %v2443
    %v2445 = vmul.f32 %v2256, 1.442695
    %v2446 = vpow.pop %v2445
    %v2447 = vmul.f32 %v2257, 1.442695
    %v2448 = vpow.pop %v2447
    %v2449 = vmul.f32 %v2258, 1.442695
    %v2450 = vpow.pop %v2449
    %v2451 = vmul.f32 %v2259, 1.442695
    %v2452 = vpow.pop %v2451
    %v2453 = vmul.f32 %v2260, 1.442695
    %v2454 = vpow.pop %v2453
    %v2455 = vmul.f32 %v2261, 1.442695
    %v2456 = vpow.pop %v2455
    %v2457 = vmul.f32 %v2262, 1.442695
    %v2458 = vpow.pop %v2457
    %v2459 = vmul.f32 %v2263, 1.442695
    %v2460 = vpow.pop %v2459
    %v2461 = vmul.f32 %v2264, 1.442695
    %v2462 = vpow.pop %v2461
    %v2463 = vmul.f32 %v2265, 1.442695
    %v2464 = vpow.pop %v2463
    %v2465 = vmul.f32 %v2266, 1.442695
    %v2466 = vpow.pop %v2465
    %v2467 = vmul.f32 %v2267, 1.442695
    %v2468 = vpow.pop %v2467
    %v2469 = vmul.f32 %v2268, 1.442695
    %v2470 = vpow.pop %v2469
    %v2471 = vmul.f32 %v2269, 1.442695
    %v2472 = vpow.pop %v2471
    %v2473 = vmul.f32 %v2270, 1.442695
    %v2474 = vpow.pop %v2473
    %v2475 = vmul.f32 %v2271, 1.442695
    %v2476 = vpow.pop %v2475
    %v2477 = vmul.f32 %v2272, 1.442695
    %v2478 = vpow.pop %v2477
    %v2479 = vmul.f32 %v2273, 1.442695
    %v2480 = vpow.pop %v2479
    %v2481 = vmul.f32 %v2274, 1.442695
    %v2482 = vpow.pop %v2481
    %v2483 = vmul.f32 %v2275, 1.442695
    %v2484 = vpow.pop %v2483
    %v2485 = vmul.f32 %v2276, 1.442695
    %v2486 = vpow.pop %v2485
    %v2487 = vmul.f32 %v2277, 1.442695
    %v2488 = vpow.pop %v2487
    %v2489 = vmul.f32 %v2278, 1.442695
    %v2490 = vpow.pop %v2489
    %v2491 = vmul.f32 %v2279, 1.442695
    %v2492 = vpow.pop %v2491
    %v2493 = vmul.f32 %v2280, 1.442695
    %v2494 = vpow.pop %v2493
    %v2495 = vmul.f32 %v2281, 1.442695
    %v2496 = vpow.pop %v2495
    %v2497 = vmul.f32 %v2282, 1.442695
    %v2498 = vpow.pop %v2497
    %v2499 = vmul.f32 %v2283, 1.442695
    %v2500 = vpow.pop %v2499
    %v2501 = vmul.f32 %v2284, 1.442695
    %v2502 = vpow.pop %v2501
    %v2503 = vmul.f32 %v2285, 1.442695
    %v2504 = vpow.pop %v2503
    %v2505 = vmul.f32 %v2286, 1.442695
    %v2506 = vpow.pop %v2505
    %v2507 = vmul.f32 %v2287, 1.442695
    %v2508 = vpow.pop %v2507
    %v2509 = vmul.f32 %v2288, 1.442695
    %v2510 = vpow.pop %v2509
    %v2511 = vmul.f32 %v2289, 1.442695
    %v2512 = vpow.pop %v2511
    %v2513 = vmul.f32 %v2290, 1.442695
    %v2514 = vpow.pop %v2513
    %v2515 = vmul.f32 %v2291, 1.442695
    %v2516 = vpow.pop %v2515
    %v2517 = vmul.f32 %v2292, 1.442695
    %v2518 = vpow.pop %v2517
    %v2519 = vmul.f32 %v2293, 1.442695
    %v2520 = vpow.pop %v2519
    %v2521 = vmul.f32 %v2294, 1.442695
    %v2522 = vpow.pop %v2521
    %v2523 = vmul.f32 %v2295, 1.442695
    %v2524 = vpow.pop %v2523
    %v2525 = vmul.f32 %v2296, 1.442695
    %v2526 = vpow.pop %v2525
    %v2527 = vmul.f32 %v2297, 1.442695
    %v2528 = vpow.pop %v2527
    %v2529 = vmul.f32 %v2298, 1.442695
    %v2530 = vpow.pop %v2529
    %v2531 = vmul.f32 %v2299, 1.442695
    %v2532 = vpow.pop %v2531
    %v2533 = vmul.f32 %v2300, 1.442695
    %v2534 = vpow.pop %v2533
    %v2535 = vmul.f32 %v2301, 1.442695
    %v2536 = vpow.pop %v2535
    %v2537 = vmul.f32 %v2302, 1.442695
    %v2538 = vpow.pop %v2537
    %v2539 = vmul.f32 %v2303, 1.442695
    %v2540 = vpow.pop %v2539
    %v2541 = vmul.f32 %v2304, 1.442695
    %v2542 = vpow.pop %v2541
    %v2543 = vmul.f32 %v2305, 1.442695
    %v2544 = vpow.pop %v2543
    %v2545 = vmul.f32 %v2306, 1.442695
    %v2546 = vpow.pop %v2545
    %v2547 = vmul.f32 %v2307, 1.442695
    %v2548 = vpow.pop %v2547
    %v2549 = vmul.f32 %v2308, 1.442695
    %v2550 = vpow.pop %v2549
    %v2551 = vmul.f32 %v2309, 1.442695
    %v2552 = vpow.pop %v2551
    %v2553 = vmul.f32 %v2310, 1.442695
    %v2554 = vpow.pop %v2553
    %v2555 = vmul.f32 %v2311, 1.442695
    %v2556 = vpow.pop %v2555
    %v2557 = vmul.f32 %v2312, 1.442695
    %v2558 = vpow.pop %v2557
    %v2559 = vmul.f32 %v2313, 1.442695
    %v2560 = vpow.pop %v2559
    %v2561 = vmul.f32 %v2314, 1.442695
    %v2562 = vpow.pop %v2561
    %v2563 = vmul.f32 %v2315, 1.442695
    %v2564 = vpow.pop %v2563
    %v2565 = vmul.f32 %v2316, 1.442695
    %v2566 = vpow.pop %v2565
    %v2567 = vmul.f32 %v2317, 1.442695
    %v2568 = vpow.pop %v2567
    %v2569 = vmul.f32 %v2318, 1.442695
    %v2570 = vpow.pop %v2569
    %v2571 = vmul.f32 %v2319, 1.442695
    %v2572 = vpow.pop %v2571
    %v2573 = vmul.f32 %v2320, 1.442695
    %v2574 = vpow.pop %v2573
    %v2575 = vmul.f32 %v2321, 1.442695
    %v2576 = vpow.pop %v2575
    %v2577 = vmul.f32 %v2322, 1.442695
    %v2578 = vpow.pop %v2577
    %2707 = vset.pattern.permute.xlu0 0
    %2708 = vperm.xlu0 %2707, %v2324
    %v2709 = vpop.permute.xlu0 %2708
    %2710 = vset.pattern.permute.xlu0 0
    %2711 = vperm.xlu0 %2710, %v2326
    %v2712 = vpop.permute.xlu0 %2711
    %2713 = vset.pattern.permute.xlu0 0
    %2714 = vperm.xlu0 %2713, %v2328
    %v2715 = vpop.permute.xlu0 %2714
    %2716 = vset.pattern.permute.xlu0 0
    %2717 = vperm.xlu0 %2716, %v2330
    %v2718 = vpop.permute.xlu0 %2717
    %2719 = vset.pattern.permute.xlu0 0
    %2720 = vperm.xlu0 %2719, %v2332
    %v2721 = vpop.permute.xlu0 %2720
    %2722 = vset.pattern.permute.xlu0 0
    %2723 = vperm.xlu0 %2722, %v2334
    %v2724 = vpop.permute.xlu0 %2723
    %2725 = vset.pattern.permute.xlu0 0
    %2726 = vperm.xlu0 %2725, %v2336
    %v2727 = vpop.permute.xlu0 %2726
    %2728 = vset.pattern.permute.xlu0 0
    %2729 = vperm.xlu0 %2728, %v2338
    %v2730 = vpop.permute.xlu0 %2729
    %2731 = vset.pattern.permute.xlu0 0
    %2732 = vperm.xlu0 %2731, %v2340
    %v2733 = vpop.permute.xlu0 %2732
    %2734 = vset.pattern.permute.xlu0 0
    %2735 = vperm.xlu0 %2734, %v2342
    %v2736 = vpop.permute.xlu0 %2735
    %2737 = vset.pattern.permute.xlu0 0
    %2738 = vperm.xlu0 %2737, %v2344
    %v2739 = vpop.permute.xlu0 %2738
    %2740 = vset.pattern.permute.xlu0 0
    %2741 = vperm.xlu0 %2740, %v2346
    %v2742 = vpop.permute.xlu0 %2741
    %2743 = vset.pattern.permute.xlu0 0
    %2744 = vperm.xlu0 %2743, %v2348
    %v2745 = vpop.permute.xlu0 %2744
    %2746 = vset.pattern.permute.xlu0 0
    %2747 = vperm.xlu0 %2746, %v2350
    %v2748 = vpop.permute.xlu0 %2747
    %2749 = vset.pattern.permute.xlu0 0
    %2750 = vperm.xlu0 %2749, %v2352
    %v2751 = vpop.permute.xlu0 %2750
    %2752 = vset.pattern.permute.xlu0 0
    %2753 = vperm.xlu0 %2752, %v2354
    %v2754 = vpop.permute.xlu0 %2753
    %2755 = vset.pattern.permute.xlu0 0
    %2756 = vperm.xlu0 %2755, %v2356
    %v2757 = vpop.permute.xlu0 %2756
    %2758 = vset.pattern.permute.xlu0 0
    %2759 = vperm.xlu0 %2758, %v2358
    %v2760 = vpop.permute.xlu0 %2759
    %2761 = vset.pattern.permute.xlu0 0
    %2762 = vperm.xlu0 %2761, %v2360
    %v2763 = vpop.permute.xlu0 %2762
    %2764 = vset.pattern.permute.xlu0 0
    %2765 = vperm.xlu0 %2764, %v2362
    %v2766 = vpop.permute.xlu0 %2765
    %2767 = vset.pattern.permute.xlu0 0
    %2768 = vperm.xlu0 %2767, %v2364
    %v2769 = vpop.permute.xlu0 %2768
    %2770 = vset.pattern.permute.xlu0 0
    %2771 = vperm.xlu0 %2770, %v2366
    %v2772 = vpop.permute.xlu0 %2771
    %2773 = vset.pattern.permute.xlu0 0
    %2774 = vperm.xlu0 %2773, %v2368
    %v2775 = vpop.permute.xlu0 %2774
    %2776 = vset.pattern.permute.xlu0 0
    %2777 = vperm.xlu0 %2776, %v2370
    %v2778 = vpop.permute.xlu0 %2777
    %2779 = vset.pattern.permute.xlu0 0
    %2780 = vperm.xlu0 %2779, %v2372
    %v2781 = vpop.permute.xlu0 %2780
    %2782 = vset.pattern.permute.xlu0 0
    %2783 = vperm.xlu0 %2782, %v2374
    %v2784 = vpop.permute.xlu0 %2783
    %2785 = vset.pattern.permute.xlu0 0
    %2786 = vperm.xlu0 %2785, %v2376
    %v2787 = vpop.permute.xlu0 %2786
    %2788 = vset.pattern.permute.xlu0 0
    %2789 = vperm.xlu0 %2788, %v2378
    %v2790 = vpop.permute.xlu0 %2789
    %2791 = vset.pattern.permute.xlu0 0
    %2792 = vperm.xlu0 %2791, %v2380
    %v2793 = vpop.permute.xlu0 %2792
    %2794 = vset.pattern.permute.xlu0 0
    %2795 = vperm.xlu0 %2794, %v2382
    %v2796 = vpop.permute.xlu0 %2795
    %2797 = vset.pattern.permute.xlu0 0
    %2798 = vperm.xlu0 %2797, %v2384
    %v2799 = vpop.permute.xlu0 %2798
    %2800 = vset.pattern.permute.xlu0 0
    %2801 = vperm.xlu0 %2800, %v2386
    %v2802 = vpop.permute.xlu0 %2801
    %2803 = vset.pattern.permute.xlu0 0
    %2804 = vperm.xlu0 %2803, %v2388
    %v2805 = vpop.permute.xlu0 %2804
    %2806 = vset.pattern.permute.xlu0 0
    %2807 = vperm.xlu0 %2806, %v2390
    %v2808 = vpop.permute.xlu0 %2807
    %2809 = vset.pattern.permute.xlu0 0
    %2810 = vperm.xlu0 %2809, %v2392
    %v2811 = vpop.permute.xlu0 %2810
    %2812 = vset.pattern.permute.xlu0 0
    %2813 = vperm.xlu0 %2812, %v2394
    %v2814 = vpop.permute.xlu0 %2813
    %2815 = vset.pattern.permute.xlu0 0
    %2816 = vperm.xlu0 %2815, %v2396
    %v2817 = vpop.permute.xlu0 %2816
    %2818 = vset.pattern.permute.xlu0 0
    %2819 = vperm.xlu0 %2818, %v2398
    %v2820 = vpop.permute.xlu0 %2819
    %2821 = vset.pattern.permute.xlu0 0
    %2822 = vperm.xlu0 %2821, %v2400
    %v2823 = vpop.permute.xlu0 %2822
    %2824 = vset.pattern.permute.xlu0 0
    %2825 = vperm.xlu0 %2824, %v2402
    %v2826 = vpop.permute.xlu0 %2825
    %2827 = vset.pattern.permute.xlu0 0
    %2828 = vperm.xlu0 %2827, %v2404
    %v2829 = vpop.permute.xlu0 %2828
    %2830 = vset.pattern.permute.xlu0 0
    %2831 = vperm.xlu0 %2830, %v2406
    %v2832 = vpop.permute.xlu0 %2831
    %2833 = vset.pattern.permute.xlu0 0
    %2834 = vperm.xlu0 %2833, %v2408
    %v2835 = vpop.permute.xlu0 %2834
    %2836 = vset.pattern.permute.xlu0 0
    %2837 = vperm.xlu0 %2836, %v2410
    %v2838 = vpop.permute.xlu0 %2837
    %2839 = vset.pattern.permute.xlu0 0
    %2840 = vperm.xlu0 %2839, %v2412
    %v2841 = vpop.permute.xlu0 %2840
    %2842 = vset.pattern.permute.xlu0 0
    %2843 = vperm.xlu0 %2842, %v2414
    %v2844 = vpop.permute.xlu0 %2843
    %2845 = vset.pattern.permute.xlu0 0
    %2846 = vperm.xlu0 %2845, %v2416
    %v2847 = vpop.permute.xlu0 %2846
    %2848 = vset.pattern.permute.xlu0 0
    %2849 = vperm.xlu0 %2848, %v2418
    %v2850 = vpop.permute.xlu0 %2849
    %2851 = vset.pattern.permute.xlu0 0
    %2852 = vperm.xlu0 %2851, %v2420
    %v2853 = vpop.permute.xlu0 %2852
    %2854 = vset.pattern.permute.xlu0 0
    %2855 = vperm.xlu0 %2854, %v2422
    %v2856 = vpop.permute.xlu0 %2855
    %2857 = vset.pattern.permute.xlu0 0
    %2858 = vperm.xlu0 %2857, %v2424
    %v2859 = vpop.permute.xlu0 %2858
    %2860 = vset.pattern.permute.xlu0 0
    %2861 = vperm.xlu0 %2860, %v2426
    %v2862 = vpop.permute.xlu0 %2861
    %2863 = vset.pattern.permute.xlu0 0
    %2864 = vperm.xlu0 %2863, %v2428
    %v2865 = vpop.permute.xlu0 %2864
    %2866 = vset.pattern.permute.xlu0 0
    %2867 = vperm.xlu0 %2866, %v2430
    %v2868 = vpop.permute.xlu0 %2867
    %2869 = vset.pattern.permute.xlu0 0
    %2870 = vperm.xlu0 %2869, %v2432
    %v2871 = vpop.permute.xlu0 %2870
    %2872 = vset.pattern.permute.xlu0 0
    %2873 = vperm.xlu0 %2872, %v2434
    %v2874 = vpop.permute.xlu0 %2873
    %2875 = vset.pattern.permute.xlu0 0
    %2876 = vperm.xlu0 %2875, %v2436
    %v2877 = vpop.permute.xlu0 %2876
    %2878 = vset.pattern.permute.xlu0 0
    %2879 = vperm.xlu0 %2878, %v2438
    %v2880 = vpop.permute.xlu0 %2879
    %2881 = vset.pattern.permute.xlu0 0
    %2882 = vperm.xlu0 %2881, %v2440
    %v2883 = vpop.permute.xlu0 %2882
    %2884 = vset.pattern.permute.xlu0 0
    %2885 = vperm.xlu0 %2884, %v2442
    %v2886 = vpop.permute.xlu0 %2885
    %2887 = vset.pattern.permute.xlu0 0
    %2888 = vperm.xlu0 %2887, %v2444
    %v2889 = vpop.permute.xlu0 %2888
    %2890 = vset.pattern.permute.xlu0 0
    %2891 = vperm.xlu0 %2890, %v2446
    %v2892 = vpop.permute.xlu0 %2891
    %2893 = vset.pattern.permute.xlu0 0
    %2894 = vperm.xlu0 %2893, %v2448
    %v2895 = vpop.permute.xlu0 %2894
    %2896 = vset.pattern.permute.xlu0 0
    %2897 = vperm.xlu0 %2896, %v2450
    %v2898 = vpop.permute.xlu0 %2897
    %2899 = vset.pattern.permute.xlu0 0
    %2900 = vperm.xlu0 %2899, %v2452
    %v2901 = vpop.permute.xlu0 %2900
    %2902 = vset.pattern.permute.xlu0 0
    %2903 = vperm.xlu0 %2902, %v2454
    %v2904 = vpop.permute.xlu0 %2903
    %2905 = vset.pattern.permute.xlu0 0
    %2906 = vperm.xlu0 %2905, %v2456
    %v2907 = vpop.permute.xlu0 %2906
    %2908 = vset.pattern.permute.xlu0 0
    %2909 = vperm.xlu0 %2908, %v2458
    %v2910 = vpop.permute.xlu0 %2909
    %2911 = vset.pattern.permute.xlu0 0
    %2912 = vperm.xlu0 %2911, %v2460
    %v2913 = vpop.permute.xlu0 %2912
    %2914 = vset.pattern.permute.xlu0 0
    %2915 = vperm.xlu0 %2914, %v2462
    %v2916 = vpop.permute.xlu0 %2915
    %2917 = vset.pattern.permute.xlu0 0
    %2918 = vperm.xlu0 %2917, %v2464
    %v2919 = vpop.permute.xlu0 %2918
    %2920 = vset.pattern.permute.xlu0 0
    %2921 = vperm.xlu0 %2920, %v2466
    %v2922 = vpop.permute.xlu0 %2921
    %2923 = vset.pattern.permute.xlu0 0
    %2924 = vperm.xlu0 %2923, %v2468
    %v2925 = vpop.permute.xlu0 %2924
    %2926 = vset.pattern.permute.xlu0 0
    %2927 = vperm.xlu0 %2926, %v2470
    %v2928 = vpop.permute.xlu0 %2927
    %2929 = vset.pattern.permute.xlu0 0
    %2930 = vperm.xlu0 %2929, %v2472
    %v2931 = vpop.permute.xlu0 %2930
    %2932 = vset.pattern.permute.xlu0 0
    %2933 = vperm.xlu0 %2932, %v2474
    %v2934 = vpop.permute.xlu0 %2933
    %2935 = vset.pattern.permute.xlu0 0
    %2936 = vperm.xlu0 %2935, %v2476
    %v2937 = vpop.permute.xlu0 %2936
    %2938 = vset.pattern.permute.xlu0 0
    %2939 = vperm.xlu0 %2938, %v2478
    %v2940 = vpop.permute.xlu0 %2939
    %2941 = vset.pattern.permute.xlu0 0
    %2942 = vperm.xlu0 %2941, %v2480
    %v2943 = vpop.permute.xlu0 %2942
    %2944 = vset.pattern.permute.xlu0 0
    %2945 = vperm.xlu0 %2944, %v2482
    %v2946 = vpop.permute.xlu0 %2945
    %2947 = vset.pattern.permute.xlu0 0
    %2948 = vperm.xlu0 %2947, %v2484
    %v2949 = vpop.permute.xlu0 %2948
    %2950 = vset.pattern.permute.xlu0 0
    %2951 = vperm.xlu0 %2950, %v2486
    %v2952 = vpop.permute.xlu0 %2951
    %2953 = vset.pattern.permute.xlu0 0
    %2954 = vperm.xlu0 %2953, %v2488
    %v2955 = vpop.permute.xlu0 %2954
    %2956 = vset.pattern.permute.xlu0 0
    %2957 = vperm.xlu0 %2956, %v2490
    %v2958 = vpop.permute.xlu0 %2957
    %2959 = vset.pattern.permute.xlu0 0
    %2960 = vperm.xlu0 %2959, %v2492
    %v2961 = vpop.permute.xlu0 %2960
    %2962 = vset.pattern.permute.xlu0 0
    %2963 = vperm.xlu0 %2962, %v2494
    %v2964 = vpop.permute.xlu0 %2963
    %2965 = vset.pattern.permute.xlu0 0
    %2966 = vperm.xlu0 %2965, %v2496
    %v2967 = vpop.permute.xlu0 %2966
    %2968 = vset.pattern.permute.xlu0 0
    %2969 = vperm.xlu0 %2968, %v2498
    %v2970 = vpop.permute.xlu0 %2969
    %2971 = vset.pattern.permute.xlu0 0
    %2972 = vperm.xlu0 %2971, %v2500
    %v2973 = vpop.permute.xlu0 %2972
    %2974 = vset.pattern.permute.xlu0 0
    %2975 = vperm.xlu0 %2974, %v2502
    %v2976 = vpop.permute.xlu0 %2975
    %2977 = vset.pattern.permute.xlu0 0
    %2978 = vperm.xlu0 %2977, %v2504
    %v2979 = vpop.permute.xlu0 %2978
    %2980 = vset.pattern.permute.xlu0 0
    %2981 = vperm.xlu0 %2980, %v2506
    %v2982 = vpop.permute.xlu0 %2981
    %2983 = vset.pattern.permute.xlu0 0
    %2984 = vperm.xlu0 %2983, %v2508
    %v2985 = vpop.permute.xlu0 %2984
    %2986 = vset.pattern.permute.xlu0 0
    %2987 = vperm.xlu0 %2986, %v2510
    %v2988 = vpop.permute.xlu0 %2987
    %2989 = vset.pattern.permute.xlu0 0
    %2990 = vperm.xlu0 %2989, %v2512
    %v2991 = vpop.permute.xlu0 %2990
    %2992 = vset.pattern.permute.xlu0 0
    %2993 = vperm.xlu0 %2992, %v2514
    %v2994 = vpop.permute.xlu0 %2993
    %2995 = vset.pattern.permute.xlu0 0
    %2996 = vperm.xlu0 %2995, %v2516
    %v2997 = vpop.permute.xlu0 %2996
    %2998 = vset.pattern.permute.xlu0 0
    %2999 = vperm.xlu0 %2998, %v2518
    %v3000 = vpop.permute.xlu0 %2999
    %3001 = vset.pattern.permute.xlu0 0
    %3002 = vperm.xlu0 %3001, %v2520
    %v3003 = vpop.permute.xlu0 %3002
    %3004 = vset.pattern.permute.xlu0 0
    %3005 = vperm.xlu0 %3004, %v2522
    %v3006 = vpop.permute.xlu0 %3005
    %3007 = vset.pattern.permute.xlu0 0
    %3008 = vperm.xlu0 %3007, %v2524
    %v3009 = vpop.permute.xlu0 %3008
    %3010 = vset.pattern.permute.xlu0 0
    %3011 = vperm.xlu0 %3010, %v2526
    %v3012 = vpop.permute.xlu0 %3011
    %3013 = vset.pattern.permute.xlu0 0
    %3014 = vperm.xlu0 %3013, %v2528
    %v3015 = vpop.permute.xlu0 %3014
    %3016 = vset.pattern.permute.xlu0 0
    %3017 = vperm.xlu0 %3016, %v2530
    %v3018 = vpop.permute.xlu0 %3017
    %3019 = vset.pattern.permute.xlu0 0
    %3020 = vperm.xlu0 %3019, %v2532
    %v3021 = vpop.permute.xlu0 %3020
    %3022 = vset.pattern.permute.xlu0 0
    %3023 = vperm.xlu0 %3022, %v2534
    %v3024 = vpop.permute.xlu0 %3023
    %3025 = vset.pattern.permute.xlu0 0
    %3026 = vperm.xlu0 %3025, %v2536
    %v3027 = vpop.permute.xlu0 %3026
    %3028 = vset.pattern.permute.xlu0 0
    %3029 = vperm.xlu0 %3028, %v2538
    %v3030 = vpop.permute.xlu0 %3029
    %3031 = vset.pattern.permute.xlu0 0
    %3032 = vperm.xlu0 %3031, %v2540
    %v3033 = vpop.permute.xlu0 %3032
    %3034 = vset.pattern.permute.xlu0 0
    %3035 = vperm.xlu0 %3034, %v2542
    %v3036 = vpop.permute.xlu0 %3035
    %3037 = vset.pattern.permute.xlu0 0
    %3038 = vperm.xlu0 %3037, %v2544
    %v3039 = vpop.permute.xlu0 %3038
    %3040 = vset.pattern.permute.xlu0 0
    %3041 = vperm.xlu0 %3040, %v2546
    %v3042 = vpop.permute.xlu0 %3041
    %3043 = vset.pattern.permute.xlu0 0
    %3044 = vperm.xlu0 %3043, %v2548
    %v3045 = vpop.permute.xlu0 %3044
    %3046 = vset.pattern.permute.xlu0 0
    %3047 = vperm.xlu0 %3046, %v2550
    %v3048 = vpop.permute.xlu0 %3047
    %3049 = vset.pattern.permute.xlu0 0
    %3050 = vperm.xlu0 %3049, %v2552
    %v3051 = vpop.permute.xlu0 %3050
    %3052 = vset.pattern.permute.xlu0 0
    %3053 = vperm.xlu0 %3052, %v2554
    %v3054 = vpop.permute.xlu0 %3053
    %3055 = vset.pattern.permute.xlu0 0
    %3056 = vperm.xlu0 %3055, %v2556
    %v3057 = vpop.permute.xlu0 %3056
    %3058 = vset.pattern.permute.xlu0 0
    %3059 = vperm.xlu0 %3058, %v2558
    %v3060 = vpop.permute.xlu0 %3059
    %3061 = vset.pattern.permute.xlu0 0
    %3062 = vperm.xlu0 %3061, %v2560
    %v3063 = vpop.permute.xlu0 %3062
    %3064 = vset.pattern.permute.xlu0 0
    %3065 = vperm.xlu0 %3064, %v2562
    %v3066 = vpop.permute.xlu0 %3065
    %3067 = vset.pattern.permute.xlu0 0
    %3068 = vperm.xlu0 %3067, %v2564
    %v3069 = vpop.permute.xlu0 %3068
    %3070 = vset.pattern.permute.xlu0 0
    %3071 = vperm.xlu0 %3070, %v2566
    %v3072 = vpop.permute.xlu0 %3071
    %3073 = vset.pattern.permute.xlu0 0
    %3074 = vperm.xlu0 %3073, %v2568
    %v3075 = vpop.permute.xlu0 %3074
    %3076 = vset.pattern.permute.xlu0 0
    %3077 = vperm.xlu0 %3076, %v2570
    %v3078 = vpop.permute.xlu0 %3077
    %3079 = vset.pattern.permute.xlu0 0
    %3080 = vperm.xlu0 %3079, %v2572
    %v3081 = vpop.permute.xlu0 %3080
    %3082 = vset.pattern.permute.xlu0 0
    %3083 = vperm.xlu0 %3082, %v2574
    %v3084 = vpop.permute.xlu0 %3083
    %3085 = vset.pattern.permute.xlu0 0
    %3086 = vperm.xlu0 %3085, %v2576
    %v3087 = vpop.permute.xlu0 %3086
    %3088 = vset.pattern.permute.xlu0 0
    %3089 = vperm.xlu0 %3088, %v2578
    %v3090 = vpop.permute.xlu0 %3089
    %v3091 = vlaneseq
    %v3092 = vshrl.u32 %v3091, 7
    %v3093 = vsub.s32 %v1474, %v3092
    %v3094 = vrot.slane %v2709, %v3093
    %v3095 = vlaneseq
    %v3096 = vshrl.u32 %v3095, 7
    %v3097 = vsub.s32 %v1479, %v3096
    %v3098 = vrot.slane %v2712, %v3097
    %v3099 = vsel %vm1484, %v3098, %v3094
    %v3100 = vlaneseq
    %v3101 = vshrl.u32 %v3100, 7
    %v3102 = vsub.s32 %v1486, %v3101
    %v3103 = vrot.slane %v2715, %v3102
    %v3104 = vsel %vm1491, %v3103, %v3099
    %v3105 = vlaneseq
    %v3106 = vshrl.u32 %v3105, 7
    %v3107 = vsub.s32 %v1493, %v3106
    %v3108 = vrot.slane %v2718, %v3107
    %v3109 = vsel %vm1498, %v3108, %v3104
    %v3110 = vlaneseq
    %v3111 = vshrl.u32 %v3110, 7
    %v3112 = vsub.s32 %v1500, %v3111
    %v3113 = vrot.slane %v2721, %v3112
    %v3114 = vsel %vm1505, %v3113, %v3109
    %v3115 = vlaneseq
    %v3116 = vshrl.u32 %v3115, 7
    %v3117 = vsub.s32 %v1507, %v3116
    %v3118 = vrot.slane %v2724, %v3117
    %v3119 = vsel %vm1512, %v3118, %v3114
    %v3120 = vlaneseq
    %v3121 = vshrl.u32 %v3120, 7
    %v3122 = vsub.s32 %v1514, %v3121
    %v3123 = vrot.slane %v2727, %v3122
    %v3124 = vsel %vm1519, %v3123, %v3119
    %v3125 = vlaneseq
    %v3126 = vshrl.u32 %v3125, 7
    %v3127 = vsub.s32 %v1521, %v3126
    %v3128 = vrot.slane %v2730, %v3127
    %v3129 = vsel %vm1526, %v3128, %v3124
    %v3130 = vlaneseq
    %v3131 = vshrl.u32 %v3130, 7
    %v3132 = vsub.s32 %v1528, %v3131
    %v3133 = vrot.slane %v2733, %v3132
    %v3134 = vsel %vm1533, %v3133, %v3129
    %v3135 = vlaneseq
    %v3136 = vshrl.u32 %v3135, 7
    %v3137 = vsub.s32 %v1535, %v3136
    %v3138 = vrot.slane %v2736, %v3137
    %v3139 = vsel %vm1540, %v3138, %v3134
    %v3140 = vlaneseq
    %v3141 = vshrl.u32 %v3140, 7
    %v3142 = vsub.s32 %v1542, %v3141
    %v3143 = vrot.slane %v2739, %v3142
    %v3144 = vsel %vm1547, %v3143, %v3139
    %v3145 = vlaneseq
    %v3146 = vshrl.u32 %v3145, 7
    %v3147 = vsub.s32 %v1549, %v3146
    %v3148 = vrot.slane %v2742, %v3147
    %v3149 = vsel %vm1554, %v3148, %v3144
    %v3150 = vlaneseq
    %v3151 = vshrl.u32 %v3150, 7
    %v3152 = vsub.s32 %v1556, %v3151
    %v3153 = vrot.slane %v2745, %v3152
    %v3154 = vsel %vm1561, %v3153, %v3149
    %v3155 = vlaneseq
    %v3156 = vshrl.u32 %v3155, 7
    %v3157 = vsub.s32 %v1563, %v3156
    %v3158 = vrot.slane %v2748, %v3157
    %v3159 = vsel %vm1568, %v3158, %v3154
    %v3160 = vlaneseq
    %v3161 = vshrl.u32 %v3160, 7
    %v3162 = vsub.s32 %v1570, %v3161
    %v3163 = vrot.slane %v2751, %v3162
    %v3164 = vsel %vm1575, %v3163, %v3159
    %v3165 = vlaneseq
    %v3166 = vshrl.u32 %v3165, 7
    %v3167 = vsub.s32 %v1577, %v3166
    %v3168 = vrot.slane %v2754, %v3167
    %v3169 = vsel %vm1582, %v3168, %v3164
    %v3170 = vlaneseq
    %v3171 = vshrl.u32 %v3170, 7
    %v3172 = vsub.s32 %v1474, %v3171
    %v3173 = vrot.slane %v2757, %v3172
    %v3174 = vlaneseq
    %v3175 = vshrl.u32 %v3174, 7
    %v3176 = vsub.s32 %v1479, %v3175
    %v3177 = vrot.slane %v2760, %v3176
    %v3178 = vsel %vm1484, %v3177, %v3173
    %v3179 = vlaneseq
    %v3180 = vshrl.u32 %v3179, 7
    %v3181 = vsub.s32 %v1486, %v3180
    %v3182 = vrot.slane %v2763, %v3181
    %v3183 = vsel %vm1491, %v3182, %v3178
    %v3184 = vlaneseq
    %v3185 = vshrl.u32 %v3184, 7
    %v3186 = vsub.s32 %v1493, %v3185
    %v3187 = vrot.slane %v2766, %v3186
    %v3188 = vsel %vm1498, %v3187, %v3183
    %v3189 = vlaneseq
    %v3190 = vshrl.u32 %v3189, 7
    %v3191 = vsub.s32 %v1500, %v3190
    %v3192 = vrot.slane %v2769, %v3191
    %v3193 = vsel %vm1505, %v3192, %v3188
    %v3194 = vlaneseq
    %v3195 = vshrl.u32 %v3194, 7
    %v3196 = vsub.s32 %v1507, %v3195
    %v3197 = vrot.slane %v2772, %v3196
    %v3198 = vsel %vm1512, %v3197, %v3193
    %v3199 = vlaneseq
    %v3200 = vshrl.u32 %v3199, 7
    %v3201 = vsub.s32 %v1514, %v3200
    %v3202 = vrot.slane %v2775, %v3201
    %v3203 = vsel %vm1519, %v3202, %v3198
    %v3204 = vlaneseq
    %v3205 = vshrl.u32 %v3204, 7
    %v3206 = vsub.s32 %v1521, %v3205
    %v3207 = vrot.slane %v2778, %v3206
    %v3208 = vsel %vm1526, %v3207, %v3203
    %v3209 = vlaneseq
    %v3210 = vshrl.u32 %v3209, 7
    %v3211 = vsub.s32 %v1528, %v3210
    %v3212 = vrot.slane %v2781, %v3211
    %v3213 = vsel %vm1533, %v3212, %v3208
    %v3214 = vlaneseq
    %v3215 = vshrl.u32 %v3214, 7
    %v3216 = vsub.s32 %v1535, %v3215
    %v3217 = vrot.slane %v2784, %v3216
    %v3218 = vsel %vm1540, %v3217, %v3213
    %v3219 = vlaneseq
    %v3220 = vshrl.u32 %v3219, 7
    %v3221 = vsub.s32 %v1542, %v3220
    %v3222 = vrot.slane %v2787, %v3221
    %v3223 = vsel %vm1547, %v3222, %v3218
    %v3224 = vlaneseq
    %v3225 = vshrl.u32 %v3224, 7
    %v3226 = vsub.s32 %v1549, %v3225
    %v3227 = vrot.slane %v2790, %v3226
    %v3228 = vsel %vm1554, %v3227, %v3223
    %v3229 = vlaneseq
    %v3230 = vshrl.u32 %v3229, 7
    %v3231 = vsub.s32 %v1556, %v3230
    %v3232 = vrot.slane %v2793, %v3231
    %v3233 = vsel %vm1561, %v3232, %v3228
    %v3234 = vlaneseq
    %v3235 = vshrl.u32 %v3234, 7
    %v3236 = vsub.s32 %v1563, %v3235
    %v3237 = vrot.slane %v2796, %v3236
    %v3238 = vsel %vm1568, %v3237, %v3233
    %v3239 = vlaneseq
    %v3240 = vshrl.u32 %v3239, 7
    %v3241 = vsub.s32 %v1570, %v3240
    %v3242 = vrot.slane %v2799, %v3241
    %v3243 = vsel %vm1575, %v3242, %v3238
    %v3244 = vlaneseq
    %v3245 = vshrl.u32 %v3244, 7
    %v3246 = vsub.s32 %v1577, %v3245
    %v3247 = vrot.slane %v2802, %v3246
    %v3248 = vsel %vm1582, %v3247, %v3243
    %v3249 = vlaneseq
    %v3250 = vshrl.u32 %v3249, 7
    %v3251 = vsub.s32 %v1474, %v3250
    %v3252 = vrot.slane %v2805, %v3251
    %v3253 = vlaneseq
    %v3254 = vshrl.u32 %v3253, 7
    %v3255 = vsub.s32 %v1479, %v3254
    %v3256 = vrot.slane %v2808, %v3255
    %v3257 = vsel %vm1484, %v3256, %v3252
    %v3258 = vlaneseq
    %v3259 = vshrl.u32 %v3258, 7
    %v3260 = vsub.s32 %v1486, %v3259
    %v3261 = vrot.slane %v2811, %v3260
    %v3262 = vsel %vm1491, %v3261, %v3257
    %v3263 = vlaneseq
    %v3264 = vshrl.u32 %v3263, 7
    %v3265 = vsub.s32 %v1493, %v3264
    %v3266 = vrot.slane %v2814, %v3265
    %v3267 = vsel %vm1498, %v3266, %v3262
    %v3268 = vlaneseq
    %v3269 = vshrl.u32 %v3268, 7
    %v3270 = vsub.s32 %v1500, %v3269
    %v3271 = vrot.slane %v2817, %v3270
    %v3272 = vsel %vm1505, %v3271, %v3267
    %v3273 = vlaneseq
    %v3274 = vshrl.u32 %v3273, 7
    %v3275 = vsub.s32 %v1507, %v3274
    %v3276 = vrot.slane %v2820, %v3275
    %v3277 = vsel %vm1512, %v3276, %v3272
    %v3278 = vlaneseq
    %v3279 = vshrl.u32 %v3278, 7
    %v3280 = vsub.s32 %v1514, %v3279
    %v3281 = vrot.slane %v2823, %v3280
    %v3282 = vsel %vm1519, %v3281, %v3277
    %v3283 = vlaneseq
    %v3284 = vshrl.u32 %v3283, 7
    %v3285 = vsub.s32 %v1521, %v3284
    %v3286 = vrot.slane %v2826, %v3285
    %v3287 = vsel %vm1526, %v3286, %v3282
    %v3288 = vlaneseq
    %v3289 = vshrl.u32 %v3288, 7
    %v3290 = vsub.s32 %v1528, %v3289
    %v3291 = vrot.slane %v2829, %v3290
    %v3292 = vsel %vm1533, %v3291, %v3287
    %v3293 = vlaneseq
    %v3294 = vshrl.u32 %v3293, 7
    %v3295 = vsub.s32 %v1535, %v3294
    %v3296 = vrot.slane %v2832, %v3295
    %v3297 = vsel %vm1540, %v3296, %v3292
    %v3298 = vlaneseq
    %v3299 = vshrl.u32 %v3298, 7
    %v3300 = vsub.s32 %v1542, %v3299
    %v3301 = vrot.slane %v2835, %v3300
    %v3302 = vsel %vm1547, %v3301, %v3297
    %v3303 = vlaneseq
    %v3304 = vshrl.u32 %v3303, 7
    %v3305 = vsub.s32 %v1549, %v3304
    %v3306 = vrot.slane %v2838, %v3305
    %v3307 = vsel %vm1554, %v3306, %v3302
    %v3308 = vlaneseq
    %v3309 = vshrl.u32 %v3308, 7
    %v3310 = vsub.s32 %v1556, %v3309
    %v3311 = vrot.slane %v2841, %v3310
    %v3312 = vsel %vm1561, %v3311, %v3307
    %v3313 = vlaneseq
    %v3314 = vshrl.u32 %v3313, 7
    %v3315 = vsub.s32 %v1563, %v3314
    %v3316 = vrot.slane %v2844, %v3315
    %v3317 = vsel %vm1568, %v3316, %v3312
    %v3318 = vlaneseq
    %v3319 = vshrl.u32 %v3318, 7
    %v3320 = vsub.s32 %v1570, %v3319
    %v3321 = vrot.slane %v2847, %v3320
    %v3322 = vsel %vm1575, %v3321, %v3317
    %v3323 = vlaneseq
    %v3324 = vshrl.u32 %v3323, 7
    %v3325 = vsub.s32 %v1577, %v3324
    %v3326 = vrot.slane %v2850, %v3325
    %v3327 = vsel %vm1582, %v3326, %v3322
    %v3328 = vlaneseq
    %v3329 = vshrl.u32 %v3328, 7
    %v3330 = vsub.s32 %v1474, %v3329
    %v3331 = vrot.slane %v2853, %v3330
    %v3332 = vlaneseq
    %v3333 = vshrl.u32 %v3332, 7
    %v3334 = vsub.s32 %v1479, %v3333
    %v3335 = vrot.slane %v2856, %v3334
    %v3336 = vsel %vm1484, %v3335, %v3331
    %v3337 = vlaneseq
    %v3338 = vshrl.u32 %v3337, 7
    %v3339 = vsub.s32 %v1486, %v3338
    %v3340 = vrot.slane %v2859, %v3339
    %v3341 = vsel %vm1491, %v3340, %v3336
    %v3342 = vlaneseq
    %v3343 = vshrl.u32 %v3342, 7
    %v3344 = vsub.s32 %v1493, %v3343
    %v3345 = vrot.slane %v2862, %v3344
    %v3346 = vsel %vm1498, %v3345, %v3341
    %v3347 = vlaneseq
    %v3348 = vshrl.u32 %v3347, 7
    %v3349 = vsub.s32 %v1500, %v3348
    %v3350 = vrot.slane %v2865, %v3349
    %v3351 = vsel %vm1505, %v3350, %v3346
    %v3352 = vlaneseq
    %v3353 = vshrl.u32 %v3352, 7
    %v3354 = vsub.s32 %v1507, %v3353
    %v3355 = vrot.slane %v2868, %v3354
    %v3356 = vsel %vm1512, %v3355, %v3351
    %v3357 = vlaneseq
    %v3358 = vshrl.u32 %v3357, 7
    %v3359 = vsub.s32 %v1514, %v3358
    %v3360 = vrot.slane %v2871, %v3359
    %v3361 = vsel %vm1519, %v3360, %v3356
    %v3362 = vlaneseq
    %v3363 = vshrl.u32 %v3362, 7
    %v3364 = vsub.s32 %v1521, %v3363
    %v3365 = vrot.slane %v2874, %v3364
    %v3366 = vsel %vm1526, %v3365, %v3361
    %v3367 = vlaneseq
    %v3368 = vshrl.u32 %v3367, 7
    %v3369 = vsub.s32 %v1528, %v3368
    %v3370 = vrot.slane %v2877, %v3369
    %v3371 = vsel %vm1533, %v3370, %v3366
    %v3372 = vlaneseq
    %v3373 = vshrl.u32 %v3372, 7
    %v3374 = vsub.s32 %v1535, %v3373
    %v3375 = vrot.slane %v2880, %v3374
    %v3376 = vsel %vm1540, %v3375, %v3371
    %v3377 = vlaneseq
    %v3378 = vshrl.u32 %v3377, 7
    %v3379 = vsub.s32 %v1542, %v3378
    %v3380 = vrot.slane %v2883, %v3379
    %v3381 = vsel %vm1547, %v3380, %v3376
    %v3382 = vlaneseq
    %v3383 = vshrl.u32 %v3382, 7
    %v3384 = vsub.s32 %v1549, %v3383
    %v3385 = vrot.slane %v2886, %v3384
    %v3386 = vsel %vm1554, %v3385, %v3381
    %v3387 = vlaneseq
    %v3388 = vshrl.u32 %v3387, 7
    %v3389 = vsub.s32 %v1556, %v3388
    %v3390 = vrot.slane %v2889, %v3389
    %v3391 = vsel %vm1561, %v3390, %v3386
    %v3392 = vlaneseq
    %v3393 = vshrl.u32 %v3392, 7
    %v3394 = vsub.s32 %v1563, %v3393
    %v3395 = vrot.slane %v2892, %v3394
    %v3396 = vsel %vm1568, %v3395, %v3391
    %v3397 = vlaneseq
    %v3398 = vshrl.u32 %v3397, 7
    %v3399 = vsub.s32 %v1570, %v3398
    %v3400 = vrot.slane %v2895, %v3399
    %v3401 = vsel %vm1575, %v3400, %v3396
    %v3402 = vlaneseq
    %v3403 = vshrl.u32 %v3402, 7
    %v3404 = vsub.s32 %v1577, %v3403
    %v3405 = vrot.slane %v2898, %v3404
    %v3406 = vsel %vm1582, %v3405, %v3401
    %v3407 = vlaneseq
    %v3408 = vshrl.u32 %v3407, 7
    %v3409 = vsub.s32 %v1474, %v3408
    %v3410 = vrot.slane %v2901, %v3409
    %v3411 = vlaneseq
    %v3412 = vshrl.u32 %v3411, 7
    %v3413 = vsub.s32 %v1479, %v3412
    %v3414 = vrot.slane %v2904, %v3413
    %v3415 = vsel %vm1484, %v3414, %v3410
    %v3416 = vlaneseq
    %v3417 = vshrl.u32 %v3416, 7
    %v3418 = vsub.s32 %v1486, %v3417
    %v3419 = vrot.slane %v2907, %v3418
    %v3420 = vsel %vm1491, %v3419, %v3415
    %v3421 = vlaneseq
    %v3422 = vshrl.u32 %v3421, 7
    %v3423 = vsub.s32 %v1493, %v3422
    %v3424 = vrot.slane %v2910, %v3423
    %v3425 = vsel %vm1498, %v3424, %v3420
    %v3426 = vlaneseq
    %v3427 = vshrl.u32 %v3426, 7
    %v3428 = vsub.s32 %v1500, %v3427
    %v3429 = vrot.slane %v2913, %v3428
    %v3430 = vsel %vm1505, %v3429, %v3425
    %v3431 = vlaneseq
    %v3432 = vshrl.u32 %v3431, 7
    %v3433 = vsub.s32 %v1507, %v3432
    %v3434 = vrot.slane %v2916, %v3433
    %v3435 = vsel %vm1512, %v3434, %v3430
    %v3436 = vlaneseq
    %v3437 = vshrl.u32 %v3436, 7
    %v3438 = vsub.s32 %v1514, %v3437
    %v3439 = vrot.slane %v2919, %v3438
    %v3440 = vsel %vm1519, %v3439, %v3435
    %v3441 = vlaneseq
    %v3442 = vshrl.u32 %v3441, 7
    %v3443 = vsub.s32 %v1521, %v3442
    %v3444 = vrot.slane %v2922, %v3443
    %v3445 = vsel %vm1526, %v3444, %v3440
    %v3446 = vlaneseq
    %v3447 = vshrl.u32 %v3446, 7
    %v3448 = vsub.s32 %v1528, %v3447
    %v3449 = vrot.slane %v2925, %v3448
    %v3450 = vsel %vm1533, %v3449, %v3445
    %v3451 = vlaneseq
    %v3452 = vshrl.u32 %v3451, 7
    %v3453 = vsub.s32 %v1535, %v3452
    %v3454 = vrot.slane %v2928, %v3453
    %v3455 = vsel %vm1540, %v3454, %v3450
    %v3456 = vlaneseq
    %v3457 = vshrl.u32 %v3456, 7
    %v3458 = vsub.s32 %v1542, %v3457
    %v3459 = vrot.slane %v2931, %v3458
    %v3460 = vsel %vm1547, %v3459, %v3455
    %v3461 = vlaneseq
    %v3462 = vshrl.u32 %v3461, 7
    %v3463 = vsub.s32 %v1549, %v3462
    %v3464 = vrot.slane %v2934, %v3463
    %v3465 = vsel %vm1554, %v3464, %v3460
    %v3466 = vlaneseq
    %v3467 = vshrl.u32 %v3466, 7
    %v3468 = vsub.s32 %v1556, %v3467
    %v3469 = vrot.slane %v2937, %v3468
    %v3470 = vsel %vm1561, %v3469, %v3465
    %v3471 = vlaneseq
    %v3472 = vshrl.u32 %v3471, 7
    %v3473 = vsub.s32 %v1563, %v3472
    %v3474 = vrot.slane %v2940, %v3473
    %v3475 = vsel %vm1568, %v3474, %v3470
    %v3476 = vlaneseq
    %v3477 = vshrl.u32 %v3476, 7
    %v3478 = vsub.s32 %v1570, %v3477
    %v3479 = vrot.slane %v2943, %v3478
    %v3480 = vsel %vm1575, %v3479, %v3475
    %v3481 = vlaneseq
    %v3482 = vshrl.u32 %v3481, 7
    %v3483 = vsub.s32 %v1577, %v3482
    %v3484 = vrot.slane %v2946, %v3483
    %v3485 = vsel %vm1582, %v3484, %v3480
    %v3486 = vlaneseq
    %v3487 = vshrl.u32 %v3486, 7
    %v3488 = vsub.s32 %v1474, %v3487
    %v3489 = vrot.slane %v2949, %v3488
    %v3490 = vlaneseq
    %v3491 = vshrl.u32 %v3490, 7
    %v3492 = vsub.s32 %v1479, %v3491
    %v3493 = vrot.slane %v2952, %v3492
    %v3494 = vsel %vm1484, %v3493, %v3489
    %v3495 = vlaneseq
    %v3496 = vshrl.u32 %v3495, 7
    %v3497 = vsub.s32 %v1486, %v3496
    %v3498 = vrot.slane %v2955, %v3497
    %v3499 = vsel %vm1491, %v3498, %v3494
    %v3500 = vlaneseq
    %v3501 = vshrl.u32 %v3500, 7
    %v3502 = vsub.s32 %v1493, %v3501
    %v3503 = vrot.slane %v2958, %v3502
    %v3504 = vsel %vm1498, %v3503, %v3499
    %v3505 = vlaneseq
    %v3506 = vshrl.u32 %v3505, 7
    %v3507 = vsub.s32 %v1500, %v3506
    %v3508 = vrot.slane %v2961, %v3507
    %v3509 = vsel %vm1505, %v3508, %v3504
    %v3510 = vlaneseq
    %v3511 = vshrl.u32 %v3510, 7
    %v3512 = vsub.s32 %v1507, %v3511
    %v3513 = vrot.slane %v2964, %v3512
    %v3514 = vsel %vm1512, %v3513, %v3509
    %v3515 = vlaneseq
    %v3516 = vshrl.u32 %v3515, 7
    %v3517 = vsub.s32 %v1514, %v3516
    %v3518 = vrot.slane %v2967, %v3517
    %v3519 = vsel %vm1519, %v3518, %v3514
    %v3520 = vlaneseq
    %v3521 = vshrl.u32 %v3520, 7
    %v3522 = vsub.s32 %v1521, %v3521
    %v3523 = vrot.slane %v2970, %v3522
    %v3524 = vsel %vm1526, %v3523, %v3519
    %v3525 = vlaneseq
    %v3526 = vshrl.u32 %v3525, 7
    %v3527 = vsub.s32 %v1528, %v3526
    %v3528 = vrot.slane %v2973, %v3527
    %v3529 = vsel %vm1533, %v3528, %v3524
    %v3530 = vlaneseq
    %v3531 = vshrl.u32 %v3530, 7
    %v3532 = vsub.s32 %v1535, %v3531
    %v3533 = vrot.slane %v2976, %v3532
    %v3534 = vsel %vm1540, %v3533, %v3529
    %v3535 = vlaneseq
    %v3536 = vshrl.u32 %v3535, 7
    %v3537 = vsub.s32 %v1542, %v3536
    %v3538 = vrot.slane %v2979, %v3537
    %v3539 = vsel %vm1547, %v3538, %v3534
    %v3540 = vlaneseq
    %v3541 = vshrl.u32 %v3540, 7
    %v3542 = vsub.s32 %v1549, %v3541
    %v3543 = vrot.slane %v2982, %v3542
    %v3544 = vsel %vm1554, %v3543, %v3539
    %v3545 = vlaneseq
    %v3546 = vshrl.u32 %v3545, 7
    %v3547 = vsub.s32 %v1556, %v3546
    %v3548 = vrot.slane %v2985, %v3547
    %v3549 = vsel %vm1561, %v3548, %v3544
    %v3550 = vlaneseq
    %v3551 = vshrl.u32 %v3550, 7
    %v3552 = vsub.s32 %v1563, %v3551
    %v3553 = vrot.slane %v2988, %v3552
    %v3554 = vsel %vm1568, %v3553, %v3549
    %v3555 = vlaneseq
    %v3556 = vshrl.u32 %v3555, 7
    %v3557 = vsub.s32 %v1570, %v3556
    %v3558 = vrot.slane %v2991, %v3557
    %v3559 = vsel %vm1575, %v3558, %v3554
    %v3560 = vlaneseq
    %v3561 = vshrl.u32 %v3560, 7
    %v3562 = vsub.s32 %v1577, %v3561
    %v3563 = vrot.slane %v2994, %v3562
    %v3564 = vsel %vm1582, %v3563, %v3559
    %v3565 = vlaneseq
    %v3566 = vshrl.u32 %v3565, 7
    %v3567 = vsub.s32 %v1474, %v3566
    %v3568 = vrot.slane %v2997, %v3567
    %v3569 = vlaneseq
    %v3570 = vshrl.u32 %v3569, 7
    %v3571 = vsub.s32 %v1479, %v3570
    %v3572 = vrot.slane %v3000, %v3571
    %v3573 = vsel %vm1484, %v3572, %v3568
    %v3574 = vlaneseq
    %v3575 = vshrl.u32 %v3574, 7
    %v3576 = vsub.s32 %v1486, %v3575
    %v3577 = vrot.slane %v3003, %v3576
    %v3578 = vsel %vm1491, %v3577, %v3573
    %v3579 = vlaneseq
    %v3580 = vshrl.u32 %v3579, 7
    %v3581 = vsub.s32 %v1493, %v3580
    %v3582 = vrot.slane %v3006, %v3581
    %v3583 = vsel %vm1498, %v3582, %v3578
    %v3584 = vlaneseq
    %v3585 = vshrl.u32 %v3584, 7
    %v3586 = vsub.s32 %v1500, %v3585
    %v3587 = vrot.slane %v3009, %v3586
    %v3588 = vsel %vm1505, %v3587, %v3583
    %v3589 = vlaneseq
    %v3590 = vshrl.u32 %v3589, 7
    %v3591 = vsub.s32 %v1507, %v3590
    %v3592 = vrot.slane %v3012, %v3591
    %v3593 = vsel %vm1512, %v3592, %v3588
    %v3594 = vlaneseq
    %v3595 = vshrl.u32 %v3594, 7
    %v3596 = vsub.s32 %v1514, %v3595
    %v3597 = vrot.slane %v3015, %v3596
    %v3598 = vsel %vm1519, %v3597, %v3593
    %v3599 = vlaneseq
    %v3600 = vshrl.u32 %v3599, 7
    %v3601 = vsub.s32 %v1521, %v3600
    %v3602 = vrot.slane %v3018, %v3601
    %v3603 = vsel %vm1526, %v3602, %v3598
    %v3604 = vlaneseq
    %v3605 = vshrl.u32 %v3604, 7
    %v3606 = vsub.s32 %v1528, %v3605
    %v3607 = vrot.slane %v3021, %v3606
    %v3608 = vsel %vm1533, %v3607, %v3603
    %v3609 = vlaneseq
    %v3610 = vshrl.u32 %v3609, 7
    %v3611 = vsub.s32 %v1535, %v3610
    %v3612 = vrot.slane %v3024, %v3611
    %v3613 = vsel %vm1540, %v3612, %v3608
    %v3614 = vlaneseq
    %v3615 = vshrl.u32 %v3614, 7
    %v3616 = vsub.s32 %v1542, %v3615
    %v3617 = vrot.slane %v3027, %v3616
    %v3618 = vsel %vm1547, %v3617, %v3613
    %v3619 = vlaneseq
    %v3620 = vshrl.u32 %v3619, 7
    %v3621 = vsub.s32 %v1549, %v3620
    %v3622 = vrot.slane %v3030, %v3621
    %v3623 = vsel %vm1554, %v3622, %v3618
    %v3624 = vlaneseq
    %v3625 = vshrl.u32 %v3624, 7
    %v3626 = vsub.s32 %v1556, %v3625
    %v3627 = vrot.slane %v3033, %v3626
    %v3628 = vsel %vm1561, %v3627, %v3623
    %v3629 = vlaneseq
    %v3630 = vshrl.u32 %v3629, 7
    %v3631 = vsub.s32 %v1563, %v3630
    %v3632 = vrot.slane %v3036, %v3631
    %v3633 = vsel %vm1568, %v3632, %v3628
    %v3634 = vlaneseq
    %v3635 = vshrl.u32 %v3634, 7
    %v3636 = vsub.s32 %v1570, %v3635
    %v3637 = vrot.slane %v3039, %v3636
    %v3638 = vsel %vm1575, %v3637, %v3633
    %v3639 = vlaneseq
    %v3640 = vshrl.u32 %v3639, 7
    %v3641 = vsub.s32 %v1577, %v3640
    %v3642 = vrot.slane %v3042, %v3641
    %v3643 = vsel %vm1582, %v3642, %v3638
    %v3644 = vlaneseq
    %v3645 = vshrl.u32 %v3644, 7
    %v3646 = vsub.s32 %v1474, %v3645
    %v3647 = vrot.slane %v3045, %v3646
    %v3648 = vlaneseq
    %v3649 = vshrl.u32 %v3648, 7
    %v3650 = vsub.s32 %v1479, %v3649
    %v3651 = vrot.slane %v3048, %v3650
    %v3652 = vsel %vm1484, %v3651, %v3647
    %v3653 = vlaneseq
    %v3654 = vshrl.u32 %v3653, 7
    %v3655 = vsub.s32 %v1486, %v3654
    %v3656 = vrot.slane %v3051, %v3655
    %v3657 = vsel %vm1491, %v3656, %v3652
    %v3658 = vlaneseq
    %v3659 = vshrl.u32 %v3658, 7
    %v3660 = vsub.s32 %v1493, %v3659
    %v3661 = vrot.slane %v3054, %v3660
    %v3662 = vsel %vm1498, %v3661, %v3657
    %v3663 = vlaneseq
    %v3664 = vshrl.u32 %v3663, 7
    %v3665 = vsub.s32 %v1500, %v3664
    %v3666 = vrot.slane %v3057, %v3665
    %v3667 = vsel %vm1505, %v3666, %v3662
    %v3668 = vlaneseq
    %v3669 = vshrl.u32 %v3668, 7
    %v3670 = vsub.s32 %v1507, %v3669
    %v3671 = vrot.slane %v3060, %v3670
    %v3672 = vsel %vm1512, %v3671, %v3667
    %v3673 = vlaneseq
    %v3674 = vshrl.u32 %v3673, 7
    %v3675 = vsub.s32 %v1514, %v3674
    %v3676 = vrot.slane %v3063, %v3675
    %v3677 = vsel %vm1519, %v3676, %v3672
    %v3678 = vlaneseq
    %v3679 = vshrl.u32 %v3678, 7
    %v3680 = vsub.s32 %v1521, %v3679
    %v3681 = vrot.slane %v3066, %v3680
    %v3682 = vsel %vm1526, %v3681, %v3677
    %v3683 = vlaneseq
    %v3684 = vshrl.u32 %v3683, 7
    %v3685 = vsub.s32 %v1528, %v3684
    %v3686 = vrot.slane %v3069, %v3685
    %v3687 = vsel %vm1533, %v3686, %v3682
    %v3688 = vlaneseq
    %v3689 = vshrl.u32 %v3688, 7
    %v3690 = vsub.s32 %v1535, %v3689
    %v3691 = vrot.slane %v3072, %v3690
    %v3692 = vsel %vm1540, %v3691, %v3687
    %v3693 = vlaneseq
    %v3694 = vshrl.u32 %v3693, 7
    %v3695 = vsub.s32 %v1542, %v3694
    %v3696 = vrot.slane %v3075, %v3695
    %v3697 = vsel %vm1547, %v3696, %v3692
    %v3698 = vlaneseq
    %v3699 = vshrl.u32 %v3698, 7
    %v3700 = vsub.s32 %v1549, %v3699
    %v3701 = vrot.slane %v3078, %v3700
    %v3702 = vsel %vm1554, %v3701, %v3697
    %v3703 = vlaneseq
    %v3704 = vshrl.u32 %v3703, 7
    %v3705 = vsub.s32 %v1556, %v3704
    %v3706 = vrot.slane %v3081, %v3705
    %v3707 = vsel %vm1561, %v3706, %v3702
    %v3708 = vlaneseq
    %v3709 = vshrl.u32 %v3708, 7
    %v3710 = vsub.s32 %v1563, %v3709
    %v3711 = vrot.slane %v3084, %v3710
    %v3712 = vsel %vm1568, %v3711, %v3707
    %v3713 = vlaneseq
    %v3714 = vshrl.u32 %v3713, 7
    %v3715 = vsub.s32 %v1570, %v3714
    %v3716 = vrot.slane %v3087, %v3715
    %v3717 = vsel %vm1575, %v3716, %v3712
    %v3718 = vlaneseq
    %v3719 = vshrl.u32 %v3718, 7
    %v3720 = vsub.s32 %v1577, %v3719
    %v3721 = vrot.slane %v3090, %v3720
    %v3722 = vsel %vm1582, %v3721, %v3717
    %v3723 = vsel %vm2137, %v3248, %v3169
    %v3724 = vsel %vm2139, %v3327, %v3723
    %v3725 = vsel %vm2141, %v3406, %v3724
    %v3726 = vsel %vm2143, %v3485, %v3725
    %v3727 = vsel %vm2145, %v3564, %v3726
    %v3728 = vsel %vm2147, %v3643, %v3727
    %v3729 = vsel %vm2149, %v3722, %v3728
    %3731 = vadd.xlane.f32.xlu0 %v3729
    %v3732 = vpop.xlane.xlu0 %3731
    %v3734 = vlaneseq
    %v3735 = vshrl.u32 %v3734, 7
    %v3736 = vsub.s32 0, %v3735
    %v3737 = vrot.slane %v3732, %v3736
    %v3738 = vlaneseq
    %v3739 = vshrl.u32 %v3738, 7
    %v3740 = vsub.s32 1, %v3739
    %v3741 = vrot.slane %v3732, %v3740
    %v3742 = vlaneseq
    %v3743 = vshrl.u32 %v3742, 7
    %v3744 = vsub.s32 2, %v3743
    %v3745 = vrot.slane %v3732, %v3744
    %v3746 = vlaneseq
    %v3747 = vshrl.u32 %v3746, 7
    %v3748 = vsub.s32 3, %v3747
    %v3749 = vrot.slane %v3732, %v3748
    %v3750 = vlaneseq
    %v3751 = vshrl.u32 %v3750, 7
    %v3752 = vsub.s32 4, %v3751
    %v3753 = vrot.slane %v3732, %v3752
    %v3754 = vlaneseq
    %v3755 = vshrl.u32 %v3754, 7
    %v3756 = vsub.s32 5, %v3755
    %v3757 = vrot.slane %v3732, %v3756
    %v3758 = vlaneseq
    %v3759 = vshrl.u32 %v3758, 7
    %v3760 = vsub.s32 6, %v3759
    %v3761 = vrot.slane %v3732, %v3760
    %v3762 = vlaneseq
    %v3763 = vshrl.u32 %v3762, 7
    %v3764 = vsub.s32 7, %v3763
    %v3765 = vrot.slane %v3732, %v3764
    %v3774 = vrcp.pop %v3737
    %v3775 = vmul.f32 %v2324, %v3774
    %v3776 = vmul.f32 %v2326, %v3774
    %v3777 = vmul.f32 %v2328, %v3774
    %v3778 = vmul.f32 %v2330, %v3774
    %v3779 = vmul.f32 %v2332, %v3774
    %v3780 = vmul.f32 %v2334, %v3774
    %v3781 = vmul.f32 %v2336, %v3774
    %v3782 = vmul.f32 %v2338, %v3774
    %v3783 = vmul.f32 %v2340, %v3774
    %v3784 = vmul.f32 %v2342, %v3774
    %v3785 = vmul.f32 %v2344, %v3774
    %v3786 = vmul.f32 %v2346, %v3774
    %v3787 = vmul.f32 %v2348, %v3774
    %v3788 = vmul.f32 %v2350, %v3774
    %v3789 = vmul.f32 %v2352, %v3774
    %v3790 = vmul.f32 %v2354, %v3774
    %v3791 = vrcp.pop %v3741
    %v3792 = vmul.f32 %v2356, %v3791
    %v3793 = vmul.f32 %v2358, %v3791
    %v3794 = vmul.f32 %v2360, %v3791
    %v3795 = vmul.f32 %v2362, %v3791
    %v3796 = vmul.f32 %v2364, %v3791
    %v3797 = vmul.f32 %v2366, %v3791
    %v3798 = vmul.f32 %v2368, %v3791
    %v3799 = vmul.f32 %v2370, %v3791
    %v3800 = vmul.f32 %v2372, %v3791
    %v3801 = vmul.f32 %v2374, %v3791
    %v3802 = vmul.f32 %v2376, %v3791
    %v3803 = vmul.f32 %v2378, %v3791
    %v3804 = vmul.f32 %v2380, %v3791
    %v3805 = vmul.f32 %v2382, %v3791
    %v3806 = vmul.f32 %v2384, %v3791
    %v3807 = vmul.f32 %v2386, %v3791
    %v3808 = vrcp.pop %v3745
    %v3809 = vmul.f32 %v2388, %v3808
    %v3810 = vmul.f32 %v2390, %v3808
    %v3811 = vmul.f32 %v2392, %v3808
    %v3812 = vmul.f32 %v2394, %v3808
    %v3813 = vmul.f32 %v2396, %v3808
    %v3814 = vmul.f32 %v2398, %v3808
    %v3815 = vmul.f32 %v2400, %v3808
    %v3816 = vmul.f32 %v2402, %v3808
    %v3817 = vmul.f32 %v2404, %v3808
    %v3818 = vmul.f32 %v2406, %v3808
    %v3819 = vmul.f32 %v2408, %v3808
    %v3820 = vmul.f32 %v2410, %v3808
    %v3821 = vmul.f32 %v2412, %v3808
    %v3822 = vmul.f32 %v2414, %v3808
    %v3823 = vmul.f32 %v2416, %v3808
    %v3824 = vmul.f32 %v2418, %v3808
    %v3825 = vrcp.pop %v3749
    %v3826 = vmul.f32 %v2420, %v3825
    %v3827 = vmul.f32 %v2422, %v3825
    %v3828 = vmul.f32 %v2424, %v3825
    %v3829 = vmul.f32 %v2426, %v3825
    %v3830 = vmul.f32 %v2428, %v3825
    %v3831 = vmul.f32 %v2430, %v3825
    %v3832 = vmul.f32 %v2432, %v3825
    %v3833 = vmul.f32 %v2434, %v3825
    %v3834 = vmul.f32 %v2436, %v3825
    %v3835 = vmul.f32 %v2438, %v3825
    %v3836 = vmul.f32 %v2440, %v3825
    %v3837 = vmul.f32 %v2442, %v3825
    %v3838 = vmul.f32 %v2444, %v3825
    %v3839 = vmul.f32 %v2446, %v3825
    %v3840 = vmul.f32 %v2448, %v3825
    %v3841 = vmul.f32 %v2450, %v3825
    %v3842 = vrcp.pop %v3753
    %v3843 = vmul.f32 %v2452, %v3842
    %v3844 = vmul.f32 %v2454, %v3842
    %v3845 = vmul.f32 %v2456, %v3842
    %v3846 = vmul.f32 %v2458, %v3842
    %v3847 = vmul.f32 %v2460, %v3842
    %v3848 = vmul.f32 %v2462, %v3842
    %v3849 = vmul.f32 %v2464, %v3842
    %v3850 = vmul.f32 %v2466, %v3842
    %v3851 = vmul.f32 %v2468, %v3842
    %v3852 = vmul.f32 %v2470, %v3842
    %v3853 = vmul.f32 %v2472, %v3842
    %v3854 = vmul.f32 %v2474, %v3842
    %v3855 = vmul.f32 %v2476, %v3842
    %v3856 = vmul.f32 %v2478, %v3842
    %v3857 = vmul.f32 %v2480, %v3842
    %v3858 = vmul.f32 %v2482, %v3842
    %v3859 = vrcp.pop %v3757
    %v3860 = vmul.f32 %v2484, %v3859
    %v3861 = vmul.f32 %v2486, %v3859
    %v3862 = vmul.f32 %v2488, %v3859
    %v3863 = vmul.f32 %v2490, %v3859
    %v3864 = vmul.f32 %v2492, %v3859
    %v3865 = vmul.f32 %v2494, %v3859
    %v3866 = vmul.f32 %v2496, %v3859
    %v3867 = vmul.f32 %v2498, %v3859
    %v3868 = vmul.f32 %v2500, %v3859
    %v3869 = vmul.f32 %v2502, %v3859
    %v3870 = vmul.f32 %v2504, %v3859
    %v3871 = vmul.f32 %v2506, %v3859
    %v3872 = vmul.f32 %v2508, %v3859
    %v3873 = vmul.f32 %v2510, %v3859
    %v3874 = vmul.f32 %v2512, %v3859
    %v3875 = vmul.f32 %v2514, %v3859
    %v3876 = vrcp.pop %v3761
    %v3877 = vmul.f32 %v2516, %v3876
    %v3878 = vmul.f32 %v2518, %v3876
    %v3879 = vmul.f32 %v2520, %v3876
    %v3880 = vmul.f32 %v2522, %v3876
    %v3881 = vmul.f32 %v2524, %v3876
    %v3882 = vmul.f32 %v2526, %v3876
    %v3883 = vmul.f32 %v2528, %v3876
    %v3884 = vmul.f32 %v2530, %v3876
    %v3885 = vmul.f32 %v2532, %v3876
    %v3886 = vmul.f32 %v2534, %v3876
    %v3887 = vmul.f32 %v2536, %v3876
    %v3888 = vmul.f32 %v2538, %v3876
    %v3889 = vmul.f32 %v2540, %v3876
    %v3890 = vmul.f32 %v2542, %v3876
    %v3891 = vmul.f32 %v2544, %v3876
    %v3892 = vmul.f32 %v2546, %v3876
    %v3893 = vrcp.pop %v3765
    %v3894 = vmul.f32 %v2548, %v3893
    %v3895 = vmul.f32 %v2550, %v3893
    %v3896 = vmul.f32 %v2552, %v3893
    %v3897 = vmul.f32 %v2554, %v3893
    %v3898 = vmul.f32 %v2556, %v3893
    %v3899 = vmul.f32 %v2558, %v3893
    %v3900 = vmul.f32 %v2560, %v3893
    %v3901 = vmul.f32 %v2562, %v3893
    %v3902 = vmul.f32 %v2564, %v3893
    %v3903 = vmul.f32 %v2566, %v3893
    %v3904 = vmul.f32 %v2568, %v3893
    %v3905 = vmul.f32 %v2570, %v3893
    %v3906 = vmul.f32 %v2572, %v3893
    %v3907 = vmul.f32 %v2574, %v3893
    %v3908 = vmul.f32 %v2576, %v3893
    %v3909 = vmul.f32 %v2578, %v3893
    %4038 = vset.pattern.permute.xlu0 0
    %4039 = vperm.xlu0 %4038, %v3775
    %v4040 = vpop.permute.xlu0 %4039
    %4041 = vset.pattern.permute.xlu0 0
    %4042 = vperm.xlu0 %4041, %v3776
    %v4043 = vpop.permute.xlu0 %4042
    %4044 = vset.pattern.permute.xlu0 0
    %4045 = vperm.xlu0 %4044, %v3777
    %v4046 = vpop.permute.xlu0 %4045
    %4047 = vset.pattern.permute.xlu0 0
    %4048 = vperm.xlu0 %4047, %v3778
    %v4049 = vpop.permute.xlu0 %4048
    %4050 = vset.pattern.permute.xlu0 0
    %4051 = vperm.xlu0 %4050, %v3779
    %v4052 = vpop.permute.xlu0 %4051
    %4053 = vset.pattern.permute.xlu0 0
    %4054 = vperm.xlu0 %4053, %v3780
    %v4055 = vpop.permute.xlu0 %4054
    %4056 = vset.pattern.permute.xlu0 0
    %4057 = vperm.xlu0 %4056, %v3781
    %v4058 = vpop.permute.xlu0 %4057
    %4059 = vset.pattern.permute.xlu0 0
    %4060 = vperm.xlu0 %4059, %v3782
    %v4061 = vpop.permute.xlu0 %4060
    %4062 = vset.pattern.permute.xlu0 0
    %4063 = vperm.xlu0 %4062, %v3783
    %v4064 = vpop.permute.xlu0 %4063
    %4065 = vset.pattern.permute.xlu0 0
    %4066 = vperm.xlu0 %4065, %v3784
    %v4067 = vpop.permute.xlu0 %4066
    %4068 = vset.pattern.permute.xlu0 0
    %4069 = vperm.xlu0 %4068, %v3785
    %v4070 = vpop.permute.xlu0 %4069
    %4071 = vset.pattern.permute.xlu0 0
    %4072 = vperm.xlu0 %4071, %v3786
    %v4073 = vpop.permute.xlu0 %4072
    %4074 = vset.pattern.permute.xlu0 0
    %4075 = vperm.xlu0 %4074, %v3787
    %v4076 = vpop.permute.xlu0 %4075
    %4077 = vset.pattern.permute.xlu0 0
    %4078 = vperm.xlu0 %4077, %v3788
    %v4079 = vpop.permute.xlu0 %4078
    %4080 = vset.pattern.permute.xlu0 0
    %4081 = vperm.xlu0 %4080, %v3789
    %v4082 = vpop.permute.xlu0 %4081
    %4083 = vset.pattern.permute.xlu0 0
    %4084 = vperm.xlu0 %4083, %v3790
    %v4085 = vpop.permute.xlu0 %4084
    %4086 = vset.pattern.permute.xlu0 0
    %4087 = vperm.xlu0 %4086, %v3792
    %v4088 = vpop.permute.xlu0 %4087
    %4089 = vset.pattern.permute.xlu0 0
    %4090 = vperm.xlu0 %4089, %v3793
    %v4091 = vpop.permute.xlu0 %4090
    %4092 = vset.pattern.permute.xlu0 0
    %4093 = vperm.xlu0 %4092, %v3794
    %v4094 = vpop.permute.xlu0 %4093
    %4095 = vset.pattern.permute.xlu0 0
    %4096 = vperm.xlu0 %4095, %v3795
    %v4097 = vpop.permute.xlu0 %4096
    %4098 = vset.pattern.permute.xlu0 0
    %4099 = vperm.xlu0 %4098, %v3796
    %v4100 = vpop.permute.xlu0 %4099
    %4101 = vset.pattern.permute.xlu0 0
    %4102 = vperm.xlu0 %4101, %v3797
    %v4103 = vpop.permute.xlu0 %4102
    %4104 = vset.pattern.permute.xlu0 0
    %4105 = vperm.xlu0 %4104, %v3798
    %v4106 = vpop.permute.xlu0 %4105
    %4107 = vset.pattern.permute.xlu0 0
    %4108 = vperm.xlu0 %4107, %v3799
    %v4109 = vpop.permute.xlu0 %4108
    %4110 = vset.pattern.permute.xlu0 0
    %4111 = vperm.xlu0 %4110, %v3800
    %v4112 = vpop.permute.xlu0 %4111
    %4113 = vset.pattern.permute.xlu0 0
    %4114 = vperm.xlu0 %4113, %v3801
    %v4115 = vpop.permute.xlu0 %4114
    %4116 = vset.pattern.permute.xlu0 0
    %4117 = vperm.xlu0 %4116, %v3802
    %v4118 = vpop.permute.xlu0 %4117
    %4119 = vset.pattern.permute.xlu0 0
    %4120 = vperm.xlu0 %4119, %v3803
    %v4121 = vpop.permute.xlu0 %4120
    %4122 = vset.pattern.permute.xlu0 0
    %4123 = vperm.xlu0 %4122, %v3804
    %v4124 = vpop.permute.xlu0 %4123
    %4125 = vset.pattern.permute.xlu0 0
    %4126 = vperm.xlu0 %4125, %v3805
    %v4127 = vpop.permute.xlu0 %4126
    %4128 = vset.pattern.permute.xlu0 0
    %4129 = vperm.xlu0 %4128, %v3806
    %v4130 = vpop.permute.xlu0 %4129
    %4131 = vset.pattern.permute.xlu0 0
    %4132 = vperm.xlu0 %4131, %v3807
    %v4133 = vpop.permute.xlu0 %4132
    %4134 = vset.pattern.permute.xlu0 0
    %4135 = vperm.xlu0 %4134, %v3809
    %v4136 = vpop.permute.xlu0 %4135
    %4137 = vset.pattern.permute.xlu0 0
    %4138 = vperm.xlu0 %4137, %v3810
    %v4139 = vpop.permute.xlu0 %4138
    %4140 = vset.pattern.permute.xlu0 0
    %4141 = vperm.xlu0 %4140, %v3811
    %v4142 = vpop.permute.xlu0 %4141
    %4143 = vset.pattern.permute.xlu0 0
    %4144 = vperm.xlu0 %4143, %v3812
    %v4145 = vpop.permute.xlu0 %4144
    %4146 = vset.pattern.permute.xlu0 0
    %4147 = vperm.xlu0 %4146, %v3813
    %v4148 = vpop.permute.xlu0 %4147
    %4149 = vset.pattern.permute.xlu0 0
    %4150 = vperm.xlu0 %4149, %v3814
    %v4151 = vpop.permute.xlu0 %4150
    %4152 = vset.pattern.permute.xlu0 0
    %4153 = vperm.xlu0 %4152, %v3815
    %v4154 = vpop.permute.xlu0 %4153
    %4155 = vset.pattern.permute.xlu0 0
    %4156 = vperm.xlu0 %4155, %v3816
    %v4157 = vpop.permute.xlu0 %4156
    %4158 = vset.pattern.permute.xlu0 0
    %4159 = vperm.xlu0 %4158, %v3817
    %v4160 = vpop.permute.xlu0 %4159
    %4161 = vset.pattern.permute.xlu0 0
    %4162 = vperm.xlu0 %4161, %v3818
    %v4163 = vpop.permute.xlu0 %4162
    %4164 = vset.pattern.permute.xlu0 0
    %4165 = vperm.xlu0 %4164, %v3819
    %v4166 = vpop.permute.xlu0 %4165
    %4167 = vset.pattern.permute.xlu0 0
    %4168 = vperm.xlu0 %4167, %v3820
    %v4169 = vpop.permute.xlu0 %4168
    %4170 = vset.pattern.permute.xlu0 0
    %4171 = vperm.xlu0 %4170, %v3821
    %v4172 = vpop.permute.xlu0 %4171
    %4173 = vset.pattern.permute.xlu0 0
    %4174 = vperm.xlu0 %4173, %v3822
    %v4175 = vpop.permute.xlu0 %4174
    %4176 = vset.pattern.permute.xlu0 0
    %4177 = vperm.xlu0 %4176, %v3823
    %v4178 = vpop.permute.xlu0 %4177
    %4179 = vset.pattern.permute.xlu0 0
    %4180 = vperm.xlu0 %4179, %v3824
    %v4181 = vpop.permute.xlu0 %4180
    %4182 = vset.pattern.permute.xlu0 0
    %4183 = vperm.xlu0 %4182, %v3826
    %v4184 = vpop.permute.xlu0 %4183
    %4185 = vset.pattern.permute.xlu0 0
    %4186 = vperm.xlu0 %4185, %v3827
    %v4187 = vpop.permute.xlu0 %4186
    %4188 = vset.pattern.permute.xlu0 0
    %4189 = vperm.xlu0 %4188, %v3828
    %v4190 = vpop.permute.xlu0 %4189
    %4191 = vset.pattern.permute.xlu0 0
    %4192 = vperm.xlu0 %4191, %v3829
    %v4193 = vpop.permute.xlu0 %4192
    %4194 = vset.pattern.permute.xlu0 0
    %4195 = vperm.xlu0 %4194, %v3830
    %v4196 = vpop.permute.xlu0 %4195
    %4197 = vset.pattern.permute.xlu0 0
    %4198 = vperm.xlu0 %4197, %v3831
    %v4199 = vpop.permute.xlu0 %4198
    %4200 = vset.pattern.permute.xlu0 0
    %4201 = vperm.xlu0 %4200, %v3832
    %v4202 = vpop.permute.xlu0 %4201
    %4203 = vset.pattern.permute.xlu0 0
    %4204 = vperm.xlu0 %4203, %v3833
    %v4205 = vpop.permute.xlu0 %4204
    %4206 = vset.pattern.permute.xlu0 0
    %4207 = vperm.xlu0 %4206, %v3834
    %v4208 = vpop.permute.xlu0 %4207
    %4209 = vset.pattern.permute.xlu0 0
    %4210 = vperm.xlu0 %4209, %v3835
    %v4211 = vpop.permute.xlu0 %4210
    %4212 = vset.pattern.permute.xlu0 0
    %4213 = vperm.xlu0 %4212, %v3836
    %v4214 = vpop.permute.xlu0 %4213
    %4215 = vset.pattern.permute.xlu0 0
    %4216 = vperm.xlu0 %4215, %v3837
    %v4217 = vpop.permute.xlu0 %4216
    %4218 = vset.pattern.permute.xlu0 0
    %4219 = vperm.xlu0 %4218, %v3838
    %v4220 = vpop.permute.xlu0 %4219
    %4221 = vset.pattern.permute.xlu0 0
    %4222 = vperm.xlu0 %4221, %v3839
    %v4223 = vpop.permute.xlu0 %4222
    %4224 = vset.pattern.permute.xlu0 0
    %4225 = vperm.xlu0 %4224, %v3840
    %v4226 = vpop.permute.xlu0 %4225
    %4227 = vset.pattern.permute.xlu0 0
    %4228 = vperm.xlu0 %4227, %v3841
    %v4229 = vpop.permute.xlu0 %4228
    %4230 = vset.pattern.permute.xlu0 0
    %4231 = vperm.xlu0 %4230, %v3843
    %v4232 = vpop.permute.xlu0 %4231
    %4233 = vset.pattern.permute.xlu0 0
    %4234 = vperm.xlu0 %4233, %v3844
    %v4235 = vpop.permute.xlu0 %4234
    %4236 = vset.pattern.permute.xlu0 0
    %4237 = vperm.xlu0 %4236, %v3845
    %v4238 = vpop.permute.xlu0 %4237
    %4239 = vset.pattern.permute.xlu0 0
    %4240 = vperm.xlu0 %4239, %v3846
    %v4241 = vpop.permute.xlu0 %4240
    %4242 = vset.pattern.permute.xlu0 0
    %4243 = vperm.xlu0 %4242, %v3847
    %v4244 = vpop.permute.xlu0 %4243
    %4245 = vset.pattern.permute.xlu0 0
    %4246 = vperm.xlu0 %4245, %v3848
    %v4247 = vpop.permute.xlu0 %4246
    %4248 = vset.pattern.permute.xlu0 0
    %4249 = vperm.xlu0 %4248, %v3849
    %v4250 = vpop.permute.xlu0 %4249
    %4251 = vset.pattern.permute.xlu0 0
    %4252 = vperm.xlu0 %4251, %v3850
    %v4253 = vpop.permute.xlu0 %4252
    %4254 = vset.pattern.permute.xlu0 0
    %4255 = vperm.xlu0 %4254, %v3851
    %v4256 = vpop.permute.xlu0 %4255
    %4257 = vset.pattern.permute.xlu0 0
    %4258 = vperm.xlu0 %4257, %v3852
    %v4259 = vpop.permute.xlu0 %4258
    %4260 = vset.pattern.permute.xlu0 0
    %4261 = vperm.xlu0 %4260, %v3853
    %v4262 = vpop.permute.xlu0 %4261
    %4263 = vset.pattern.permute.xlu0 0
    %4264 = vperm.xlu0 %4263, %v3854
    %v4265 = vpop.permute.xlu0 %4264
    %4266 = vset.pattern.permute.xlu0 0
    %4267 = vperm.xlu0 %4266, %v3855
    %v4268 = vpop.permute.xlu0 %4267
    %4269 = vset.pattern.permute.xlu0 0
    %4270 = vperm.xlu0 %4269, %v3856
    %v4271 = vpop.permute.xlu0 %4270
    %4272 = vset.pattern.permute.xlu0 0
    %4273 = vperm.xlu0 %4272, %v3857
    %v4274 = vpop.permute.xlu0 %4273
    %4275 = vset.pattern.permute.xlu0 0
    %4276 = vperm.xlu0 %4275, %v3858
    %v4277 = vpop.permute.xlu0 %4276
    %4278 = vset.pattern.permute.xlu0 0
    %4279 = vperm.xlu0 %4278, %v3860
    %v4280 = vpop.permute.xlu0 %4279
    %4281 = vset.pattern.permute.xlu0 0
    %4282 = vperm.xlu0 %4281, %v3861
    %v4283 = vpop.permute.xlu0 %4282
    %4284 = vset.pattern.permute.xlu0 0
    %4285 = vperm.xlu0 %4284, %v3862
    %v4286 = vpop.permute.xlu0 %4285
    %4287 = vset.pattern.permute.xlu0 0
    %4288 = vperm.xlu0 %4287, %v3863
    %v4289 = vpop.permute.xlu0 %4288
    %4290 = vset.pattern.permute.xlu0 0
    %4291 = vperm.xlu0 %4290, %v3864
    %v4292 = vpop.permute.xlu0 %4291
    %4293 = vset.pattern.permute.xlu0 0
    %4294 = vperm.xlu0 %4293, %v3865
    %v4295 = vpop.permute.xlu0 %4294
    %4296 = vset.pattern.permute.xlu0 0
    %4297 = vperm.xlu0 %4296, %v3866
    %v4298 = vpop.permute.xlu0 %4297
    %4299 = vset.pattern.permute.xlu0 0
    %4300 = vperm.xlu0 %4299, %v3867
    %v4301 = vpop.permute.xlu0 %4300
    %4302 = vset.pattern.permute.xlu0 0
    %4303 = vperm.xlu0 %4302, %v3868
    %v4304 = vpop.permute.xlu0 %4303
    %4305 = vset.pattern.permute.xlu0 0
    %4306 = vperm.xlu0 %4305, %v3869
    %v4307 = vpop.permute.xlu0 %4306
    %4308 = vset.pattern.permute.xlu0 0
    %4309 = vperm.xlu0 %4308, %v3870
    %v4310 = vpop.permute.xlu0 %4309
    %4311 = vset.pattern.permute.xlu0 0
    %4312 = vperm.xlu0 %4311, %v3871
    %v4313 = vpop.permute.xlu0 %4312
    %4314 = vset.pattern.permute.xlu0 0
    %4315 = vperm.xlu0 %4314, %v3872
    %v4316 = vpop.permute.xlu0 %4315
    %4317 = vset.pattern.permute.xlu0 0
    %4318 = vperm.xlu0 %4317, %v3873
    %v4319 = vpop.permute.xlu0 %4318
    %4320 = vset.pattern.permute.xlu0 0
    %4321 = vperm.xlu0 %4320, %v3874
    %v4322 = vpop.permute.xlu0 %4321
    %4323 = vset.pattern.permute.xlu0 0
    %4324 = vperm.xlu0 %4323, %v3875
    %v4325 = vpop.permute.xlu0 %4324
    %4326 = vset.pattern.permute.xlu0 0
    %4327 = vperm.xlu0 %4326, %v3877
    %v4328 = vpop.permute.xlu0 %4327
    %4329 = vset.pattern.permute.xlu0 0
    %4330 = vperm.xlu0 %4329, %v3878
    %v4331 = vpop.permute.xlu0 %4330
    %4332 = vset.pattern.permute.xlu0 0
    %4333 = vperm.xlu0 %4332, %v3879
    %v4334 = vpop.permute.xlu0 %4333
    %4335 = vset.pattern.permute.xlu0 0
    %4336 = vperm.xlu0 %4335, %v3880
    %v4337 = vpop.permute.xlu0 %4336
    %4338 = vset.pattern.permute.xlu0 0
    %4339 = vperm.xlu0 %4338, %v3881
    %v4340 = vpop.permute.xlu0 %4339
    %4341 = vset.pattern.permute.xlu0 0
    %4342 = vperm.xlu0 %4341, %v3882
    %v4343 = vpop.permute.xlu0 %4342
    %4344 = vset.pattern.permute.xlu0 0
    %4345 = vperm.xlu0 %4344, %v3883
    %v4346 = vpop.permute.xlu0 %4345
    %4347 = vset.pattern.permute.xlu0 0
    %4348 = vperm.xlu0 %4347, %v3884
    %v4349 = vpop.permute.xlu0 %4348
    %4350 = vset.pattern.permute.xlu0 0
    %4351 = vperm.xlu0 %4350, %v3885
    %v4352 = vpop.permute.xlu0 %4351
    %4353 = vset.pattern.permute.xlu0 0
    %4354 = vperm.xlu0 %4353, %v3886
    %v4355 = vpop.permute.xlu0 %4354
    %4356 = vset.pattern.permute.xlu0 0
    %4357 = vperm.xlu0 %4356, %v3887
    %v4358 = vpop.permute.xlu0 %4357
    %4359 = vset.pattern.permute.xlu0 0
    %4360 = vperm.xlu0 %4359, %v3888
    %v4361 = vpop.permute.xlu0 %4360
    %4362 = vset.pattern.permute.xlu0 0
    %4363 = vperm.xlu0 %4362, %v3889
    %v4364 = vpop.permute.xlu0 %4363
    %4365 = vset.pattern.permute.xlu0 0
    %4366 = vperm.xlu0 %4365, %v3890
    %v4367 = vpop.permute.xlu0 %4366
    %4368 = vset.pattern.permute.xlu0 0
    %4369 = vperm.xlu0 %4368, %v3891
    %v4370 = vpop.permute.xlu0 %4369
    %4371 = vset.pattern.permute.xlu0 0
    %4372 = vperm.xlu0 %4371, %v3892
    %v4373 = vpop.permute.xlu0 %4372
    %4374 = vset.pattern.permute.xlu0 0
    %4375 = vperm.xlu0 %4374, %v3894
    %v4376 = vpop.permute.xlu0 %4375
    %4377 = vset.pattern.permute.xlu0 0
    %4378 = vperm.xlu0 %4377, %v3895
    %v4379 = vpop.permute.xlu0 %4378
    %4380 = vset.pattern.permute.xlu0 0
    %4381 = vperm.xlu0 %4380, %v3896
    %v4382 = vpop.permute.xlu0 %4381
    %4383 = vset.pattern.permute.xlu0 0
    %4384 = vperm.xlu0 %4383, %v3897
    %v4385 = vpop.permute.xlu0 %4384
    %4386 = vset.pattern.permute.xlu0 0
    %4387 = vperm.xlu0 %4386, %v3898
    %v4388 = vpop.permute.xlu0 %4387
    %4389 = vset.pattern.permute.xlu0 0
    %4390 = vperm.xlu0 %4389, %v3899
    %v4391 = vpop.permute.xlu0 %4390
    %4392 = vset.pattern.permute.xlu0 0
    %4393 = vperm.xlu0 %4392, %v3900
    %v4394 = vpop.permute.xlu0 %4393
    %4395 = vset.pattern.permute.xlu0 0
    %4396 = vperm.xlu0 %4395, %v3901
    %v4397 = vpop.permute.xlu0 %4396
    %4398 = vset.pattern.permute.xlu0 0
    %4399 = vperm.xlu0 %4398, %v3902
    %v4400 = vpop.permute.xlu0 %4399
    %4401 = vset.pattern.permute.xlu0 0
    %4402 = vperm.xlu0 %4401, %v3903
    %v4403 = vpop.permute.xlu0 %4402
    %4404 = vset.pattern.permute.xlu0 0
    %4405 = vperm.xlu0 %4404, %v3904
    %v4406 = vpop.permute.xlu0 %4405
    %4407 = vset.pattern.permute.xlu0 0
    %4408 = vperm.xlu0 %4407, %v3905
    %v4409 = vpop.permute.xlu0 %4408
    %4410 = vset.pattern.permute.xlu0 0
    %4411 = vperm.xlu0 %4410, %v3906
    %v4412 = vpop.permute.xlu0 %4411
    %4413 = vset.pattern.permute.xlu0 0
    %4414 = vperm.xlu0 %4413, %v3907
    %v4415 = vpop.permute.xlu0 %4414
    %4416 = vset.pattern.permute.xlu0 0
    %4417 = vperm.xlu0 %4416, %v3908
    %v4418 = vpop.permute.xlu0 %4417
    %4419 = vset.pattern.permute.xlu0 0
    %4420 = vperm.xlu0 %4419, %v3909
    %v4421 = vpop.permute.xlu0 %4420
    %v4422 = vlaneseq
    %v4423 = vshrl.u32 %v4422, 7
    %v4424 = vsub.s32 %v1474, %v4423
    %v4425 = vrot.slane %v4040, %v4424
    %v4426 = vlaneseq
    %v4427 = vshrl.u32 %v4426, 7
    %v4428 = vsub.s32 %v1479, %v4427
    %v4429 = vrot.slane %v4043, %v4428
    %v4430 = vsel %vm1484, %v4429, %v4425
    %v4431 = vlaneseq
    %v4432 = vshrl.u32 %v4431, 7
    %v4433 = vsub.s32 %v1486, %v4432
    %v4434 = vrot.slane %v4046, %v4433
    %v4435 = vsel %vm1491, %v4434, %v4430
    %v4436 = vlaneseq
    %v4437 = vshrl.u32 %v4436, 7
    %v4438 = vsub.s32 %v1493, %v4437
    %v4439 = vrot.slane %v4049, %v4438
    %v4440 = vsel %vm1498, %v4439, %v4435
    %v4441 = vlaneseq
    %v4442 = vshrl.u32 %v4441, 7
    %v4443 = vsub.s32 %v1500, %v4442
    %v4444 = vrot.slane %v4052, %v4443
    %v4445 = vsel %vm1505, %v4444, %v4440
    %v4446 = vlaneseq
    %v4447 = vshrl.u32 %v4446, 7
    %v4448 = vsub.s32 %v1507, %v4447
    %v4449 = vrot.slane %v4055, %v4448
    %v4450 = vsel %vm1512, %v4449, %v4445
    %v4451 = vlaneseq
    %v4452 = vshrl.u32 %v4451, 7
    %v4453 = vsub.s32 %v1514, %v4452
    %v4454 = vrot.slane %v4058, %v4453
    %v4455 = vsel %vm1519, %v4454, %v4450
    %v4456 = vlaneseq
    %v4457 = vshrl.u32 %v4456, 7
    %v4458 = vsub.s32 %v1521, %v4457
    %v4459 = vrot.slane %v4061, %v4458
    %v4460 = vsel %vm1526, %v4459, %v4455
    %v4461 = vlaneseq
    %v4462 = vshrl.u32 %v4461, 7
    %v4463 = vsub.s32 %v1528, %v4462
    %v4464 = vrot.slane %v4064, %v4463
    %v4465 = vsel %vm1533, %v4464, %v4460
    %v4466 = vlaneseq
    %v4467 = vshrl.u32 %v4466, 7
    %v4468 = vsub.s32 %v1535, %v4467
    %v4469 = vrot.slane %v4067, %v4468
    %v4470 = vsel %vm1540, %v4469, %v4465
    %v4471 = vlaneseq
    %v4472 = vshrl.u32 %v4471, 7
    %v4473 = vsub.s32 %v1542, %v4472
    %v4474 = vrot.slane %v4070, %v4473
    %v4475 = vsel %vm1547, %v4474, %v4470
    %v4476 = vlaneseq
    %v4477 = vshrl.u32 %v4476, 7
    %v4478 = vsub.s32 %v1549, %v4477
    %v4479 = vrot.slane %v4073, %v4478
    %v4480 = vsel %vm1554, %v4479, %v4475
    %v4481 = vlaneseq
    %v4482 = vshrl.u32 %v4481, 7
    %v4483 = vsub.s32 %v1556, %v4482
    %v4484 = vrot.slane %v4076, %v4483
    %v4485 = vsel %vm1561, %v4484, %v4480
    %v4486 = vlaneseq
    %v4487 = vshrl.u32 %v4486, 7
    %v4488 = vsub.s32 %v1563, %v4487
    %v4489 = vrot.slane %v4079, %v4488
    %v4490 = vsel %vm1568, %v4489, %v4485
    %v4491 = vlaneseq
    %v4492 = vshrl.u32 %v4491, 7
    %v4493 = vsub.s32 %v1570, %v4492
    %v4494 = vrot.slane %v4082, %v4493
    %v4495 = vsel %vm1575, %v4494, %v4490
    %v4496 = vlaneseq
    %v4497 = vshrl.u32 %v4496, 7
    %v4498 = vsub.s32 %v1577, %v4497
    %v4499 = vrot.slane %v4085, %v4498
    %v4500 = vsel %vm1582, %v4499, %v4495
    %v4501 = vlaneseq
    %v4502 = vshrl.u32 %v4501, 7
    %v4503 = vsub.s32 %v1474, %v4502
    %v4504 = vrot.slane %v4088, %v4503
    %v4505 = vlaneseq
    %v4506 = vshrl.u32 %v4505, 7
    %v4507 = vsub.s32 %v1479, %v4506
    %v4508 = vrot.slane %v4091, %v4507
    %v4509 = vsel %vm1484, %v4508, %v4504
    %v4510 = vlaneseq
    %v4511 = vshrl.u32 %v4510, 7
    %v4512 = vsub.s32 %v1486, %v4511
    %v4513 = vrot.slane %v4094, %v4512
    %v4514 = vsel %vm1491, %v4513, %v4509
    %v4515 = vlaneseq
    %v4516 = vshrl.u32 %v4515, 7
    %v4517 = vsub.s32 %v1493, %v4516
    %v4518 = vrot.slane %v4097, %v4517
    %v4519 = vsel %vm1498, %v4518, %v4514
    %v4520 = vlaneseq
    %v4521 = vshrl.u32 %v4520, 7
    %v4522 = vsub.s32 %v1500, %v4521
    %v4523 = vrot.slane %v4100, %v4522
    %v4524 = vsel %vm1505, %v4523, %v4519
    %v4525 = vlaneseq
    %v4526 = vshrl.u32 %v4525, 7
    %v4527 = vsub.s32 %v1507, %v4526
    %v4528 = vrot.slane %v4103, %v4527
    %v4529 = vsel %vm1512, %v4528, %v4524
    %v4530 = vlaneseq
    %v4531 = vshrl.u32 %v4530, 7
    %v4532 = vsub.s32 %v1514, %v4531
    %v4533 = vrot.slane %v4106, %v4532
    %v4534 = vsel %vm1519, %v4533, %v4529
    %v4535 = vlaneseq
    %v4536 = vshrl.u32 %v4535, 7
    %v4537 = vsub.s32 %v1521, %v4536
    %v4538 = vrot.slane %v4109, %v4537
    %v4539 = vsel %vm1526, %v4538, %v4534
    %v4540 = vlaneseq
    %v4541 = vshrl.u32 %v4540, 7
    %v4542 = vsub.s32 %v1528, %v4541
    %v4543 = vrot.slane %v4112, %v4542
    %v4544 = vsel %vm1533, %v4543, %v4539
    %v4545 = vlaneseq
    %v4546 = vshrl.u32 %v4545, 7
    %v4547 = vsub.s32 %v1535, %v4546
    %v4548 = vrot.slane %v4115, %v4547
    %v4549 = vsel %vm1540, %v4548, %v4544
    %v4550 = vlaneseq
    %v4551 = vshrl.u32 %v4550, 7
    %v4552 = vsub.s32 %v1542, %v4551
    %v4553 = vrot.slane %v4118, %v4552
    %v4554 = vsel %vm1547, %v4553, %v4549
    %v4555 = vlaneseq
    %v4556 = vshrl.u32 %v4555, 7
    %v4557 = vsub.s32 %v1549, %v4556
    %v4558 = vrot.slane %v4121, %v4557
    %v4559 = vsel %vm1554, %v4558, %v4554
    %v4560 = vlaneseq
    %v4561 = vshrl.u32 %v4560, 7
    %v4562 = vsub.s32 %v1556, %v4561
    %v4563 = vrot.slane %v4124, %v4562
    %v4564 = vsel %vm1561, %v4563, %v4559
    %v4565 = vlaneseq
    %v4566 = vshrl.u32 %v4565, 7
    %v4567 = vsub.s32 %v1563, %v4566
    %v4568 = vrot.slane %v4127, %v4567
    %v4569 = vsel %vm1568, %v4568, %v4564
    %v4570 = vlaneseq
    %v4571 = vshrl.u32 %v4570, 7
    %v4572 = vsub.s32 %v1570, %v4571
    %v4573 = vrot.slane %v4130, %v4572
    %v4574 = vsel %vm1575, %v4573, %v4569
    %v4575 = vlaneseq
    %v4576 = vshrl.u32 %v4575, 7
    %v4577 = vsub.s32 %v1577, %v4576
    %v4578 = vrot.slane %v4133, %v4577
    %v4579 = vsel %vm1582, %v4578, %v4574
    %v4580 = vlaneseq
    %v4581 = vshrl.u32 %v4580, 7
    %v4582 = vsub.s32 %v1474, %v4581
    %v4583 = vrot.slane %v4136, %v4582
    %v4584 = vlaneseq
    %v4585 = vshrl.u32 %v4584, 7
    %v4586 = vsub.s32 %v1479, %v4585
    %v4587 = vrot.slane %v4139, %v4586
    %v4588 = vsel %vm1484, %v4587, %v4583
    %v4589 = vlaneseq
    %v4590 = vshrl.u32 %v4589, 7
    %v4591 = vsub.s32 %v1486, %v4590
    %v4592 = vrot.slane %v4142, %v4591
    %v4593 = vsel %vm1491, %v4592, %v4588
    %v4594 = vlaneseq
    %v4595 = vshrl.u32 %v4594, 7
    %v4596 = vsub.s32 %v1493, %v4595
    %v4597 = vrot.slane %v4145, %v4596
    %v4598 = vsel %vm1498, %v4597, %v4593
    %v4599 = vlaneseq
    %v4600 = vshrl.u32 %v4599, 7
    %v4601 = vsub.s32 %v1500, %v4600
    %v4602 = vrot.slane %v4148, %v4601
    %v4603 = vsel %vm1505, %v4602, %v4598
    %v4604 = vlaneseq
    %v4605 = vshrl.u32 %v4604, 7
    %v4606 = vsub.s32 %v1507, %v4605
    %v4607 = vrot.slane %v4151, %v4606
    %v4608 = vsel %vm1512, %v4607, %v4603
    %v4609 = vlaneseq
    %v4610 = vshrl.u32 %v4609, 7
    %v4611 = vsub.s32 %v1514, %v4610
    %v4612 = vrot.slane %v4154, %v4611
    %v4613 = vsel %vm1519, %v4612, %v4608
    %v4614 = vlaneseq
    %v4615 = vshrl.u32 %v4614, 7
    %v4616 = vsub.s32 %v1521, %v4615
    %v4617 = vrot.slane %v4157, %v4616
    %v4618 = vsel %vm1526, %v4617, %v4613
    %v4619 = vlaneseq
    %v4620 = vshrl.u32 %v4619, 7
    %v4621 = vsub.s32 %v1528, %v4620
    %v4622 = vrot.slane %v4160, %v4621
    %v4623 = vsel %vm1533, %v4622, %v4618
    %v4624 = vlaneseq
    %v4625 = vshrl.u32 %v4624, 7
    %v4626 = vsub.s32 %v1535, %v4625
    %v4627 = vrot.slane %v4163, %v4626
    %v4628 = vsel %vm1540, %v4627, %v4623
    %v4629 = vlaneseq
    %v4630 = vshrl.u32 %v4629, 7
    %v4631 = vsub.s32 %v1542, %v4630
    %v4632 = vrot.slane %v4166, %v4631
    %v4633 = vsel %vm1547, %v4632, %v4628
    %v4634 = vlaneseq
    %v4635 = vshrl.u32 %v4634, 7
    %v4636 = vsub.s32 %v1549, %v4635
    %v4637 = vrot.slane %v4169, %v4636
    %v4638 = vsel %vm1554, %v4637, %v4633
    %v4639 = vlaneseq
    %v4640 = vshrl.u32 %v4639, 7
    %v4641 = vsub.s32 %v1556, %v4640
    %v4642 = vrot.slane %v4172, %v4641
    %v4643 = vsel %vm1561, %v4642, %v4638
    %v4644 = vlaneseq
    %v4645 = vshrl.u32 %v4644, 7
    %v4646 = vsub.s32 %v1563, %v4645
    %v4647 = vrot.slane %v4175, %v4646
    %v4648 = vsel %vm1568, %v4647, %v4643
    %v4649 = vlaneseq
    %v4650 = vshrl.u32 %v4649, 7
    %v4651 = vsub.s32 %v1570, %v4650
    %v4652 = vrot.slane %v4178, %v4651
    %v4653 = vsel %vm1575, %v4652, %v4648
    %v4654 = vlaneseq
    %v4655 = vshrl.u32 %v4654, 7
    %v4656 = vsub.s32 %v1577, %v4655
    %v4657 = vrot.slane %v4181, %v4656
    %v4658 = vsel %vm1582, %v4657, %v4653
    %v4659 = vlaneseq
    %v4660 = vshrl.u32 %v4659, 7
    %v4661 = vsub.s32 %v1474, %v4660
    %v4662 = vrot.slane %v4184, %v4661
    %v4663 = vlaneseq
    %v4664 = vshrl.u32 %v4663, 7
    %v4665 = vsub.s32 %v1479, %v4664
    %v4666 = vrot.slane %v4187, %v4665
    %v4667 = vsel %vm1484, %v4666, %v4662
    %v4668 = vlaneseq
    %v4669 = vshrl.u32 %v4668, 7
    %v4670 = vsub.s32 %v1486, %v4669
    %v4671 = vrot.slane %v4190, %v4670
    %v4672 = vsel %vm1491, %v4671, %v4667
    %v4673 = vlaneseq
    %v4674 = vshrl.u32 %v4673, 7
    %v4675 = vsub.s32 %v1493, %v4674
    %v4676 = vrot.slane %v4193, %v4675
    %v4677 = vsel %vm1498, %v4676, %v4672
    %v4678 = vlaneseq
    %v4679 = vshrl.u32 %v4678, 7
    %v4680 = vsub.s32 %v1500, %v4679
    %v4681 = vrot.slane %v4196, %v4680
    %v4682 = vsel %vm1505, %v4681, %v4677
    %v4683 = vlaneseq
    %v4684 = vshrl.u32 %v4683, 7
    %v4685 = vsub.s32 %v1507, %v4684
    %v4686 = vrot.slane %v4199, %v4685
    %v4687 = vsel %vm1512, %v4686, %v4682
    %v4688 = vlaneseq
    %v4689 = vshrl.u32 %v4688, 7
    %v4690 = vsub.s32 %v1514, %v4689
    %v4691 = vrot.slane %v4202, %v4690
    %v4692 = vsel %vm1519, %v4691, %v4687
    %v4693 = vlaneseq
    %v4694 = vshrl.u32 %v4693, 7
    %v4695 = vsub.s32 %v1521, %v4694
    %v4696 = vrot.slane %v4205, %v4695
    %v4697 = vsel %vm1526, %v4696, %v4692
    %v4698 = vlaneseq
    %v4699 = vshrl.u32 %v4698, 7
    %v4700 = vsub.s32 %v1528, %v4699
    %v4701 = vrot.slane %v4208, %v4700
    %v4702 = vsel %vm1533, %v4701, %v4697
    %v4703 = vlaneseq
    %v4704 = vshrl.u32 %v4703, 7
    %v4705 = vsub.s32 %v1535, %v4704
    %v4706 = vrot.slane %v4211, %v4705
    %v4707 = vsel %vm1540, %v4706, %v4702
    %v4708 = vlaneseq
    %v4709 = vshrl.u32 %v4708, 7
    %v4710 = vsub.s32 %v1542, %v4709
    %v4711 = vrot.slane %v4214, %v4710
    %v4712 = vsel %vm1547, %v4711, %v4707
    %v4713 = vlaneseq
    %v4714 = vshrl.u32 %v4713, 7
    %v4715 = vsub.s32 %v1549, %v4714
    %v4716 = vrot.slane %v4217, %v4715
    %v4717 = vsel %vm1554, %v4716, %v4712
    %v4718 = vlaneseq
    %v4719 = vshrl.u32 %v4718, 7
    %v4720 = vsub.s32 %v1556, %v4719
    %v4721 = vrot.slane %v4220, %v4720
    %v4722 = vsel %vm1561, %v4721, %v4717
    %v4723 = vlaneseq
    %v4724 = vshrl.u32 %v4723, 7
    %v4725 = vsub.s32 %v1563, %v4724
    %v4726 = vrot.slane %v4223, %v4725
    %v4727 = vsel %vm1568, %v4726, %v4722
    %v4728 = vlaneseq
    %v4729 = vshrl.u32 %v4728, 7
    %v4730 = vsub.s32 %v1570, %v4729
    %v4731 = vrot.slane %v4226, %v4730
    %v4732 = vsel %vm1575, %v4731, %v4727
    %v4733 = vlaneseq
    %v4734 = vshrl.u32 %v4733, 7
    %v4735 = vsub.s32 %v1577, %v4734
    %v4736 = vrot.slane %v4229, %v4735
    %v4737 = vsel %vm1582, %v4736, %v4732
    %v4738 = vlaneseq
    %v4739 = vshrl.u32 %v4738, 7
    %v4740 = vsub.s32 %v1474, %v4739
    %v4741 = vrot.slane %v4232, %v4740
    %v4742 = vlaneseq
    %v4743 = vshrl.u32 %v4742, 7
    %v4744 = vsub.s32 %v1479, %v4743
    %v4745 = vrot.slane %v4235, %v4744
    %v4746 = vsel %vm1484, %v4745, %v4741
    %v4747 = vlaneseq
    %v4748 = vshrl.u32 %v4747, 7
    %v4749 = vsub.s32 %v1486, %v4748
    %v4750 = vrot.slane %v4238, %v4749
    %v4751 = vsel %vm1491, %v4750, %v4746
    %v4752 = vlaneseq
    %v4753 = vshrl.u32 %v4752, 7
    %v4754 = vsub.s32 %v1493, %v4753
    %v4755 = vrot.slane %v4241, %v4754
    %v4756 = vsel %vm1498, %v4755, %v4751
    %v4757 = vlaneseq
    %v4758 = vshrl.u32 %v4757, 7
    %v4759 = vsub.s32 %v1500, %v4758
    %v4760 = vrot.slane %v4244, %v4759
    %v4761 = vsel %vm1505, %v4760, %v4756
    %v4762 = vlaneseq
    %v4763 = vshrl.u32 %v4762, 7
    %v4764 = vsub.s32 %v1507, %v4763
    %v4765 = vrot.slane %v4247, %v4764
    %v4766 = vsel %vm1512, %v4765, %v4761
    %v4767 = vlaneseq
    %v4768 = vshrl.u32 %v4767, 7
    %v4769 = vsub.s32 %v1514, %v4768
    %v4770 = vrot.slane %v4250, %v4769
    %v4771 = vsel %vm1519, %v4770, %v4766
    %v4772 = vlaneseq
    %v4773 = vshrl.u32 %v4772, 7
    %v4774 = vsub.s32 %v1521, %v4773
    %v4775 = vrot.slane %v4253, %v4774
    %v4776 = vsel %vm1526, %v4775, %v4771
    %v4777 = vlaneseq
    %v4778 = vshrl.u32 %v4777, 7
    %v4779 = vsub.s32 %v1528, %v4778
    %v4780 = vrot.slane %v4256, %v4779
    %v4781 = vsel %vm1533, %v4780, %v4776
    %v4782 = vlaneseq
    %v4783 = vshrl.u32 %v4782, 7
    %v4784 = vsub.s32 %v1535, %v4783
    %v4785 = vrot.slane %v4259, %v4784
    %v4786 = vsel %vm1540, %v4785, %v4781
    %v4787 = vlaneseq
    %v4788 = vshrl.u32 %v4787, 7
    %v4789 = vsub.s32 %v1542, %v4788
    %v4790 = vrot.slane %v4262, %v4789
    %v4791 = vsel %vm1547, %v4790, %v4786
    %v4792 = vlaneseq
    %v4793 = vshrl.u32 %v4792, 7
    %v4794 = vsub.s32 %v1549, %v4793
    %v4795 = vrot.slane %v4265, %v4794
    %v4796 = vsel %vm1554, %v4795, %v4791
    %v4797 = vlaneseq
    %v4798 = vshrl.u32 %v4797, 7
    %v4799 = vsub.s32 %v1556, %v4798
    %v4800 = vrot.slane %v4268, %v4799
    %v4801 = vsel %vm1561, %v4800, %v4796
    %v4802 = vlaneseq
    %v4803 = vshrl.u32 %v4802, 7
    %v4804 = vsub.s32 %v1563, %v4803
    %v4805 = vrot.slane %v4271, %v4804
    %v4806 = vsel %vm1568, %v4805, %v4801
    %v4807 = vlaneseq
    %v4808 = vshrl.u32 %v4807, 7
    %v4809 = vsub.s32 %v1570, %v4808
    %v4810 = vrot.slane %v4274, %v4809
    %v4811 = vsel %vm1575, %v4810, %v4806
    %v4812 = vlaneseq
    %v4813 = vshrl.u32 %v4812, 7
    %v4814 = vsub.s32 %v1577, %v4813
    %v4815 = vrot.slane %v4277, %v4814
    %v4816 = vsel %vm1582, %v4815, %v4811
    %v4817 = vlaneseq
    %v4818 = vshrl.u32 %v4817, 7
    %v4819 = vsub.s32 %v1474, %v4818
    %v4820 = vrot.slane %v4280, %v4819
    %v4821 = vlaneseq
    %v4822 = vshrl.u32 %v4821, 7
    %v4823 = vsub.s32 %v1479, %v4822
    %v4824 = vrot.slane %v4283, %v4823
    %v4825 = vsel %vm1484, %v4824, %v4820
    %v4826 = vlaneseq
    %v4827 = vshrl.u32 %v4826, 7
    %v4828 = vsub.s32 %v1486, %v4827
    %v4829 = vrot.slane %v4286, %v4828
    %v4830 = vsel %vm1491, %v4829, %v4825
    %v4831 = vlaneseq
    %v4832 = vshrl.u32 %v4831, 7
    %v4833 = vsub.s32 %v1493, %v4832
    %v4834 = vrot.slane %v4289, %v4833
    %v4835 = vsel %vm1498, %v4834, %v4830
    %v4836 = vlaneseq
    %v4837 = vshrl.u32 %v4836, 7
    %v4838 = vsub.s32 %v1500, %v4837
    %v4839 = vrot.slane %v4292, %v4838
    %v4840 = vsel %vm1505, %v4839, %v4835
    %v4841 = vlaneseq
    %v4842 = vshrl.u32 %v4841, 7
    %v4843 = vsub.s32 %v1507, %v4842
    %v4844 = vrot.slane %v4295, %v4843
    %v4845 = vsel %vm1512, %v4844, %v4840
    %v4846 = vlaneseq
    %v4847 = vshrl.u32 %v4846, 7
    %v4848 = vsub.s32 %v1514, %v4847
    %v4849 = vrot.slane %v4298, %v4848
    %v4850 = vsel %vm1519, %v4849, %v4845
    %v4851 = vlaneseq
    %v4852 = vshrl.u32 %v4851, 7
    %v4853 = vsub.s32 %v1521, %v4852
    %v4854 = vrot.slane %v4301, %v4853
    %v4855 = vsel %vm1526, %v4854, %v4850
    %v4856 = vlaneseq
    %v4857 = vshrl.u32 %v4856, 7
    %v4858 = vsub.s32 %v1528, %v4857
    %v4859 = vrot.slane %v4304, %v4858
    %v4860 = vsel %vm1533, %v4859, %v4855
    %v4861 = vlaneseq
    %v4862 = vshrl.u32 %v4861, 7
    %v4863 = vsub.s32 %v1535, %v4862
    %v4864 = vrot.slane %v4307, %v4863
    %v4865 = vsel %vm1540, %v4864, %v4860
    %v4866 = vlaneseq
    %v4867 = vshrl.u32 %v4866, 7
    %v4868 = vsub.s32 %v1542, %v4867
    %v4869 = vrot.slane %v4310, %v4868
    %v4870 = vsel %vm1547, %v4869, %v4865
    %v4871 = vlaneseq
    %v4872 = vshrl.u32 %v4871, 7
    %v4873 = vsub.s32 %v1549, %v4872
    %v4874 = vrot.slane %v4313, %v4873
    %v4875 = vsel %vm1554, %v4874, %v4870
    %v4876 = vlaneseq
    %v4877 = vshrl.u32 %v4876, 7
    %v4878 = vsub.s32 %v1556, %v4877
    %v4879 = vrot.slane %v4316, %v4878
    %v4880 = vsel %vm1561, %v4879, %v4875
    %v4881 = vlaneseq
    %v4882 = vshrl.u32 %v4881, 7
    %v4883 = vsub.s32 %v1563, %v4882
    %v4884 = vrot.slane %v4319, %v4883
    %v4885 = vsel %vm1568, %v4884, %v4880
    %v4886 = vlaneseq
    %v4887 = vshrl.u32 %v4886, 7
    %v4888 = vsub.s32 %v1570, %v4887
    %v4889 = vrot.slane %v4322, %v4888
    %v4890 = vsel %vm1575, %v4889, %v4885
    %v4891 = vlaneseq
    %v4892 = vshrl.u32 %v4891, 7
    %v4893 = vsub.s32 %v1577, %v4892
    %v4894 = vrot.slane %v4325, %v4893
    %v4895 = vsel %vm1582, %v4894, %v4890
    %v4896 = vlaneseq
    %v4897 = vshrl.u32 %v4896, 7
    %v4898 = vsub.s32 %v1474, %v4897
    %v4899 = vrot.slane %v4328, %v4898
    %v4900 = vlaneseq
    %v4901 = vshrl.u32 %v4900, 7
    %v4902 = vsub.s32 %v1479, %v4901
    %v4903 = vrot.slane %v4331, %v4902
    %v4904 = vsel %vm1484, %v4903, %v4899
    %v4905 = vlaneseq
    %v4906 = vshrl.u32 %v4905, 7
    %v4907 = vsub.s32 %v1486, %v4906
    %v4908 = vrot.slane %v4334, %v4907
    %v4909 = vsel %vm1491, %v4908, %v4904
    %v4910 = vlaneseq
    %v4911 = vshrl.u32 %v4910, 7
    %v4912 = vsub.s32 %v1493, %v4911
    %v4913 = vrot.slane %v4337, %v4912
    %v4914 = vsel %vm1498, %v4913, %v4909
    %v4915 = vlaneseq
    %v4916 = vshrl.u32 %v4915, 7
    %v4917 = vsub.s32 %v1500, %v4916
    %v4918 = vrot.slane %v4340, %v4917
    %v4919 = vsel %vm1505, %v4918, %v4914
    %v4920 = vlaneseq
    %v4921 = vshrl.u32 %v4920, 7
    %v4922 = vsub.s32 %v1507, %v4921
    %v4923 = vrot.slane %v4343, %v4922
    %v4924 = vsel %vm1512, %v4923, %v4919
    %v4925 = vlaneseq
    %v4926 = vshrl.u32 %v4925, 7
    %v4927 = vsub.s32 %v1514, %v4926
    %v4928 = vrot.slane %v4346, %v4927
    %v4929 = vsel %vm1519, %v4928, %v4924
    %v4930 = vlaneseq
    %v4931 = vshrl.u32 %v4930, 7
    %v4932 = vsub.s32 %v1521, %v4931
    %v4933 = vrot.slane %v4349, %v4932
    %v4934 = vsel %vm1526, %v4933, %v4929
    %v4935 = vlaneseq
    %v4936 = vshrl.u32 %v4935, 7
    %v4937 = vsub.s32 %v1528, %v4936
    %v4938 = vrot.slane %v4352, %v4937
    %v4939 = vsel %vm1533, %v4938, %v4934
    %v4940 = vlaneseq
    %v4941 = vshrl.u32 %v4940, 7
    %v4942 = vsub.s32 %v1535, %v4941
    %v4943 = vrot.slane %v4355, %v4942
    %v4944 = vsel %vm1540, %v4943, %v4939
    %v4945 = vlaneseq
    %v4946 = vshrl.u32 %v4945, 7
    %v4947 = vsub.s32 %v1542, %v4946
    %v4948 = vrot.slane %v4358, %v4947
    %v4949 = vsel %vm1547, %v4948, %v4944
    %v4950 = vlaneseq
    %v4951 = vshrl.u32 %v4950, 7
    %v4952 = vsub.s32 %v1549, %v4951
    %v4953 = vrot.slane %v4361, %v4952
    %v4954 = vsel %vm1554, %v4953, %v4949
    %v4955 = vlaneseq
    %v4956 = vshrl.u32 %v4955, 7
    %v4957 = vsub.s32 %v1556, %v4956
    %v4958 = vrot.slane %v4364, %v4957
    %v4959 = vsel %vm1561, %v4958, %v4954
    %v4960 = vlaneseq
    %v4961 = vshrl.u32 %v4960, 7
    %v4962 = vsub.s32 %v1563, %v4961
    %v4963 = vrot.slane %v4367, %v4962
    %v4964 = vsel %vm1568, %v4963, %v4959
    %v4965 = vlaneseq
    %v4966 = vshrl.u32 %v4965, 7
    %v4967 = vsub.s32 %v1570, %v4966
    %v4968 = vrot.slane %v4370, %v4967
    %v4969 = vsel %vm1575, %v4968, %v4964
    %v4970 = vlaneseq
    %v4971 = vshrl.u32 %v4970, 7
    %v4972 = vsub.s32 %v1577, %v4971
    %v4973 = vrot.slane %v4373, %v4972
    %v4974 = vsel %vm1582, %v4973, %v4969
    %v4975 = vlaneseq
    %v4976 = vshrl.u32 %v4975, 7
    %v4977 = vsub.s32 %v1474, %v4976
    %v4978 = vrot.slane %v4376, %v4977
    %v4979 = vlaneseq
    %v4980 = vshrl.u32 %v4979, 7
    %v4981 = vsub.s32 %v1479, %v4980
    %v4982 = vrot.slane %v4379, %v4981
    %v4983 = vsel %vm1484, %v4982, %v4978
    %v4984 = vlaneseq
    %v4985 = vshrl.u32 %v4984, 7
    %v4986 = vsub.s32 %v1486, %v4985
    %v4987 = vrot.slane %v4382, %v4986
    %v4988 = vsel %vm1491, %v4987, %v4983
    %v4989 = vlaneseq
    %v4990 = vshrl.u32 %v4989, 7
    %v4991 = vsub.s32 %v1493, %v4990
    %v4992 = vrot.slane %v4385, %v4991
    %v4993 = vsel %vm1498, %v4992, %v4988
    %v4994 = vlaneseq
    %v4995 = vshrl.u32 %v4994, 7
    %v4996 = vsub.s32 %v1500, %v4995
    %v4997 = vrot.slane %v4388, %v4996
    %v4998 = vsel %vm1505, %v4997, %v4993
    %v4999 = vlaneseq
    %v5000 = vshrl.u32 %v4999, 7
    %v5001 = vsub.s32 %v1507, %v5000
    %v5002 = vrot.slane %v4391, %v5001
    %v5003 = vsel %vm1512, %v5002, %v4998
    %v5004 = vlaneseq
    %v5005 = vshrl.u32 %v5004, 7
    %v5006 = vsub.s32 %v1514, %v5005
    %v5007 = vrot.slane %v4394, %v5006
    %v5008 = vsel %vm1519, %v5007, %v5003
    %v5009 = vlaneseq
    %v5010 = vshrl.u32 %v5009, 7
    %v5011 = vsub.s32 %v1521, %v5010
    %v5012 = vrot.slane %v4397, %v5011
    %v5013 = vsel %vm1526, %v5012, %v5008
    %v5014 = vlaneseq
    %v5015 = vshrl.u32 %v5014, 7
    %v5016 = vsub.s32 %v1528, %v5015
    %v5017 = vrot.slane %v4400, %v5016
    %v5018 = vsel %vm1533, %v5017, %v5013
    %v5019 = vlaneseq
    %v5020 = vshrl.u32 %v5019, 7
    %v5021 = vsub.s32 %v1535, %v5020
    %v5022 = vrot.slane %v4403, %v5021
    %v5023 = vsel %vm1540, %v5022, %v5018
    %v5024 = vlaneseq
    %v5025 = vshrl.u32 %v5024, 7
    %v5026 = vsub.s32 %v1542, %v5025
    %v5027 = vrot.slane %v4406, %v5026
    %v5028 = vsel %vm1547, %v5027, %v5023
    %v5029 = vlaneseq
    %v5030 = vshrl.u32 %v5029, 7
    %v5031 = vsub.s32 %v1549, %v5030
    %v5032 = vrot.slane %v4409, %v5031
    %v5033 = vsel %vm1554, %v5032, %v5028
    %v5034 = vlaneseq
    %v5035 = vshrl.u32 %v5034, 7
    %v5036 = vsub.s32 %v1556, %v5035
    %v5037 = vrot.slane %v4412, %v5036
    %v5038 = vsel %vm1561, %v5037, %v5033
    %v5039 = vlaneseq
    %v5040 = vshrl.u32 %v5039, 7
    %v5041 = vsub.s32 %v1563, %v5040
    %v5042 = vrot.slane %v4415, %v5041
    %v5043 = vsel %vm1568, %v5042, %v5038
    %v5044 = vlaneseq
    %v5045 = vshrl.u32 %v5044, 7
    %v5046 = vsub.s32 %v1570, %v5045
    %v5047 = vrot.slane %v4418, %v5046
    %v5048 = vsel %vm1575, %v5047, %v5043
    %v5049 = vlaneseq
    %v5050 = vshrl.u32 %v5049, 7
    %v5051 = vsub.s32 %v1577, %v5050
    %v5052 = vrot.slane %v4421, %v5051
    %v5053 = vsel %vm1582, %v5052, %v5048
    %v5054 = vsel %vm2137, %v4579, %v4500
    %v5055 = vsel %vm2139, %v4658, %v5054
    %v5056 = vsel %vm2141, %v4737, %v5055
    %v5057 = vsel %vm2143, %v4816, %v5056
    %v5058 = vsel %vm2145, %v4895, %v5057
    %v5059 = vsel %vm2147, %v4974, %v5058
    %v5060 = vsel %vm2149, %v5053, %v5059
    %5062 = vst [vmem:[#allocation4] sm:$0xff] %v5060
    %v5191 = vmul.f32 %v4040, %v638
    %v5192 = vmul.f32 %v4043, %v639
    %v5193 = vmul.f32 %v4046, %v640
    %v5194 = vmul.f32 %v4049, %v641
    %v5195 = vmul.f32 %v4052, %v642
    %v5196 = vmul.f32 %v4055, %v643
    %v5197 = vmul.f32 %v4058, %v644
    %v5198 = vmul.f32 %v4061, %v645
    %v5199 = vmul.f32 %v4064, %v646
    %v5200 = vmul.f32 %v4067, %v647
    %v5201 = vmul.f32 %v4070, %v648
    %v5202 = vmul.f32 %v4073, %v649
    %v5203 = vmul.f32 %v4076, %v650
    %v5204 = vmul.f32 %v4079, %v651
    %v5205 = vmul.f32 %v4082, %v652
    %v5206 = vmul.f32 %v4085, %v653
    %v5207 = vmul.f32 %v4088, %v654
    %v5208 = vmul.f32 %v4091, %v655
    %v5209 = vmul.f32 %v4094, %v656
    %v5210 = vmul.f32 %v4097, %v657
    %v5211 = vmul.f32 %v4100, %v658
    %v5212 = vmul.f32 %v4103, %v659
    %v5213 = vmul.f32 %v4106, %v660
    %v5214 = vmul.f32 %v4109, %v661
    %v5215 = vmul.f32 %v4112, %v662
    %v5216 = vmul.f32 %v4115, %v663
    %v5217 = vmul.f32 %v4118, %v664
    %v5218 = vmul.f32 %v4121, %v665
    %v5219 = vmul.f32 %v4124, %v666
    %v5220 = vmul.f32 %v4127, %v667
    %v5221 = vmul.f32 %v4130, %v668
    %v5222 = vmul.f32 %v4133, %v669
    %v5223 = vmul.f32 %v4136, %v670
    %v5224 = vmul.f32 %v4139, %v671
    %v5225 = vmul.f32 %v4142, %v672
    %v5226 = vmul.f32 %v4145, %v673
    %v5227 = vmul.f32 %v4148, %v674
    %v5228 = vmul.f32 %v4151, %v675
    %v5229 = vmul.f32 %v4154, %v676
    %v5230 = vmul.f32 %v4157, %v677
    %v5231 = vmul.f32 %v4160, %v678
    %v5232 = vmul.f32 %v4163, %v679
    %v5233 = vmul.f32 %v4166, %v680
    %v5234 = vmul.f32 %v4169, %v681
    %v5235 = vmul.f32 %v4172, %v682
    %v5236 = vmul.f32 %v4175, %v683
    %v5237 = vmul.f32 %v4178, %v684
    %v5238 = vmul.f32 %v4181, %v685
    %v5239 = vmul.f32 %v4184, %v686
    %v5240 = vmul.f32 %v4187, %v687
    %v5241 = vmul.f32 %v4190, %v688
    %v5242 = vmul.f32 %v4193, %v689
    %v5243 = vmul.f32 %v4196, %v690
    %v5244 = vmul.f32 %v4199, %v691
    %v5245 = vmul.f32 %v4202, %v692
    %v5246 = vmul.f32 %v4205, %v693
    %v5247 = vmul.f32 %v4208, %v694
    %v5248 = vmul.f32 %v4211, %v695
    %v5249 = vmul.f32 %v4214, %v696
    %v5250 = vmul.f32 %v4217, %v697
    %v5251 = vmul.f32 %v4220, %v698
    %v5252 = vmul.f32 %v4223, %v699
    %v5253 = vmul.f32 %v4226, %v700
    %v5254 = vmul.f32 %v4229, %v701
    %v5255 = vmul.f32 %v4232, %v702
    %v5256 = vmul.f32 %v4235, %v703
    %v5257 = vmul.f32 %v4238, %v704
    %v5258 = vmul.f32 %v4241, %v705
    %v5259 = vmul.f32 %v4244, %v706
    %v5260 = vmul.f32 %v4247, %v707
    %v5261 = vmul.f32 %v4250, %v708
    %v5262 = vmul.f32 %v4253, %v709
    %v5263 = vmul.f32 %v4256, %v710
    %v5264 = vmul.f32 %v4259, %v711
    %v5265 = vmul.f32 %v4262, %v712
    %v5266 = vmul.f32 %v4265, %v713
    %v5267 = vmul.f32 %v4268, %v714
    %v5268 = vmul.f32 %v4271, %v715
    %v5269 = vmul.f32 %v4274, %v716
    %v5270 = vmul.f32 %v4277, %v717
    %v5271 = vmul.f32 %v4280, %v718
    %v5272 = vmul.f32 %v4283, %v719
    %v5273 = vmul.f32 %v4286, %v720
    %v5274 = vmul.f32 %v4289, %v721
    %v5275 = vmul.f32 %v4292, %v722
    %v5276 = vmul.f32 %v4295, %v723
    %v5277 = vmul.f32 %v4298, %v724
    %v5278 = vmul.f32 %v4301, %v725
    %v5279 = vmul.f32 %v4304, %v726
    %v5280 = vmul.f32 %v4307, %v727
    %v5281 = vmul.f32 %v4310, %v728
    %v5282 = vmul.f32 %v4313, %v729
    %v5283 = vmul.f32 %v4316, %v730
    %v5284 = vmul.f32 %v4319, %v731
    %v5285 = vmul.f32 %v4322, %v732
    %v5286 = vmul.f32 %v4325, %v733
    %v5287 = vmul.f32 %v4328, %v734
    %v5288 = vmul.f32 %v4331, %v735
    %v5289 = vmul.f32 %v4334, %v736
    %v5290 = vmul.f32 %v4337, %v737
    %v5291 = vmul.f32 %v4340, %v738
    %v5292 = vmul.f32 %v4343, %v739
    %v5293 = vmul.f32 %v4346, %v740
    %v5294 = vmul.f32 %v4349, %v741
    %v5295 = vmul.f32 %v4352, %v742
    %v5296 = vmul.f32 %v4355, %v743
    %v5297 = vmul.f32 %v4358, %v744
    %v5298 = vmul.f32 %v4361, %v745
    %v5299 = vmul.f32 %v4364, %v746
    %v5300 = vmul.f32 %v4367, %v747
    %v5301 = vmul.f32 %v4370, %v748
    %v5302 = vmul.f32 %v4373, %v749
    %v5303 = vmul.f32 %v4376, %v750
    %v5304 = vmul.f32 %v4379, %v751
    %v5305 = vmul.f32 %v4382, %v752
    %v5306 = vmul.f32 %v4385, %v753
    %v5307 = vmul.f32 %v4388, %v754
    %v5308 = vmul.f32 %v4391, %v755
    %v5309 = vmul.f32 %v4394, %v756
    %v5310 = vmul.f32 %v4397, %v757
    %v5311 = vmul.f32 %v4400, %v758
    %v5312 = vmul.f32 %v4403, %v759
    %v5313 = vmul.f32 %v4406, %v760
    %v5314 = vmul.f32 %v4409, %v761
    %v5315 = vmul.f32 %v4412, %v762
    %v5316 = vmul.f32 %v4415, %v763
    %v5317 = vmul.f32 %v4418, %v764
    %v5318 = vmul.f32 %v4421, %v765
    %v5319 = vadd.f32 %v5191, %v5192
    %v5320 = vadd.f32 %v5319, %v5193
    %v5321 = vadd.f32 %v5320, %v5194
    %v5322 = vadd.f32 %v5321, %v5195
    %v5323 = vadd.f32 %v5322, %v5196
    %v5324 = vadd.f32 %v5323, %v5197
    %v5325 = vadd.f32 %v5324, %v5198
    %v5326 = vadd.f32 %v5325, %v5199
    %v5327 = vadd.f32 %v5326, %v5200
    %v5328 = vadd.f32 %v5327, %v5201
    %v5329 = vadd.f32 %v5328, %v5202
    %v5330 = vadd.f32 %v5329, %v5203
    %v5331 = vadd.f32 %v5330, %v5204
    %v5332 = vadd.f32 %v5331, %v5205
    %v5333 = vadd.f32 %v5332, %v5206
    %v5334 = vrot.slane %v5333, 4
    %v5335 = vadd.f32 %v5333, %v5334
    %v5336 = vrot.slane %v5335, 2
    %v5337 = vadd.f32 %v5335, %v5336
    %v5338 = vrot.slane %v5337, 1
    %v5339 = vadd.f32 %v5337, %v5338
    %v5340 = vadd.f32 %v5207, %v5208
    %v5341 = vadd.f32 %v5340, %v5209
    %v5342 = vadd.f32 %v5341, %v5210
    %v5343 = vadd.f32 %v5342, %v5211
    %v5344 = vadd.f32 %v5343, %v5212
    %v5345 = vadd.f32 %v5344, %v5213
    %v5346 = vadd.f32 %v5345, %v5214
    %v5347 = vadd.f32 %v5346, %v5215
    %v5348 = vadd.f32 %v5347, %v5216
    %v5349 = vadd.f32 %v5348, %v5217
    %v5350 = vadd.f32 %v5349, %v5218
    %v5351 = vadd.f32 %v5350, %v5219
    %v5352 = vadd.f32 %v5351, %v5220
    %v5353 = vadd.f32 %v5352, %v5221
    %v5354 = vadd.f32 %v5353, %v5222
    %v5355 = vrot.slane %v5354, 4
    %v5356 = vadd.f32 %v5354, %v5355
    %v5357 = vrot.slane %v5356, 2
    %v5358 = vadd.f32 %v5356, %v5357
    %v5359 = vrot.slane %v5358, 1
    %v5360 = vadd.f32 %v5358, %v5359
    %v5361 = vadd.f32 %v5223, %v5224
    %v5362 = vadd.f32 %v5361, %v5225
    %v5363 = vadd.f32 %v5362, %v5226
    %v5364 = vadd.f32 %v5363, %v5227
    %v5365 = vadd.f32 %v5364, %v5228
    %v5366 = vadd.f32 %v5365, %v5229
    %v5367 = vadd.f32 %v5366, %v5230
    %v5368 = vadd.f32 %v5367, %v5231
    %v5369 = vadd.f32 %v5368, %v5232
    %v5370 = vadd.f32 %v5369, %v5233
    %v5371 = vadd.f32 %v5370, %v5234
    %v5372 = vadd.f32 %v5371, %v5235
    %v5373 = vadd.f32 %v5372, %v5236
    %v5374 = vadd.f32 %v5373, %v5237
    %v5375 = vadd.f32 %v5374, %v5238
    %v5376 = vrot.slane %v5375, 4
    %v5377 = vadd.f32 %v5375, %v5376
    %v5378 = vrot.slane %v5377, 2
    %v5379 = vadd.f32 %v5377, %v5378
    %v5380 = vrot.slane %v5379, 1
    %v5381 = vadd.f32 %v5379, %v5380
    %v5382 = vadd.f32 %v5239, %v5240
    %v5383 = vadd.f32 %v5382, %v5241
    %v5384 = vadd.f32 %v5383, %v5242
    %v5385 = vadd.f32 %v5384, %v5243
    %v5386 = vadd.f32 %v5385, %v5244
    %v5387 = vadd.f32 %v5386, %v5245
    %v5388 = vadd.f32 %v5387, %v5246
    %v5389 = vadd.f32 %v5388, %v5247
    %v5390 = vadd.f32 %v5389, %v5248
    %v5391 = vadd.f32 %v5390, %v5249
    %v5392 = vadd.f32 %v5391, %v5250
    %v5393 = vadd.f32 %v5392, %v5251
    %v5394 = vadd.f32 %v5393, %v5252
    %v5395 = vadd.f32 %v5394, %v5253
    %v5396 = vadd.f32 %v5395, %v5254
    %v5397 = vrot.slane %v5396, 4
    %v5398 = vadd.f32 %v5396, %v5397
    %v5399 = vrot.slane %v5398, 2
    %v5400 = vadd.f32 %v5398, %v5399
    %v5401 = vrot.slane %v5400, 1
    %v5402 = vadd.f32 %v5400, %v5401
    %v5403 = vadd.f32 %v5255, %v5256
    %v5404 = vadd.f32 %v5403, %v5257
    %v5405 = vadd.f32 %v5404, %v5258
    %v5406 = vadd.f32 %v5405, %v5259
    %v5407 = vadd.f32 %v5406, %v5260
    %v5408 = vadd.f32 %v5407, %v5261
    %v5409 = vadd.f32 %v5408, %v5262
    %v5410 = vadd.f32 %v5409, %v5263
    %v5411 = vadd.f32 %v5410, %v5264
    %v5412 = vadd.f32 %v5411, %v5265
    %v5413 = vadd.f32 %v5412, %v5266
    %v5414 = vadd.f32 %v5413, %v5267
    %v5415 = vadd.f32 %v5414, %v5268
    %v5416 = vadd.f32 %v5415, %v5269
    %v5417 = vadd.f32 %v5416, %v5270
    %v5418 = vrot.slane %v5417, 4
    %v5419 = vadd.f32 %v5417, %v5418
    %v5420 = vrot.slane %v5419, 2
    %v5421 = vadd.f32 %v5419, %v5420
    %v5422 = vrot.slane %v5421, 1
    %v5423 = vadd.f32 %v5421, %v5422
    %v5424 = vadd.f32 %v5271, %v5272
    %v5425 = vadd.f32 %v5424, %v5273
    %v5426 = vadd.f32 %v5425, %v5274
    %v5427 = vadd.f32 %v5426, %v5275
    %v5428 = vadd.f32 %v5427, %v5276
    %v5429 = vadd.f32 %v5428, %v5277
    %v5430 = vadd.f32 %v5429, %v5278
    %v5431 = vadd.f32 %v5430, %v5279
    %v5432 = vadd.f32 %v5431, %v5280
    %v5433 = vadd.f32 %v5432, %v5281
    %v5434 = vadd.f32 %v5433, %v5282
    %v5435 = vadd.f32 %v5434, %v5283
    %v5436 = vadd.f32 %v5435, %v5284
    %v5437 = vadd.f32 %v5436, %v5285
    %v5438 = vadd.f32 %v5437, %v5286
    %v5439 = vrot.slane %v5438, 4
    %v5440 = vadd.f32 %v5438, %v5439
    %v5441 = vrot.slane %v5440, 2
    %v5442 = vadd.f32 %v5440, %v5441
    %v5443 = vrot.slane %v5442, 1
    %v5444 = vadd.f32 %v5442, %v5443
    %v5445 = vadd.f32 %v5287, %v5288
    %v5446 = vadd.f32 %v5445, %v5289
    %v5447 = vadd.f32 %v5446, %v5290
    %v5448 = vadd.f32 %v5447, %v5291
    %v5449 = vadd.f32 %v5448, %v5292
    %v5450 = vadd.f32 %v5449, %v5293
    %v5451 = vadd.f32 %v5450, %v5294
    %v5452 = vadd.f32 %v5451, %v5295
    %v5453 = vadd.f32 %v5452, %v5296
    %v5454 = vadd.f32 %v5453, %v5297
    %v5455 = vadd.f32 %v5454, %v5298
    %v5456 = vadd.f32 %v5455, %v5299
    %v5457 = vadd.f32 %v5456, %v5300
    %v5458 = vadd.f32 %v5457, %v5301
    %v5459 = vadd.f32 %v5458, %v5302
    %v5460 = vrot.slane %v5459, 4
    %v5461 = vadd.f32 %v5459, %v5460
    %v5462 = vrot.slane %v5461, 2
    %v5463 = vadd.f32 %v5461, %v5462
    %v5464 = vrot.slane %v5463, 1
    %v5465 = vadd.f32 %v5463, %v5464
    %v5466 = vadd.f32 %v5303, %v5304
    %v5467 = vadd.f32 %v5466, %v5305
    %v5468 = vadd.f32 %v5467, %v5306
    %v5469 = vadd.f32 %v5468, %v5307
    %v5470 = vadd.f32 %v5469, %v5308
    %v5471 = vadd.f32 %v5470, %v5309
    %v5472 = vadd.f32 %v5471, %v5310
    %v5473 = vadd.f32 %v5472, %v5311
    %v5474 = vadd.f32 %v5473, %v5312
    %v5475 = vadd.f32 %v5474, %v5313
    %v5476 = vadd.f32 %v5475, %v5314
    %v5477 = vadd.f32 %v5476, %v5315
    %v5478 = vadd.f32 %v5477, %v5316
    %v5479 = vadd.f32 %v5478, %v5317
    %v5480 = vadd.f32 %v5479, %v5318
    %v5481 = vrot.slane %v5480, 4
    %v5482 = vadd.f32 %v5480, %v5481
    %v5483 = vrot.slane %v5482, 2
    %v5484 = vadd.f32 %v5482, %v5483
    %v5485 = vrot.slane %v5484, 1
    %v5486 = vadd.f32 %v5484, %v5485
    %v5487 = vld [vmem:[%s8] sm:$0xf]
    %v5488 = vld [vmem:[%s8 + $0x4] sm:$0xf]
    %v5489 = vld [vmem:[%s8 + $0x8] sm:$0xf]
    %v5490 = vld [vmem:[%s8 + $0xc] sm:$0xf]
    %v5491 = vld [vmem:[%s8 + $0x10] sm:$0xf]
    %v5492 = vld [vmem:[%s8 + $0x14] sm:$0xf]
    %v5493 = vld [vmem:[%s8 + $0x18] sm:$0xf]
    %v5494 = vld [vmem:[%s8 + $0x1c] sm:$0xf]
    %v5495 = vld [vmem:[%s8 + $0x20] sm:$0xf]
    %v5496 = vld [vmem:[%s8 + $0x24] sm:$0xf]
    %v5497 = vld [vmem:[%s8 + $0x28] sm:$0xf]
    %v5498 = vld [vmem:[%s8 + $0x2c] sm:$0xf]
    %v5499 = vld [vmem:[%s8 + $0x30] sm:$0xf]
    %v5500 = vld [vmem:[%s8 + $0x34] sm:$0xf]
    %v5501 = vld [vmem:[%s8 + $0x38] sm:$0xf]
    %v5502 = vld [vmem:[%s8 + $0x3c] sm:$0xf]
    %v5503 = vpack.c.bf16 %v5339, %v5339
    %v5504 = vpack.c.bf16 %v5360, %v5360
    %v5505 = vpack.c.bf16 %v5381, %v5381
    %v5506 = vpack.c.bf16 %v5402, %v5402
    %v5507 = vpack.c.bf16 %v5423, %v5423
    %v5508 = vpack.c.bf16 %v5444, %v5444
    %v5509 = vpack.c.bf16 %v5465, %v5465
    %v5510 = vpack.c.bf16 %v5486, %v5486
    %v5511 = vld [vmem:[%s9] sm:$0xf]
    %v5512 = vld [vmem:[%s9 + $0x4] sm:$0xf]
    %v5513 = vld [vmem:[%s9 + $0x8] sm:$0xf]
    %v5514 = vld [vmem:[%s9 + $0xc] sm:$0xf]
    %v5515 = vld [vmem:[%s9 + $0x10] sm:$0xf]
    %v5516 = vld [vmem:[%s9 + $0x14] sm:$0xf]
    %v5517 = vld [vmem:[%s9 + $0x18] sm:$0xf]
    %v5518 = vld [vmem:[%s9 + $0x1c] sm:$0xf]
    %v5519 = vld [vmem:[%s9 + $0x20] sm:$0xf]
    %v5520 = vld [vmem:[%s9 + $0x24] sm:$0xf]
    %v5521 = vld [vmem:[%s9 + $0x28] sm:$0xf]
    %v5522 = vld [vmem:[%s9 + $0x2c] sm:$0xf]
    %v5523 = vld [vmem:[%s9 + $0x30] sm:$0xf]
    %v5524 = vld [vmem:[%s9 + $0x34] sm:$0xf]
    %v5525 = vld [vmem:[%s9 + $0x38] sm:$0xf]
    %v5526 = vld [vmem:[%s9 + $0x3c] sm:$0xf]
    %v5535 = vunpack.c.l.b16 %v5503
    %v5536 = vunpack.c.l.b16 %v5504
    %v5537 = vunpack.c.l.b16 %v5505
    %v5538 = vunpack.c.l.b16 %v5506
    %v5539 = vunpack.c.l.b16 %v5507
    %v5540 = vunpack.c.l.b16 %v5508
    %v5541 = vunpack.c.l.b16 %v5509
    %v5542 = vunpack.c.l.b16 %v5510
    %v5543 = vsel %vm2137, %v5536, %v5535
    %v5544 = vsel %vm2139, %v5537, %v5543
    %v5545 = vsel %vm2141, %v5538, %v5544
    %v5546 = vsel %vm2143, %v5539, %v5545
    %v5547 = vsel %vm2145, %v5540, %v5546
    %v5548 = vsel %vm2147, %v5541, %v5547
    %v5549 = vsel %vm2149, %v5542, %v5548
    %v5550 = vpack.c.b16 %v5549, %v5549
    %v5568 = vunpack.c.l.b16 %v5511
    %v5569 = vunpack.c.l.b16 %v5512
    %v5570 = vunpack.c.l.b16 %v5513
    %v5571 = vunpack.c.l.b16 %v5514
    %v5572 = vunpack.c.l.b16 %v5515
    %v5573 = vunpack.c.l.b16 %v5516
    %v5574 = vunpack.c.l.b16 %v5517
    %v5575 = vunpack.c.l.b16 %v5518
    %v5576 = vunpack.c.l.b16 %v5519
    %v5577 = vunpack.c.l.b16 %v5520
    %v5578 = vunpack.c.l.b16 %v5521
    %v5579 = vunpack.c.l.b16 %v5522
    %v5580 = vunpack.c.l.b16 %v5523
    %v5581 = vunpack.c.l.b16 %v5524
    %v5582 = vunpack.c.l.b16 %v5525
    %v5583 = vunpack.c.l.b16 %v5526
    %v5584 = vpack.c.b16 %v5569, %v5568
    %v5585 = vpack.c.b16 %v5571, %v5570
    %v5586 = vpack.c.b16 %v5573, %v5572
    %v5587 = vpack.c.b16 %v5575, %v5574
    %v5588 = vpack.c.b16 %v5577, %v5576
    %v5589 = vpack.c.b16 %v5579, %v5578
    %v5590 = vpack.c.b16 %v5581, %v5580
    %v5591 = vpack.c.b16 %v5583, %v5582
    %5600 = vmatprep.subr.bf16.mxu0 0
    %5601 = vmatpush1.bf16.msra.mxu0 %v5591
    %5602 = vmatprep.subr.bf16.mxu0 0
    %5603 = vmatpush1.bf16.msra.mxu0 %v5590
    %5604 = vmatprep.subr.bf16.mxu0 0
    %5605 = vmatpush1.bf16.msra.mxu0 %v5589
    %5606 = vmatprep.subr.bf16.mxu0 0
    %5607 = vmatpush1.bf16.msra.mxu0 %v5588
    %5608 = vmatprep.subr.bf16.mxu0 0
    %5609 = vmatpush1.bf16.msra.mxu0 %v5587
    %5610 = vmatprep.subr.bf16.mxu0 0
    %5611 = vmatpush1.bf16.msra.mxu0 %v5586
    %5612 = vmatprep.subr.bf16.mxu0 0
    %5613 = vmatpush1.bf16.msra.mxu0 %v5585
    %5614 = vmatprep.subr.bf16.mxu0 0
    %5615 = vmatpush1.bf16.msra.mxu0 %v5584
    %5616 = vmatprep.subr.bf16.mxu0 0
    %5617 = vmatpush2.bf16.msra.mxu0 0
    %5618 = vmatprep.subr.bf16.mxu0 0
    %5619 = vmatpush2.bf16.msra.mxu0 0
    %5620 = vmatprep.subr.bf16.mxu0 0
    %5621 = vmatpush2.bf16.msra.mxu0 0
    %5622 = vmatprep.subr.bf16.mxu0 0
    %5623 = vmatpush2.bf16.msra.mxu0 0
    %5624 = vmatprep.subr.bf16.mxu0 0
    %5625 = vmatpush2.bf16.msra.mxu0 0
    %5626 = vmatprep.subr.bf16.mxu0 0
    %5627 = vmatpush2.bf16.msra.mxu0 0
    %5628 = vmatprep.subr.bf16.mxu0 0
    %5629 = vmatpush2.bf16.msra.mxu0 0
    %5630 = vmatprep.subr.bf16.mxu0 0
    %5631 = vmatpush2.bf16.msra.mxu0 0
    %5632 = vmatprep.mubr.bf16.mxu0 0
    %5633 = vmatmul.mubr.bf16.gmra.mxu0 %v5550
    %v5634 = vpop.f32.mrf.mxu0
    %v5635 = vadd.f32 0.0, %v5634
    %v5636 = vpop.f32.mrf.mxu0
    %v5637 = vpop.f32.mrf.mxu0
    %v5638 = vpop.f32.mrf.mxu0
    %5639 = vdwg.mxu0
    %v5656 = vunpack.c.l.b16 %v5487
    %v5657 = vunpack.c.l.b16 %v5488
    %v5658 = vunpack.c.l.b16 %v5489
    %v5659 = vunpack.c.l.b16 %v5490
    %v5660 = vunpack.c.l.b16 %v5491
    %v5661 = vunpack.c.l.b16 %v5492
    %v5662 = vunpack.c.l.b16 %v5493
    %v5663 = vunpack.c.l.b16 %v5494
    %v5664 = vunpack.c.l.b16 %v5495
    %v5665 = vunpack.c.l.b16 %v5496
    %v5666 = vunpack.c.l.b16 %v5497
    %v5667 = vunpack.c.l.b16 %v5498
    %v5668 = vunpack.c.l.b16 %v5499
    %v5669 = vunpack.c.l.b16 %v5500
    %v5670 = vunpack.c.l.b16 %v5501
    %v5671 = vunpack.c.l.b16 %v5502
    %v5672 = vpack.c.b16 %v5657, %v5656
    %v5673 = vpack.c.b16 %v5659, %v5658
    %v5674 = vpack.c.b16 %v5661, %v5660
    %v5675 = vpack.c.b16 %v5663, %v5662
    %v5676 = vpack.c.b16 %v5665, %v5664
    %v5677 = vpack.c.b16 %v5667, %v5666
    %v5678 = vpack.c.b16 %v5669, %v5668
    %v5679 = vpack.c.b16 %v5671, %v5670
    %5688 = vmatprep.subr.bf16.mxu0 0
    %5689 = vmatpush1.bf16.msra.mxu0 %v5679
    %5690 = vmatprep.subr.bf16.mxu0 0
    %5691 = vmatpush1.bf16.msra.mxu0 %v5678
    %5692 = vmatprep.subr.bf16.mxu0 0
    %5693 = vmatpush1.bf16.msra.mxu0 %v5677
    %5694 = vmatprep.subr.bf16.mxu0 0
    %5695 = vmatpush1.bf16.msra.mxu0 %v5676
    %5696 = vmatprep.subr.bf16.mxu0 0
    %5697 = vmatpush1.bf16.msra.mxu0 %v5675
    %5698 = vmatprep.subr.bf16.mxu0 0
    %5699 = vmatpush1.bf16.msra.mxu0 %v5674
    %5700 = vmatprep.subr.bf16.mxu0 0
    %5701 = vmatpush1.bf16.msra.mxu0 %v5673
    %5702 = vmatprep.subr.bf16.mxu0 0
    %5703 = vmatpush1.bf16.msra.mxu0 %v5672
    %5704 = vmatprep.subr.bf16.mxu0 0
    %5705 = vmatpush2.bf16.msra.mxu0 0
    %5706 = vmatprep.subr.bf16.mxu0 0
    %5707 = vmatpush2.bf16.msra.mxu0 0
    %5708 = vmatprep.subr.bf16.mxu0 0
    %5709 = vmatpush2.bf16.msra.mxu0 0
    %5710 = vmatprep.subr.bf16.mxu0 0
    %5711 = vmatpush2.bf16.msra.mxu0 0
    %5712 = vmatprep.subr.bf16.mxu0 0
    %5713 = vmatpush2.bf16.msra.mxu0 0
    %5714 = vmatprep.subr.bf16.mxu0 0
    %5715 = vmatpush2.bf16.msra.mxu0 0
    %5716 = vmatprep.subr.bf16.mxu0 0
    %5717 = vmatpush2.bf16.msra.mxu0 0
    %5718 = vmatprep.subr.bf16.mxu0 0
    %5719 = vmatpush2.bf16.msra.mxu0 0
    %5720 = vmatprep.mubr.bf16.mxu0 0
    %5721 = vmatmul.mubr.bf16.gmra.mxu0 %v766
    %v5722 = vpop.f32.mrf.mxu0
    %v5723 = vadd.f32 %v5635, %v5722
    %v5724 = vpop.f32.mrf.mxu0
    %v5725 = vpop.f32.mrf.mxu0
    %v5726 = vpop.f32.mrf.mxu0
    %5727 = vdwg.mxu0
    %v5728 = vld [vmem:[%s10] sm:$0x1]
    %v5730 = vlaneseq
    %v5731 = vshrl.u32 %v5730, 7
    %v5732 = vsub.s32 0, %v5731
    %v5733 = vrot.slane %v5728, %v5732
    %v5735 = vadd.f32 %v5723, %v5733
    %v5736 = vtanh.pop %v5735
    %v5737 = vpack.c.bf16 %v5736, %v5736
    %5738 = vst [vmem:[%s13] sm:$0xf] %v5737
    // Predicated region
    $region46: #{decoder_forward.2} parent=1 // pred_check
      _
    $region47: #{decoder_forward.2} parent=1 // pred_check_branch
      %5740 = sbr.rel (0) target = $region49
    $region48: #{decoder_forward.2} parent=1 // pred_region
      %s5742 = ssub.s32 128, 128
      %5743 = vsyncadd [#allocation3], %s5742
      %s5745 = sshll.u32 [#allocation2], 4
      %s5746 = int_to_ptr.vmem [resolvable:$true] %s5745
      %5748 = dma.vmem_to_hbm [thread:$0]  %s5746, 128, %s11, [#allocation3]
    $region49: #{decoder_forward.2} parent=1 // pred_fallthru
      _
    // Predicated region
    $region50: #{decoder_forward.2} parent=1 // pred_check
      _
    $region51: #{decoder_forward.2} parent=1 // pred_check_branch
      %5750 = sbr.rel (0) target = $region53
    $region52: #{decoder_forward.2} parent=1 // pred_region
      %s5752 = ssub.s32 128, 128
      %5753 = vsyncadd [#allocation5], %s5752
      %s5755 = sshll.u32 [#allocation4], 4
      %s5756 = int_to_ptr.vmem [resolvable:$true] %s5755
      %5758 = dma.vmem_to_hbm [thread:$0]  %s5756, 128, %s12, [#allocation5]
    $region53: #{decoder_forward.2} parent=1 // pred_fallthru
      _
    // Predicated region
    $region54: #{decoder_forward.2} parent=1 // pred_check
      _
    $region55: #{decoder_forward.2} parent=1 // pred_check_branch
      %5760 = sbr.rel (0) target = $region57
    $region56: #{decoder_forward.2} parent=1 // pred_region
      _
    $region57: #{decoder_forward.2} parent=1 // pred_fallthru
      _
    // Predicated region
    $region58: #{decoder_forward.2} parent=1 // pred_check
      _
    $region59: #{decoder_forward.2} parent=1 // pred_check_branch
      %5762 = sbr.rel (0) target = $region61
    $region60: #{decoder_forward.2} parent=1 // pred_region
      %5763 = dma.done [#allocation3], 128
    $region61: #{decoder_forward.2} parent=1 // pred_fallthru
      _
    // Predicated region
    $region62: #{decoder_forward.2} parent=1 // pred_check
      _
    $region63: #{decoder_forward.2} parent=1 // pred_check_branch
      %5765 = sbr.rel (0) target = $region65
    $region64: #{decoder_forward.2} parent=1 // pred_region
      %5766 = dma.done [#allocation5], 128
    $region65: #{decoder_forward.2} parent=1 // pred_fallthru
      _
    // Predicated region
    $region66: #{decoder_forward.2} parent=1 // pred_check
      _
    $region67: #{decoder_forward.2} parent=1 // pred_check_branch
      %5768 = sbr.rel (0) target = $region69
    $region68: #{decoder_forward.2} parent=1 // pred_region
      _
    $region69: #{decoder_forward.2} parent=1 // pred_fallthru
      _
    %5769 = vsyncpa [#allocation3], 1
    %5770 = vsyncpa [#allocation5], 1

</llo_original>
